<compile_context>
chip_gen: v7x
topology: tpu7x:2x2x1
jax: 0.10.0
libtpu: 0.0.40
codegen_flags: <defaults>
</compile_context>

<pallas_src>
import math

import jax
import jax.numpy as jnp
from jax.experimental import pallas as pl
from jax.experimental.pallas import tpu as pltpu

# ------------------------- scaled-down ViT config -------------------------
NUM_CLASSES = 7          # len(SKIN_CLASSES), e.g. HAM10000 has 7 classes
IMG = 32                 # image spatial size (ViT-base uses 224)
PATCH = 16               # patch size (same as ViT-base)
IN_CH = 3
HIDDEN = 64              # hidden_size (ViT-base uses 768)
HEADS = 4
HEAD_DIM = HIDDEN // HEADS
FF = 128                 # intermediate_size (ViT-base uses 3072)
LAYERS = 2               # num_hidden_layers (ViT-base uses 12)
N_PATCH = (IMG // PATCH) ** 2
TOKENS = N_PATCH + 1
LN_EPS = 1e-12           # HF ViT layer_norm_eps
PATCH_DIM = IN_CH * PATCH * PATCH
CLS_PAD = 128            # lane-dense padded classifier width

# head-padded, lane-aligned QKV layout
HEAD_PAD = 128                     # each head's q/k/v padded to one lane group
Q_PAD = HEADS * HEAD_PAD           # 512 lanes per projection (Q block, K block, V block)
QKV_PAD = 3 * Q_PAD                # 1536 total fused-QKV width


# ------------------------------ fused kernel -------------------------------
def _vit_fwd_kernel(
    patches_ref,        # (1, TOKENS, PATCH_DIM) bf16, CLS row zeroed (one image)
    patch_w_ref,        # (PATCH_DIM, HIDDEN)    bf16
    embed_add_ref,      # (TOKENS, HIDDEN)       f32  (cls/patch_bias + pos)
    ln1_g_ref, ln1_b_ref,       # (L, 1, HIDDEN)  f32
    qkv_w_ref,                  # (L, HIDDEN, QKV_PAD) bf16, head-padded, Q pre-scaled
    qkv_b_ref,                  # (L, 1, QKV_PAD)      f32
    o_w_ref,                    # (L, Q_PAD, HIDDEN)   bf16, head-padded rows
    o_b_ref,                    # (L, 1, HIDDEN)       f32
    ln2_g_ref, ln2_b_ref,       # (L, 1, HIDDEN)
    fc1_w_ref, fc1_b_ref,       # (L, HIDDEN, FF) bf16, (L, 1, FF) f32
    fc2_w_ref, fc2_b_ref,       # (L, FF, HIDDEN) bf16, (L, 1, HIDDEN) f32
    lnf_g_ref, lnf_b_ref,       # (1, HIDDEN)
    clsw_ref, clsb_ref,         # (HIDDEN, CLS_PAD) bf16, (1, CLS_PAD) f32
    logits_ref,                 # (1, 1, CLS_PAD)  f32
):
    f32 = jnp.float32
    bf16 = jnp.bfloat16

    def ln(x, g, b):
        mu = jnp.mean(x, axis=-1, keepdims=True)
        var = jnp.mean(jnp.square(x - mu), axis=-1, keepdims=True)
        return (x - mu) * jax.lax.rsqrt(var + LN_EPS) * g + b

    def gelu(x):
        # TODO(synk): HF ViT uses exact erf-GELU; erf lowering is not guaranteed
        # in Mosaic, so the tanh approximation is used here.
        c = math.sqrt(2.0 / math.pi)
        return 0.5 * x * (1.0 + jnp.tanh(c * (x + 0.044715 * x * x * x)))

    # --- embeddings: patch projection + (cls/bias + pos) additive term ---
    h = jnp.dot(patches_ref[0], patch_w_ref[...], preferred_element_type=f32)
    h = h + embed_add_ref[...]                                    # (T, HIDDEN) f32

    # --- encoder layers (statically unrolled; LAYERS is small) ---
    for l in range(LAYERS):
        # attention block (pre-LN); one image per grid step -> no cross-batch mask
        x_ln = ln(h, ln1_g_ref[l], ln1_b_ref[l]).astype(bf16)
        qkv = jnp.dot(x_ln, qkv_w_ref[l], preferred_element_type=f32) + qkv_b_ref[l]
        ctx_heads = []
        for hd in range(HEADS):
            # whole-lane-group slices (each head's q/k/v padded to 128 lanes)
            q = qkv[:, hd * HEAD_PAD:(hd + 1) * HEAD_PAD].astype(bf16)
            k = qkv[:, Q_PAD + hd * HEAD_PAD:Q_PAD + (hd + 1) * HEAD_PAD].astype(bf16)
            v = qkv[:, 2 * Q_PAD + hd * HEAD_PAD:
                    2 * Q_PAD + (hd + 1) * HEAD_PAD].astype(bf16)
            # 1/sqrt(HEAD_DIM) already folded into the Q weight columns
            s = jax.lax.dot_general(q, k, (((1,), (1,)), ((), ())),
                                    preferred_element_type=f32)   # (T, T) f32
            m = jnp.max(s, axis=-1, keepdims=True)
            p = jnp.exp(s - m)
            p = p * pl.reciprocal(jnp.sum(p, axis=-1, keepdims=True), approx=True)
            ctx_heads.append(jnp.dot(p.astype(bf16), v,
                                     preferred_element_type=f32))  # (T, HEAD_PAD)
        # single output projection per layer (lane-group-aligned concat)
        ctx = jnp.concatenate(ctx_heads, axis=-1).astype(bf16)     # (T, Q_PAD)
        attn = jnp.dot(ctx, o_w_ref[l], preferred_element_type=f32) + o_b_ref[l]
        h = h + attn                                   # residual 1

        # MLP block (pre-LN)
        y = ln(h, ln2_g_ref[l], ln2_b_ref[l]).astype(bf16)
        y = jnp.dot(y, fc1_w_ref[l], preferred_element_type=f32) + fc1_b_ref[l]
        y = gelu(y).astype(bf16)
        y = jnp.dot(y, fc2_w_ref[l], preferred_element_type=f32) + fc2_b_ref[l]
        h = h + y                                      # residual 2

    # --- final LayerNorm + lane-dense padded classifier on the CLS row only ---
    cls_tok = ln(h[0:1, :], lnf_g_ref[...], lnf_b_ref[...]).astype(bf16)
    logits = (jnp.dot(cls_tok, clsw_ref[...], preferred_element_type=f32)
              + clsb_ref[...])                                     # (1, CLS_PAD)
    logits_ref[...] = logits.reshape(1, 1, CLS_PAD).astype(logits_ref.dtype)


# ------------------------------ parameter init -----------------------------
def _w(key, shape):
    return 0.02 * jax.random.normal(key, shape, jnp.float32)


def init_params(key):
    """Logical ViT parameters (same layout/semantics as the PyTorch reference)."""
    keys = jax.random.split(key, 4 + 4 * LAYERS)
    p = {}
    p["patch_w"] = _w(keys[0], (PATCH_DIM, HIDDEN))
    p["patch_b"] = jnp.zeros((1, HIDDEN), jnp.float32)
    p["cls"] = _w(keys[1], (1, 1, HIDDEN))
    p["pos"] = _w(keys[2], (1, TOKENS, HIDDEN))

    qkv_w, o_w, fc1_w, fc2_w = [], [], [], []
    for l in range(LAYERS):
        k = keys[3 + 4 * l:3 + 4 * (l + 1)]
        qkv_w.append(_w(k[0], (HIDDEN, 3 * HIDDEN)))   # fused Q|K|V weight
        o_w.append(_w(k[1], (HIDDEN, HIDDEN)))
        fc1_w.append(_w(k[2], (HIDDEN, FF)))
        fc2_w.append(_w(k[3], (FF, HIDDEN)))
    p["qkv_w"] = jnp.stack(qkv_w)
    p["qkv_b"] = jnp.zeros((LAYERS, 1, 3 * HIDDEN), jnp.float32)
    p["o_w"] = jnp.stack(o_w)
    p["o_b"] = jnp.zeros((LAYERS, 1, HIDDEN), jnp.float32)
    p["fc1_w"] = jnp.stack(fc1_w)
    p["fc1_b"] = jnp.zeros((LAYERS, 1, FF), jnp.float32)
    p["fc2_w"] = jnp.stack(fc2_w)
    p["fc2_b"] = jnp.zeros((LAYERS, 1, HIDDEN), jnp.float32)
    p["ln1_g"] = jnp.ones((LAYERS, 1, HIDDEN), jnp.float32)
    p["ln1_b"] = jnp.zeros((LAYERS, 1, HIDDEN), jnp.float32)
    p["ln2_g"] = jnp.ones((LAYERS, 1, HIDDEN), jnp.float32)
    p["ln2_b"] = jnp.zeros((LAYERS, 1, HIDDEN), jnp.float32)
    p["lnf_g"] = jnp.ones((1, HIDDEN), jnp.float32)
    p["lnf_b"] = jnp.zeros((1, HIDDEN), jnp.float32)
    p["cls_w"] = _w(keys[3 + 4 * LAYERS], (HIDDEN, NUM_CLASSES))
    p["cls_b"] = jnp.zeros((1, NUM_CLASSES), jnp.float32)
    return p


def pack_params(p):
    """One-time transform into kernel-ready operands: bf16 matmul weights,
    head-padded lane-aligned QKV / output-proj layout, folded softmax scale,
    fused embedding add, lane-dense padded classifier."""
    bf16 = jnp.bfloat16
    scale = 1.0 / math.sqrt(HEAD_DIM)

    # additive embedding term (CLS row: cls + pos[0]; patch rows: patch_b + pos)
    tok_add = jnp.concatenate(
        [p["cls"].reshape(1, HIDDEN),
         jnp.broadcast_to(p["patch_b"], (N_PATCH, HIDDEN))], axis=0)
    embed_add = (tok_add + p["pos"].reshape(TOKENS, HIDDEN)).astype(jnp.float32)

    # head-padded, lane-aligned fused QKV weight/bias; 1/sqrt(d) folded into Q
    q_w = p["qkv_w"][:, :, :HIDDEN] * scale
    k_w = p["qkv_w"][:, :, HIDDEN:2 * HIDDEN]
    v_w = p["qkv_w"][:, :, 2 * HIDDEN:]
    q_b = p["qkv_b"][:, :, :HIDDEN] * scale
    k_b = p["qkv_b"][:, :, HIDDEN:2 * HIDDEN]
    v_b = p["qkv_b"][:, :, 2 * HIDDEN:]
    qkv_w = jnp.zeros((LAYERS, HIDDEN, QKV_PAD), jnp.float32)
    qkv_b = jnp.zeros((LAYERS, 1, QKV_PAD), jnp.float32)
    o_w = jnp.zeros((LAYERS, Q_PAD, HIDDEN), jnp.float32)
    for hd in range(HEADS):
        src = slice(hd * HEAD_DIM, (hd + 1) * HEAD_DIM)
        for blk, w, b in ((0, q_w, q_b), (1, k_w, k_b), (2, v_w, v_b)):
            dst = slice(blk * Q_PAD + hd * HEAD_PAD,
                        blk * Q_PAD + hd * HEAD_PAD + HEAD_DIM)
            qkv_w = qkv_w.at[:, :, dst].set(w[:, :, src])
            qkv_b = qkv_b.at[:, :, dst].set(b[:, :, src])
        o_w = o_w.at[:, hd * HEAD_PAD:hd * HEAD_PAD + HEAD_DIM, :].set(
            p["o_w"][:, src, :])

    # lane-dense padded classifier
    clsw = jnp.zeros((HIDDEN, CLS_PAD), jnp.float32).at[:, :NUM_CLASSES].set(p["cls_w"])
    clsb = jnp.zeros((1, CLS_PAD), jnp.float32).at[:, :NUM_CLASSES].set(p["cls_b"])

    return dict(
        patch_w=p["patch_w"].astype(bf16),
        embed_add=embed_add,
        ln1_g=p["ln1_g"], ln1_b=p["ln1_b"],
        qkv_w=qkv_w.astype(bf16), qkv_b=qkv_b,
        o_w=o_w.astype(bf16), o_b=p["o_b"],
        ln2_g=p["ln2_g"], ln2_b=p["ln2_b"],
        fc1_w=p["fc1_w"].astype(bf16), fc1_b=p["fc1_b"],
        fc2_w=p["fc2_w"].astype(bf16), fc2_b=p["fc2_b"],
        lnf_g=p["lnf_g"], lnf_b=p["lnf_b"],
        cls_w=clsw.astype(bf16), cls_b=clsb,
    )


# -------------------------------- forward ----------------------------------
def patchify(x):
    # x: (B, C, H, W) NCHW -> (B, TOKENS, PATCH_DIM) with a zero row per image in
    # the CLS slot.  Patch vector ordering matches flattening a PyTorch Conv2d
    # weight of shape (out, C, kh, kw).
    b = x.shape[0]
    g = IMG // PATCH
    xp = x.reshape(b, IN_CH, g, PATCH, g, PATCH)
    xp = jnp.transpose(xp, (0, 2, 4, 1, 3, 5)).reshape(b, N_PATCH, PATCH_DIM)
    zero = jnp.zeros((b, 1, PATCH_DIM), xp.dtype)
    return jnp.concatenate([zero, xp], axis=1)


def vit_forward(x, kp):
    b = x.shape[0]
    patches = patchify(x).astype(jnp.bfloat16)           # (B, TOKENS, PATCH_DIM)

    def full(shape):
        # grid-invariant full-array block (weights / shared constants)
        return pl.BlockSpec(shape, lambda i, _n=len(shape): (0,) * _n)

    in_specs = [
        pl.BlockSpec((1, TOKENS, PATCH_DIM), lambda i: (i, 0, 0)),   # per-image
        full((PATCH_DIM, HIDDEN)),
        full((TOKENS, HIDDEN)),
        full((LAYERS, 1, HIDDEN)), full((LAYERS, 1, HIDDEN)),        # ln1 g/b
        full((LAYERS, HIDDEN, QKV_PAD)), full((LAYERS, 1, QKV_PAD)), # qkv w/b
        full((LAYERS, Q_PAD, HIDDEN)), full((LAYERS, 1, HIDDEN)),    # o w/b
        full((LAYERS, 1, HIDDEN)), full((LAYERS, 1, HIDDEN)),        # ln2 g/b
        full((LAYERS, HIDDEN, FF)), full((LAYERS, 1, FF)),           # fc1 w/b
        full((LAYERS, FF, HIDDEN)), full((LAYERS, 1, HIDDEN)),       # fc2 w/b
        full((1, HIDDEN)), full((1, HIDDEN)),                        # lnf g/b
        full((HIDDEN, CLS_PAD)), full((1, CLS_PAD)),                 # classifier
    ]

    out = pl.pallas_call(
        _vit_fwd_kernel,
        grid=(b,),
        out_shape=jax.ShapeDtypeStruct((b, 1, CLS_PAD), jnp.float32),
        in_specs=in_specs,
        out_specs=pl.BlockSpec((1, 1, CLS_PAD), lambda i: (i, 0, 0)),
        compiler_params=pltpu.CompilerParams(dimension_semantics=("parallel",)),
    )(patches, kp["patch_w"], kp["embed_add"],
      kp["ln1_g"], kp["ln1_b"], kp["qkv_w"], kp["qkv_b"],
      kp["o_w"], kp["o_b"], kp["ln2_g"], kp["ln2_b"],
      kp["fc1_w"], kp["fc1_b"], kp["fc2_w"], kp["fc2_b"],
      kp["lnf_g"], kp["lnf_b"], kp["cls_w"], kp["cls_b"])

    # keep the real classes of the lane-dense padded logits slab
    return out[:, 0, :NUM_CLASSES]


# ---------------------------------- main ------------------------------------
if __name__ == "__main__":
    key = jax.random.PRNGKey(0)
    k_params, k_x = jax.random.split(key)
    params = init_params(k_params)
    kernel_params = pack_params(params)                  # one-time, hoisted prep
    x = jax.random.normal(k_x, (2, IN_CH, IMG, IMG), jnp.float32)  # NCHW

    logits = jax.jit(vit_forward)(x, kernel_params)
    logits = jax.block_until_ready(logits)

    assert logits.shape == (2, NUM_CLASSES)
    assert bool(jnp.all(jnp.isfinite(logits)))
    print("KERNEL_OK")
</pallas_src>

<mosaic_0001>
module attributes {stable_mosaic.version = 11 : i64} {
  func.func @_vit_fwd_kernel(%arg0: i32, %arg1: memref<1x5x768xbf16, #tpu.memory_space<vmem>>, %arg2: memref<768x64xbf16, #tpu.memory_space<vmem>>, %arg3: memref<5x64xf32, #tpu.memory_space<vmem>>, %arg4: memref<2x1x64xf32, #tpu.memory_space<vmem>>, %arg5: memref<2x1x64xf32, #tpu.memory_space<vmem>>, %arg6: memref<2x64x1536xbf16, #tpu.memory_space<vmem>>, %arg7: memref<2x1x1536xf32, #tpu.memory_space<vmem>>, %arg8: memref<2x512x64xbf16, #tpu.memory_space<vmem>>, %arg9: memref<2x1x64xf32, #tpu.memory_space<vmem>>, %arg10: memref<2x1x64xf32, #tpu.memory_space<vmem>>, %arg11: memref<2x1x64xf32, #tpu.memory_space<vmem>>, %arg12: memref<2x64x128xbf16, #tpu.memory_space<vmem>>, %arg13: memref<2x1x128xf32, #tpu.memory_space<vmem>>, %arg14: memref<2x128x64xbf16, #tpu.memory_space<vmem>>, %arg15: memref<2x1x64xf32, #tpu.memory_space<vmem>>, %arg16: memref<1x64xf32, #tpu.memory_space<vmem>>, %arg17: memref<1x64xf32, #tpu.memory_space<vmem>>, %arg18: memref<64x128xbf16, #tpu.memory_space<vmem>>, %arg19: memref<1x128xf32, #tpu.memory_space<vmem>>, %arg20: memref<1x1x128xf32, #tpu.memory_space<vmem>>) attributes {dimension_semantics = [#tpu.dimension_semantics<parallel>], iteration_bounds = array<i64: 2>, scalar_prefetch = 0 : i64, scratch_operands = 0 : i64, tpu.core_type = #tpu.core_type<tc>, window_params = [{transform_indices = @transform_0, window_bounds = array<i64: 1, 5, 768>}, {pipeline_mode = #tpu.pipeline_mode<synchronous>, transform_indices = @transform_1, window_bounds = array<i64: 768, 64>}, {pipeline_mode = #tpu.pipeline_mode<synchronous>, transform_indices = @transform_2, window_bounds = array<i64: 5, 64>}, {pipeline_mode = #tpu.pipeline_mode<synchronous>, transform_indices = @transform_3, window_bounds = array<i64: 2, 1, 64>}, {pipeline_mode = #tpu.pipeline_mode<synchronous>, transform_indices = @transform_4, window_bounds = array<i64: 2, 1, 64>}, {pipeline_mode = #tpu.pipeline_mode<synchronous>, transform_indices = @transform_5, window_bounds = array<i64: 2, 64, 1536>}, {pipeline_mode = #tpu.pipeline_mode<synchronous>, transform_indices = @transform_6, window_bounds = array<i64: 2, 1, 1536>}, {pipeline_mode = #tpu.pipeline_mode<synchronous>, transform_indices = @transform_7, window_bounds = array<i64: 2, 512, 64>}, {pipeline_mode = #tpu.pipeline_mode<synchronous>, transform_indices = @transform_8, window_bounds = array<i64: 2, 1, 64>}, {pipeline_mode = #tpu.pipeline_mode<synchronous>, transform_indices = @transform_9, window_bounds = array<i64: 2, 1, 64>}, {pipeline_mode = #tpu.pipeline_mode<synchronous>, transform_indices = @transform_10, window_bounds = array<i64: 2, 1, 64>}, {pipeline_mode = #tpu.pipeline_mode<synchronous>, transform_indices = @transform_11, window_bounds = array<i64: 2, 64, 128>}, {pipeline_mode = #tpu.pipeline_mode<synchronous>, transform_indices = @transform_12, window_bounds = array<i64: 2, 1, 128>}, {pipeline_mode = #tpu.pipeline_mode<synchronous>, transform_indices = @transform_13, window_bounds = array<i64: 2, 128, 64>}, {pipeline_mode = #tpu.pipeline_mode<synchronous>, transform_indices = @transform_14, window_bounds = array<i64: 2, 1, 64>}, {pipeline_mode = #tpu.pipeline_mode<synchronous>, transform_indices = @transform_15, window_bounds = array<i64: 1, 64>}, {pipeline_mode = #tpu.pipeline_mode<synchronous>, transform_indices = @transform_16, window_bounds = array<i64: 1, 64>}, {pipeline_mode = #tpu.pipeline_mode<synchronous>, transform_indices = @transform_17, window_bounds = array<i64: 64, 128>}, {pipeline_mode = #tpu.pipeline_mode<synchronous>, transform_indices = @transform_18, window_bounds = array<i64: 1, 128>}, {transform_indices = @transform_19, window_bounds = array<i64: 1, 1, 128>}]} {
    %c0 = arith.constant 0 : index
    %c0_0 = arith.constant 0 : index
    %c0_1 = arith.constant 0 : index
    %0 = vector.load %arg1[%c0, %c0_0, %c0_1] : memref<1x5x768xbf16, #tpu.memory_space<vmem>>, vector<1x5x768xbf16>
    %1 = vector.shape_cast %0 : vector<1x5x768xbf16> to vector<5x768xbf16>
    %c0_2 = arith.constant 0 : index
    %c0_3 = arith.constant 0 : index
    %2 = vector.load %arg2[%c0_2, %c0_3] : memref<768x64xbf16, #tpu.memory_space<vmem>>, vector<768x64xbf16>
    %cst = arith.constant dense<0.000000e+00> : vector<5x64xf32>
    %3 = tpu.matmul %1, %2, %cst {dimension_numbers = #tpu.dot_dimension_numbers<[1], [0], [0], [1], [0, 0, 1, 1], [], []>} : vector<5x768xbf16>, vector<768x64xbf16>, vector<5x64xf32> -> vector<5x64xf32>
    %c0_4 = arith.constant 0 : index
    %c0_5 = arith.constant 0 : index
    %4 = vector.load %arg3[%c0_4, %c0_5] : memref<5x64xf32, #tpu.memory_space<vmem>>, vector<5x64xf32>
    %5 = arith.addf %3, %4 : vector<5x64xf32>
    %c0_6 = arith.constant 0 : index
    %c0_7 = arith.constant 0 : index
    %c0_8 = arith.constant 0 : index
    %6 = vector.load %arg4[%c0_6, %c0_7, %c0_8] : memref<2x1x64xf32, #tpu.memory_space<vmem>>, vector<1x1x64xf32>
    %7 = vector.shape_cast %6 : vector<1x1x64xf32> to vector<1x64xf32>
    %c0_9 = arith.constant 0 : index
    %c0_10 = arith.constant 0 : index
    %c0_11 = arith.constant 0 : index
    %8 = vector.load %arg5[%c0_9, %c0_10, %c0_11] : memref<2x1x64xf32, #tpu.memory_space<vmem>>, vector<1x1x64xf32>
    %9 = vector.shape_cast %8 : vector<1x1x64xf32> to vector<1x64xf32>
    %cst_12 = arith.constant dense<0.000000e+00> : vector<5xf32>
    %10 = vector.multi_reduction <add>, %5, %cst_12 [1] : vector<5x64xf32> to vector<5xf32>
    %11 = vector.shape_cast %10 : vector<5xf32> to vector<5x1xf32>
    %cst_13 = arith.constant 6.400000e+01 : f32
    %12 = vector.broadcast %cst_13 : f32 to vector<5x1xf32>
    %13 = arith.divf %11, %12 : vector<5x1xf32>
    %14 = vector.broadcast %13 : vector<5x1xf32> to vector<5x64xf32>
    %15 = arith.subf %5, %14 : vector<5x64xf32>
    %16 = arith.mulf %15, %15 : vector<5x64xf32>
    %cst_14 = arith.constant dense<0.000000e+00> : vector<5xf32>
    %17 = vector.multi_reduction <add>, %16, %cst_14 [1] : vector<5x64xf32> to vector<5xf32>
    %18 = vector.shape_cast %17 : vector<5xf32> to vector<5x1xf32>
    %cst_15 = arith.constant 6.400000e+01 : f32
    %19 = vector.broadcast %cst_15 : f32 to vector<5x1xf32>
    %20 = arith.divf %18, %19 : vector<5x1xf32>
    %21 = vector.broadcast %13 : vector<5x1xf32> to vector<5x64xf32>
    %22 = arith.subf %5, %21 : vector<5x64xf32>
    %cst_16 = arith.constant 9.99999996E-13 : f32
    %23 = vector.broadcast %cst_16 : f32 to vector<5x1xf32>
    %24 = arith.addf %20, %23 : vector<5x1xf32>
    %25 = math.rsqrt %24 : vector<5x1xf32>
    %26 = vector.broadcast %25 : vector<5x1xf32> to vector<5x64xf32>
    %27 = arith.mulf %22, %26 : vector<5x64xf32>
    %28 = vector.broadcast %7 : vector<1x64xf32> to vector<5x64xf32>
    %29 = arith.mulf %27, %28 : vector<5x64xf32>
    %30 = vector.broadcast %9 : vector<1x64xf32> to vector<5x64xf32>
    %31 = arith.addf %29, %30 : vector<5x64xf32>
    %32 = arith.truncf %31 : vector<5x64xf32> to vector<5x64xbf16>
    %c0_17 = arith.constant 0 : index
    %c0_18 = arith.constant 0 : index
    %c0_19 = arith.constant 0 : index
    %33 = vector.load %arg6[%c0_17, %c0_18, %c0_19] : memref<2x64x1536xbf16, #tpu.memory_space<vmem>>, vector<1x64x1536xbf16>
    %34 = vector.shape_cast %33 : vector<1x64x1536xbf16> to vector<64x1536xbf16>
    %cst_20 = arith.constant dense<0.000000e+00> : vector<5x1536xf32>
    %35 = tpu.matmul %32, %34, %cst_20 {dimension_numbers = #tpu.dot_dimension_numbers<[1], [0], [0], [1], [0, 0, 1, 1], [], []>} : vector<5x64xbf16>, vector<64x1536xbf16>, vector<5x1536xf32> -> vector<5x1536xf32>
    %c0_21 = arith.constant 0 : index
    %c0_22 = arith.constant 0 : index
    %c0_23 = arith.constant 0 : index
    %36 = vector.load %arg7[%c0_21, %c0_22, %c0_23] : memref<2x1x1536xf32, #tpu.memory_space<vmem>>, vector<1x1x1536xf32>
    %37 = vector.shape_cast %36 : vector<1x1x1536xf32> to vector<1x1536xf32>
    %38 = vector.broadcast %37 : vector<1x1536xf32> to vector<5x1536xf32>
    %39 = arith.addf %35, %38 : vector<5x1536xf32>
    %40 = vector.extract_strided_slice %39 {offsets = [0, 0], sizes = [5, 128], strides = [1, 1]} : vector<5x1536xf32> to vector<5x128xf32>
    %41 = arith.truncf %40 : vector<5x128xf32> to vector<5x128xbf16>
    %42 = vector.extract_strided_slice %39 {offsets = [0, 512], sizes = [5, 128], strides = [1, 1]} : vector<5x1536xf32> to vector<5x128xf32>
    %43 = arith.truncf %42 : vector<5x128xf32> to vector<5x128xbf16>
    %44 = vector.extract_strided_slice %39 {offsets = [0, 1024], sizes = [5, 128], strides = [1, 1]} : vector<5x1536xf32> to vector<5x128xf32>
    %45 = arith.truncf %44 : vector<5x128xf32> to vector<5x128xbf16>
    %cst_24 = arith.constant dense<0.000000e+00> : vector<5x5xf32>
    %46 = tpu.matmul %41, %43, %cst_24 {dimension_numbers = #tpu.dot_dimension_numbers<[1], [1], [0], [0], [0, 0, 1, 0], [], []>} : vector<5x128xbf16>, vector<5x128xbf16>, vector<5x5xf32> -> vector<5x5xf32>
    %cst_25 = arith.constant dense<0xFF800000> : vector<5xf32>
    %47 = vector.multi_reduction <maximumf>, %46, %cst_25 [1] : vector<5x5xf32> to vector<5xf32>
    %48 = vector.shape_cast %47 : vector<5xf32> to vector<5x1xf32>
    %49 = vector.broadcast %48 : vector<5x1xf32> to vector<5x5xf32>
    %50 = arith.subf %46, %49 : vector<5x5xf32>
    %51 = math.exp %50 : vector<5x5xf32>
    %cst_26 = arith.constant dense<0.000000e+00> : vector<5xf32>
    %52 = vector.multi_reduction <add>, %51, %cst_26 [1] : vector<5x5xf32> to vector<5xf32>
    %53 = vector.shape_cast %52 : vector<5xf32> to vector<5x1xf32>
    %54 = tpu.reciprocal %53 {approx = true} : vector<5x1xf32> -> vector<5x1xf32>
    %55 = vector.broadcast %54 : vector<5x1xf32> to vector<5x5xf32>
    %56 = arith.mulf %51, %55 : vector<5x5xf32>
    %57 = arith.truncf %56 : vector<5x5xf32> to vector<5x5xbf16>
    %cst_27 = arith.constant dense<0.000000e+00> : vector<5x128xf32>
    %58 = tpu.matmul %57, %45, %cst_27 {dimension_numbers = #tpu.dot_dimension_numbers<[1], [0], [0], [1], [0, 0, 1, 1], [], []>} : vector<5x5xbf16>, vector<5x128xbf16>, vector<5x128xf32> -> vector<5x128xf32>
    %59 = vector.extract_strided_slice %39 {offsets = [0, 128], sizes = [5, 128], strides = [1, 1]} : vector<5x1536xf32> to vector<5x128xf32>
    %60 = arith.truncf %59 : vector<5x128xf32> to vector<5x128xbf16>
    %61 = vector.extract_strided_slice %39 {offsets = [0, 640], sizes = [5, 128], strides = [1, 1]} : vector<5x1536xf32> to vector<5x128xf32>
    %62 = arith.truncf %61 : vector<5x128xf32> to vector<5x128xbf16>
    %63 = vector.extract_strided_slice %39 {offsets = [0, 1152], sizes = [5, 128], strides = [1, 1]} : vector<5x1536xf32> to vector<5x128xf32>
    %64 = arith.truncf %63 : vector<5x128xf32> to vector<5x128xbf16>
    %cst_28 = arith.constant dense<0.000000e+00> : vector<5x5xf32>
    %65 = tpu.matmul %60, %62, %cst_28 {dimension_numbers = #tpu.dot_dimension_numbers<[1], [1], [0], [0], [0, 0, 1, 0], [], []>} : vector<5x128xbf16>, vector<5x128xbf16>, vector<5x5xf32> -> vector<5x5xf32>
    %cst_29 = arith.constant dense<0xFF800000> : vector<5xf32>
    %66 = vector.multi_reduction <maximumf>, %65, %cst_29 [1] : vector<5x5xf32> to vector<5xf32>
    %67 = vector.shape_cast %66 : vector<5xf32> to vector<5x1xf32>
    %68 = vector.broadcast %67 : vector<5x1xf32> to vector<5x5xf32>
    %69 = arith.subf %65, %68 : vector<5x5xf32>
    %70 = math.exp %69 : vector<5x5xf32>
    %cst_30 = arith.constant dense<0.000000e+00> : vector<5xf32>
    %71 = vector.multi_reduction <add>, %70, %cst_30 [1] : vector<5x5xf32> to vector<5xf32>
    %72 = vector.shape_cast %71 : vector<5xf32> to vector<5x1xf32>
    %73 = tpu.reciprocal %72 {approx = true} : vector<5x1xf32> -> vector<5x1xf32>
    %74 = vector.broadcast %73 : vector<5x1xf32> to vector<5x5xf32>
    %75 = arith.mulf %70, %74 : vector<5x5xf32>
    %76 = arith.truncf %75 : vector<5x5xf32> to vector<5x5xbf16>
    %cst_31 = arith.constant dense<0.000000e+00> : vector<5x128xf32>
    %77 = tpu.matmul %76, %64, %cst_31 {dimension_numbers = #tpu.dot_dimension_numbers<[1], [0], [0], [1], [0, 0, 1, 1], [], []>} : vector<5x5xbf16>, vector<5x128xbf16>, vector<5x128xf32> -> vector<5x128xf32>
    %78 = vector.extract_strided_slice %39 {offsets = [0, 256], sizes = [5, 128], strides = [1, 1]} : vector<5x1536xf32> to vector<5x128xf32>
    %79 = arith.truncf %78 : vector<5x128xf32> to vector<5x128xbf16>
    %80 = vector.extract_strided_slice %39 {offsets = [0, 768], sizes = [5, 128], strides = [1, 1]} : vector<5x1536xf32> to vector<5x128xf32>
    %81 = arith.truncf %80 : vector<5x128xf32> to vector<5x128xbf16>
    %82 = vector.extract_strided_slice %39 {offsets = [0, 1280], sizes = [5, 128], strides = [1, 1]} : vector<5x1536xf32> to vector<5x128xf32>
    %83 = arith.truncf %82 : vector<5x128xf32> to vector<5x128xbf16>
    %cst_32 = arith.constant dense<0.000000e+00> : vector<5x5xf32>
    %84 = tpu.matmul %79, %81, %cst_32 {dimension_numbers = #tpu.dot_dimension_numbers<[1], [1], [0], [0], [0, 0, 1, 0], [], []>} : vector<5x128xbf16>, vector<5x128xbf16>, vector<5x5xf32> -> vector<5x5xf32>
    %cst_33 = arith.constant dense<0xFF800000> : vector<5xf32>
    %85 = vector.multi_reduction <maximumf>, %84, %cst_33 [1] : vector<5x5xf32> to vector<5xf32>
    %86 = vector.shape_cast %85 : vector<5xf32> to vector<5x1xf32>
    %87 = vector.broadcast %86 : vector<5x1xf32> to vector<5x5xf32>
    %88 = arith.subf %84, %87 : vector<5x5xf32>
    %89 = math.exp %88 : vector<5x5xf32>
    %cst_34 = arith.constant dense<0.000000e+00> : vector<5xf32>
    %90 = vector.multi_reduction <add>, %89, %cst_34 [1] : vector<5x5xf32> to vector<5xf32>
    %91 = vector.shape_cast %90 : vector<5xf32> to vector<5x1xf32>
    %92 = tpu.reciprocal %91 {approx = true} : vector<5x1xf32> -> vector<5x1xf32>
    %93 = vector.broadcast %92 : vector<5x1xf32> to vector<5x5xf32>
    %94 = arith.mulf %89, %93 : vector<5x5xf32>
    %95 = arith.truncf %94 : vector<5x5xf32> to vector<5x5xbf16>
    %cst_35 = arith.constant dense<0.000000e+00> : vector<5x128xf32>
    %96 = tpu.matmul %95, %83, %cst_35 {dimension_numbers = #tpu.dot_dimension_numbers<[1], [0], [0], [1], [0, 0, 1, 1], [], []>} : vector<5x5xbf16>, vector<5x128xbf16>, vector<5x128xf32> -> vector<5x128xf32>
    %97 = vector.extract_strided_slice %39 {offsets = [0, 384], sizes = [5, 128], strides = [1, 1]} : vector<5x1536xf32> to vector<5x128xf32>
    %98 = arith.truncf %97 : vector<5x128xf32> to vector<5x128xbf16>
    %99 = vector.extract_strided_slice %39 {offsets = [0, 896], sizes = [5, 128], strides = [1, 1]} : vector<5x1536xf32> to vector<5x128xf32>
    %100 = arith.truncf %99 : vector<5x128xf32> to vector<5x128xbf16>
    %101 = vector.extract_strided_slice %39 {offsets = [0, 1408], sizes = [5, 128], strides = [1, 1]} : vector<5x1536xf32> to vector<5x128xf32>
    %102 = arith.truncf %101 : vector<5x128xf32> to vector<5x128xbf16>
    %cst_36 = arith.constant dense<0.000000e+00> : vector<5x5xf32>
    %103 = tpu.matmul %98, %100, %cst_36 {dimension_numbers = #tpu.dot_dimension_numbers<[1], [1], [0], [0], [0, 0, 1, 0], [], []>} : vector<5x128xbf16>, vector<5x128xbf16>, vector<5x5xf32> -> vector<5x5xf32>
    %cst_37 = arith.constant dense<0xFF800000> : vector<5xf32>
    %104 = vector.multi_reduction <maximumf>, %103, %cst_37 [1] : vector<5x5xf32> to vector<5xf32>
    %105 = vector.shape_cast %104 : vector<5xf32> to vector<5x1xf32>
    %106 = vector.broadcast %105 : vector<5x1xf32> to vector<5x5xf32>
    %107 = arith.subf %103, %106 : vector<5x5xf32>
    %108 = math.exp %107 : vector<5x5xf32>
    %cst_38 = arith.constant dense<0.000000e+00> : vector<5xf32>
    %109 = vector.multi_reduction <add>, %108, %cst_38 [1] : vector<5x5xf32> to vector<5xf32>
    %110 = vector.shape_cast %109 : vector<5xf32> to vector<5x1xf32>
    %111 = tpu.reciprocal %110 {approx = true} : vector<5x1xf32> -> vector<5x1xf32>
    %112 = vector.broadcast %111 : vector<5x1xf32> to vector<5x5xf32>
    %113 = arith.mulf %108, %112 : vector<5x5xf32>
    %114 = arith.truncf %113 : vector<5x5xf32> to vector<5x5xbf16>
    %cst_39 = arith.constant dense<0.000000e+00> : vector<5x128xf32>
    %115 = tpu.matmul %114, %102, %cst_39 {dimension_numbers = #tpu.dot_dimension_numbers<[1], [0], [0], [1], [0, 0, 1, 1], [], []>} : vector<5x5xbf16>, vector<5x128xbf16>, vector<5x128xf32> -> vector<5x128xf32>
    %116 = tpu.concatenate %58, %77, %96, %115 in 1 : vector<5x128xf32>, vector<5x128xf32>, vector<5x128xf32>, vector<5x128xf32> -> vector<5x512xf32>
    %117 = arith.truncf %116 : vector<5x512xf32> to vector<5x512xbf16>
    %c0_40 = arith.constant 0 : index
    %c0_41 = arith.constant 0 : index
    %c0_42 = arith.constant 0 : index
    %118 = vector.load %arg8[%c0_40, %c0_41, %c0_42] : memref<2x512x64xbf16, #tpu.memory_space<vmem>>, vector<1x512x64xbf16>
    %119 = vector.shape_cast %118 : vector<1x512x64xbf16> to vector<512x64xbf16>
    %cst_43 = arith.constant dense<0.000000e+00> : vector<5x64xf32>
    %120 = tpu.matmul %117, %119, %cst_43 {dimension_numbers = #tpu.dot_dimension_numbers<[1], [0], [0], [1], [0, 0, 1, 1], [], []>} : vector<5x512xbf16>, vector<512x64xbf16>, vector<5x64xf32> -> vector<5x64xf32>
    %c0_44 = arith.constant 0 : index
    %c0_45 = arith.constant 0 : index
    %c0_46 = arith.constant 0 : index
    %121 = vector.load %arg9[%c0_44, %c0_45, %c0_46] : memref<2x1x64xf32, #tpu.memory_space<vmem>>, vector<1x1x64xf32>
    %122 = vector.shape_cast %121 : vector<1x1x64xf32> to vector<1x64xf32>
    %123 = vector.broadcast %122 : vector<1x64xf32> to vector<5x64xf32>
    %124 = arith.addf %120, %123 : vector<5x64xf32>
    %125 = arith.addf %5, %124 : vector<5x64xf32>
    %c0_47 = arith.constant 0 : index
    %c0_48 = arith.constant 0 : index
    %c0_49 = arith.constant 0 : index
    %126 = vector.load %arg10[%c0_47, %c0_48, %c0_49] : memref<2x1x64xf32, #tpu.memory_space<vmem>>, vector<1x1x64xf32>
    %127 = vector.shape_cast %126 : vector<1x1x64xf32> to vector<1x64xf32>
    %c0_50 = arith.constant 0 : index
    %c0_51 = arith.constant 0 : index
    %c0_52 = arith.constant 0 : index
    %128 = vector.load %arg11[%c0_50, %c0_51, %c0_52] : memref<2x1x64xf32, #tpu.memory_space<vmem>>, vector<1x1x64xf32>
    %129 = vector.shape_cast %128 : vector<1x1x64xf32> to vector<1x64xf32>
    %cst_53 = arith.constant dense<0.000000e+00> : vector<5xf32>
    %130 = vector.multi_reduction <add>, %125, %cst_53 [1] : vector<5x64xf32> to vector<5xf32>
    %131 = vector.shape_cast %130 : vector<5xf32> to vector<5x1xf32>
    %cst_54 = arith.constant 6.400000e+01 : f32
    %132 = vector.broadcast %cst_54 : f32 to vector<5x1xf32>
    %133 = arith.divf %131, %132 : vector<5x1xf32>
    %134 = vector.broadcast %133 : vector<5x1xf32> to vector<5x64xf32>
    %135 = arith.subf %125, %134 : vector<5x64xf32>
    %136 = arith.mulf %135, %135 : vector<5x64xf32>
    %cst_55 = arith.constant dense<0.000000e+00> : vector<5xf32>
    %137 = vector.multi_reduction <add>, %136, %cst_55 [1] : vector<5x64xf32> to vector<5xf32>
    %138 = vector.shape_cast %137 : vector<5xf32> to vector<5x1xf32>
    %cst_56 = arith.constant 6.400000e+01 : f32
    %139 = vector.broadcast %cst_56 : f32 to vector<5x1xf32>
    %140 = arith.divf %138, %139 : vector<5x1xf32>
    %141 = vector.broadcast %133 : vector<5x1xf32> to vector<5x64xf32>
    %142 = arith.subf %125, %141 : vector<5x64xf32>
    %cst_57 = arith.constant 9.99999996E-13 : f32
    %143 = vector.broadcast %cst_57 : f32 to vector<5x1xf32>
    %144 = arith.addf %140, %143 : vector<5x1xf32>
    %145 = math.rsqrt %144 : vector<5x1xf32>
    %146 = vector.broadcast %145 : vector<5x1xf32> to vector<5x64xf32>
    %147 = arith.mulf %142, %146 : vector<5x64xf32>
    %148 = vector.broadcast %127 : vector<1x64xf32> to vector<5x64xf32>
    %149 = arith.mulf %147, %148 : vector<5x64xf32>
    %150 = vector.broadcast %129 : vector<1x64xf32> to vector<5x64xf32>
    %151 = arith.addf %149, %150 : vector<5x64xf32>
    %152 = arith.truncf %151 : vector<5x64xf32> to vector<5x64xbf16>
    %c0_58 = arith.constant 0 : index
    %c0_59 = arith.constant 0 : index
    %c0_60 = arith.constant 0 : index
    %153 = vector.load %arg12[%c0_58, %c0_59, %c0_60] : memref<2x64x128xbf16, #tpu.memory_space<vmem>>, vector<1x64x128xbf16>
    %154 = vector.shape_cast %153 : vector<1x64x128xbf16> to vector<64x128xbf16>
    %cst_61 = arith.constant dense<0.000000e+00> : vector<5x128xf32>
    %155 = tpu.matmul %152, %154, %cst_61 {dimension_numbers = #tpu.dot_dimension_numbers<[1], [0], [0], [1], [0, 0, 1, 1], [], []>} : vector<5x64xbf16>, vector<64x128xbf16>, vector<5x128xf32> -> vector<5x128xf32>
    %c0_62 = arith.constant 0 : index
    %c0_63 = arith.constant 0 : index
    %c0_64 = arith.constant 0 : index
    %156 = vector.load %arg13[%c0_62, %c0_63, %c0_64] : memref<2x1x128xf32, #tpu.memory_space<vmem>>, vector<1x1x128xf32>
    %157 = vector.shape_cast %156 : vector<1x1x128xf32> to vector<1x128xf32>
    %158 = vector.broadcast %157 : vector<1x128xf32> to vector<5x128xf32>
    %159 = arith.addf %155, %158 : vector<5x128xf32>
    %cst_65 = arith.constant 5.000000e-01 : f32
    %160 = vector.broadcast %cst_65 : f32 to vector<5x128xf32>
    %161 = arith.mulf %160, %159 : vector<5x128xf32>
    %cst_66 = arith.constant 4.471500e-02 : f32
    %162 = vector.broadcast %cst_66 : f32 to vector<5x128xf32>
    %163 = arith.mulf %162, %159 : vector<5x128xf32>
    %164 = arith.mulf %163, %159 : vector<5x128xf32>
    %165 = arith.mulf %164, %159 : vector<5x128xf32>
    %166 = arith.addf %159, %165 : vector<5x128xf32>
    %cst_67 = arith.constant 0.797884583 : f32
    %167 = vector.broadcast %cst_67 : f32 to vector<5x128xf32>
    %168 = arith.mulf %167, %166 : vector<5x128xf32>
    %169 = math.tanh %168 : vector<5x128xf32>
    %cst_68 = arith.constant 1.000000e+00 : f32
    %170 = vector.broadcast %cst_68 : f32 to vector<5x128xf32>
    %171 = arith.addf %170, %169 : vector<5x128xf32>
    %172 = arith.mulf %161, %171 : vector<5x128xf32>
    %173 = arith.truncf %172 : vector<5x128xf32> to vector<5x128xbf16>
    %c0_69 = arith.constant 0 : index
    %c0_70 = arith.constant 0 : index
    %c0_71 = arith.constant 0 : index
    %174 = vector.load %arg14[%c0_69, %c0_70, %c0_71] : memref<2x128x64xbf16, #tpu.memory_space<vmem>>, vector<1x128x64xbf16>
    %175 = vector.shape_cast %174 : vector<1x128x64xbf16> to vector<128x64xbf16>
    %cst_72 = arith.constant dense<0.000000e+00> : vector<5x64xf32>
    %176 = tpu.matmul %173, %175, %cst_72 {dimension_numbers = #tpu.dot_dimension_numbers<[1], [0], [0], [1], [0, 0, 1, 1], [], []>} : vector<5x128xbf16>, vector<128x64xbf16>, vector<5x64xf32> -> vector<5x64xf32>
    %c0_73 = arith.constant 0 : index
    %c0_74 = arith.constant 0 : index
    %c0_75 = arith.constant 0 : index
    %177 = vector.load %arg15[%c0_73, %c0_74, %c0_75] : memref<2x1x64xf32, #tpu.memory_space<vmem>>, vector<1x1x64xf32>
    %178 = vector.shape_cast %177 : vector<1x1x64xf32> to vector<1x64xf32>
    %179 = vector.broadcast %178 : vector<1x64xf32> to vector<5x64xf32>
    %180 = arith.addf %176, %179 : vector<5x64xf32>
    %181 = arith.addf %125, %180 : vector<5x64xf32>
    %c1 = arith.constant 1 : index
    %c0_76 = arith.constant 0 : index
    %c0_77 = arith.constant 0 : index
    %182 = vector.load %arg4[%c1, %c0_76, %c0_77] : memref<2x1x64xf32, #tpu.memory_space<vmem>>, vector<1x1x64xf32>
    %183 = vector.shape_cast %182 : vector<1x1x64xf32> to vector<1x64xf32>
    %c1_78 = arith.constant 1 : index
    %c0_79 = arith.constant 0 : index
    %c0_80 = arith.constant 0 : index
    %184 = vector.load %arg5[%c1_78, %c0_79, %c0_80] : memref<2x1x64xf32, #tpu.memory_space<vmem>>, vector<1x1x64xf32>
    %185 = vector.shape_cast %184 : vector<1x1x64xf32> to vector<1x64xf32>
    %cst_81 = arith.constant dense<0.000000e+00> : vector<5xf32>
    %186 = vector.multi_reduction <add>, %181, %cst_81 [1] : vector<5x64xf32> to vector<5xf32>
    %187 = vector.shape_cast %186 : vector<5xf32> to vector<5x1xf32>
    %cst_82 = arith.constant 6.400000e+01 : f32
    %188 = vector.broadcast %cst_82 : f32 to vector<5x1xf32>
    %189 = arith.divf %187, %188 : vector<5x1xf32>
    %190 = vector.broadcast %189 : vector<5x1xf32> to vector<5x64xf32>
    %191 = arith.subf %181, %190 : vector<5x64xf32>
    %192 = arith.mulf %191, %191 : vector<5x64xf32>
    %cst_83 = arith.constant dense<0.000000e+00> : vector<5xf32>
    %193 = vector.multi_reduction <add>, %192, %cst_83 [1] : vector<5x64xf32> to vector<5xf32>
    %194 = vector.shape_cast %193 : vector<5xf32> to vector<5x1xf32>
    %cst_84 = arith.constant 6.400000e+01 : f32
    %195 = vector.broadcast %cst_84 : f32 to vector<5x1xf32>
    %196 = arith.divf %194, %195 : vector<5x1xf32>
    %197 = vector.broadcast %189 : vector<5x1xf32> to vector<5x64xf32>
    %198 = arith.subf %181, %197 : vector<5x64xf32>
    %cst_85 = arith.constant 9.99999996E-13 : f32
    %199 = vector.broadcast %cst_85 : f32 to vector<5x1xf32>
    %200 = arith.addf %196, %199 : vector<5x1xf32>
    %201 = math.rsqrt %200 : vector<5x1xf32>
    %202 = vector.broadcast %201 : vector<5x1xf32> to vector<5x64xf32>
    %203 = arith.mulf %198, %202 : vector<5x64xf32>
    %204 = vector.broadcast %183 : vector<1x64xf32> to vector<5x64xf32>
    %205 = arith.mulf %203, %204 : vector<5x64xf32>
    %206 = vector.broadcast %185 : vector<1x64xf32> to vector<5x64xf32>
    %207 = arith.addf %205, %206 : vector<5x64xf32>
    %208 = arith.truncf %207 : vector<5x64xf32> to vector<5x64xbf16>
    %c1_86 = arith.constant 1 : index
    %c0_87 = arith.constant 0 : index
    %c0_88 = arith.constant 0 : index
    %209 = vector.load %arg6[%c1_86, %c0_87, %c0_88] : memref<2x64x1536xbf16, #tpu.memory_space<vmem>>, vector<1x64x1536xbf16>
    %210 = vector.shape_cast %209 : vector<1x64x1536xbf16> to vector<64x1536xbf16>
    %cst_89 = arith.constant dense<0.000000e+00> : vector<5x1536xf32>
    %211 = tpu.matmul %208, %210, %cst_89 {dimension_numbers = #tpu.dot_dimension_numbers<[1], [0], [0], [1], [0, 0, 1, 1], [], []>} : vector<5x64xbf16>, vector<64x1536xbf16>, vector<5x1536xf32> -> vector<5x1536xf32>
    %c1_90 = arith.constant 1 : index
    %c0_91 = arith.constant 0 : index
    %c0_92 = arith.constant 0 : index
    %212 = vector.load %arg7[%c1_90, %c0_91, %c0_92] : memref<2x1x1536xf32, #tpu.memory_space<vmem>>, vector<1x1x1536xf32>
    %213 = vector.shape_cast %212 : vector<1x1x1536xf32> to vector<1x1536xf32>
    %214 = vector.broadcast %213 : vector<1x1536xf32> to vector<5x1536xf32>
    %215 = arith.addf %211, %214 : vector<5x1536xf32>
    %216 = vector.extract_strided_slice %215 {offsets = [0, 0], sizes = [5, 128], strides = [1, 1]} : vector<5x1536xf32> to vector<5x128xf32>
    %217 = arith.truncf %216 : vector<5x128xf32> to vector<5x128xbf16>
    %218 = vector.extract_strided_slice %215 {offsets = [0, 512], sizes = [5, 128], strides = [1, 1]} : vector<5x1536xf32> to vector<5x128xf32>
    %219 = arith.truncf %218 : vector<5x128xf32> to vector<5x128xbf16>
    %220 = vector.extract_strided_slice %215 {offsets = [0, 1024], sizes = [5, 128], strides = [1, 1]} : vector<5x1536xf32> to vector<5x128xf32>
    %221 = arith.truncf %220 : vector<5x128xf32> to vector<5x128xbf16>
    %cst_93 = arith.constant dense<0.000000e+00> : vector<5x5xf32>
    %222 = tpu.matmul %217, %219, %cst_93 {dimension_numbers = #tpu.dot_dimension_numbers<[1], [1], [0], [0], [0, 0, 1, 0], [], []>} : vector<5x128xbf16>, vector<5x128xbf16>, vector<5x5xf32> -> vector<5x5xf32>
    %cst_94 = arith.constant dense<0xFF800000> : vector<5xf32>
    %223 = vector.multi_reduction <maximumf>, %222, %cst_94 [1] : vector<5x5xf32> to vector<5xf32>
    %224 = vector.shape_cast %223 : vector<5xf32> to vector<5x1xf32>
    %225 = vector.broadcast %224 : vector<5x1xf32> to vector<5x5xf32>
    %226 = arith.subf %222, %225 : vector<5x5xf32>
    %227 = math.exp %226 : vector<5x5xf32>
    %cst_95 = arith.constant dense<0.000000e+00> : vector<5xf32>
    %228 = vector.multi_reduction <add>, %227, %cst_95 [1] : vector<5x5xf32> to vector<5xf32>
    %229 = vector.shape_cast %228 : vector<5xf32> to vector<5x1xf32>
    %230 = tpu.reciprocal %229 {approx = true} : vector<5x1xf32> -> vector<5x1xf32>
    %231 = vector.broadcast %230 : vector<5x1xf32> to vector<5x5xf32>
    %232 = arith.mulf %227, %231 : vector<5x5xf32>
    %233 = arith.truncf %232 : vector<5x5xf32> to vector<5x5xbf16>
    %cst_96 = arith.constant dense<0.000000e+00> : vector<5x128xf32>
    %234 = tpu.matmul %233, %221, %cst_96 {dimension_numbers = #tpu.dot_dimension_numbers<[1], [0], [0], [1], [0, 0, 1, 1], [], []>} : vector<5x5xbf16>, vector<5x128xbf16>, vector<5x128xf32> -> vector<5x128xf32>
    %235 = vector.extract_strided_slice %215 {offsets = [0, 128], sizes = [5, 128], strides = [1, 1]} : vector<5x1536xf32> to vector<5x128xf32>
    %236 = arith.truncf %235 : vector<5x128xf32> to vector<5x128xbf16>
    %237 = vector.extract_strided_slice %215 {offsets = [0, 640], sizes = [5, 128], strides = [1, 1]} : vector<5x1536xf32> to vector<5x128xf32>
    %238 = arith.truncf %237 : vector<5x128xf32> to vector<5x128xbf16>
    %239 = vector.extract_strided_slice %215 {offsets = [0, 1152], sizes = [5, 128], strides = [1, 1]} : vector<5x1536xf32> to vector<5x128xf32>
    %240 = arith.truncf %239 : vector<5x128xf32> to vector<5x128xbf16>
    %cst_97 = arith.constant dense<0.000000e+00> : vector<5x5xf32>
    %241 = tpu.matmul %236, %238, %cst_97 {dimension_numbers = #tpu.dot_dimension_numbers<[1], [1], [0], [0], [0, 0, 1, 0], [], []>} : vector<5x128xbf16>, vector<5x128xbf16>, vector<5x5xf32> -> vector<5x5xf32>
    %cst_98 = arith.constant dense<0xFF800000> : vector<5xf32>
    %242 = vector.multi_reduction <maximumf>, %241, %cst_98 [1] : vector<5x5xf32> to vector<5xf32>
    %243 = vector.shape_cast %242 : vector<5xf32> to vector<5x1xf32>
    %244 = vector.broadcast %243 : vector<5x1xf32> to vector<5x5xf32>
    %245 = arith.subf %241, %244 : vector<5x5xf32>
    %246 = math.exp %245 : vector<5x5xf32>
    %cst_99 = arith.constant dense<0.000000e+00> : vector<5xf32>
    %247 = vector.multi_reduction <add>, %246, %cst_99 [1] : vector<5x5xf32> to vector<5xf32>
    %248 = vector.shape_cast %247 : vector<5xf32> to vector<5x1xf32>
    %249 = tpu.reciprocal %248 {approx = true} : vector<5x1xf32> -> vector<5x1xf32>
    %250 = vector.broadcast %249 : vector<5x1xf32> to vector<5x5xf32>
    %251 = arith.mulf %246, %250 : vector<5x5xf32>
    %252 = arith.truncf %251 : vector<5x5xf32> to vector<5x5xbf16>
    %cst_100 = arith.constant dense<0.000000e+00> : vector<5x128xf32>
    %253 = tpu.matmul %252, %240, %cst_100 {dimension_numbers = #tpu.dot_dimension_numbers<[1], [0], [0], [1], [0, 0, 1, 1], [], []>} : vector<5x5xbf16>, vector<5x128xbf16>, vector<5x128xf32> -> vector<5x128xf32>
    %254 = vector.extract_strided_slice %215 {offsets = [0, 256], sizes = [5, 128], strides = [1, 1]} : vector<5x1536xf32> to vector<5x128xf32>
    %255 = arith.truncf %254 : vector<5x128xf32> to vector<5x128xbf16>
    %256 = vector.extract_strided_slice %215 {offsets = [0, 768], sizes = [5, 128], strides = [1, 1]} : vector<5x1536xf32> to vector<5x128xf32>
    %257 = arith.truncf %256 : vector<5x128xf32> to vector<5x128xbf16>
    %258 = vector.extract_strided_slice %215 {offsets = [0, 1280], sizes = [5, 128], strides = [1, 1]} : vector<5x1536xf32> to vector<5x128xf32>
    %259 = arith.truncf %258 : vector<5x128xf32> to vector<5x128xbf16>
    %cst_101 = arith.constant dense<0.000000e+00> : vector<5x5xf32>
    %260 = tpu.matmul %255, %257, %cst_101 {dimension_numbers = #tpu.dot_dimension_numbers<[1], [1], [0], [0], [0, 0, 1, 0], [], []>} : vector<5x128xbf16>, vector<5x128xbf16>, vector<5x5xf32> -> vector<5x5xf32>
    %cst_102 = arith.constant dense<0xFF800000> : vector<5xf32>
    %261 = vector.multi_reduction <maximumf>, %260, %cst_102 [1] : vector<5x5xf32> to vector<5xf32>
    %262 = vector.shape_cast %261 : vector<5xf32> to vector<5x1xf32>
    %263 = vector.broadcast %262 : vector<5x1xf32> to vector<5x5xf32>
    %264 = arith.subf %260, %263 : vector<5x5xf32>
    %265 = math.exp %264 : vector<5x5xf32>
    %cst_103 = arith.constant dense<0.000000e+00> : vector<5xf32>
    %266 = vector.multi_reduction <add>, %265, %cst_103 [1] : vector<5x5xf32> to vector<5xf32>
    %267 = vector.shape_cast %266 : vector<5xf32> to vector<5x1xf32>
    %268 = tpu.reciprocal %267 {approx = true} : vector<5x1xf32> -> vector<5x1xf32>
    %269 = vector.broadcast %268 : vector<5x1xf32> to vector<5x5xf32>
    %270 = arith.mulf %265, %269 : vector<5x5xf32>
    %271 = arith.truncf %270 : vector<5x5xf32> to vector<5x5xbf16>
    %cst_104 = arith.constant dense<0.000000e+00> : vector<5x128xf32>
    %272 = tpu.matmul %271, %259, %cst_104 {dimension_numbers = #tpu.dot_dimension_numbers<[1], [0], [0], [1], [0, 0, 1, 1], [], []>} : vector<5x5xbf16>, vector<5x128xbf16>, vector<5x128xf32> -> vector<5x128xf32>
    %273 = vector.extract_strided_slice %215 {offsets = [0, 384], sizes = [5, 128], strides = [1, 1]} : vector<5x1536xf32> to vector<5x128xf32>
    %274 = arith.truncf %273 : vector<5x128xf32> to vector<5x128xbf16>
    %275 = vector.extract_strided_slice %215 {offsets = [0, 896], sizes = [5, 128], strides = [1, 1]} : vector<5x1536xf32> to vector<5x128xf32>
    %276 = arith.truncf %275 : vector<5x128xf32> to vector<5x128xbf16>
    %277 = vector.extract_strided_slice %215 {offsets = [0, 1408], sizes = [5, 128], strides = [1, 1]} : vector<5x1536xf32> to vector<5x128xf32>
    %278 = arith.truncf %277 : vector<5x128xf32> to vector<5x128xbf16>
    %cst_105 = arith.constant dense<0.000000e+00> : vector<5x5xf32>
    %279 = tpu.matmul %274, %276, %cst_105 {dimension_numbers = #tpu.dot_dimension_numbers<[1], [1], [0], [0], [0, 0, 1, 0], [], []>} : vector<5x128xbf16>, vector<5x128xbf16>, vector<5x5xf32> -> vector<5x5xf32>
    %cst_106 = arith.constant dense<0xFF800000> : vector<5xf32>
    %280 = vector.multi_reduction <maximumf>, %279, %cst_106 [1] : vector<5x5xf32> to vector<5xf32>
    %281 = vector.shape_cast %280 : vector<5xf32> to vector<5x1xf32>
    %282 = vector.broadcast %281 : vector<5x1xf32> to vector<5x5xf32>
    %283 = arith.subf %279, %282 : vector<5x5xf32>
    %284 = math.exp %283 : vector<5x5xf32>
    %cst_107 = arith.constant dense<0.000000e+00> : vector<5xf32>
    %285 = vector.multi_reduction <add>, %284, %cst_107 [1] : vector<5x5xf32> to vector<5xf32>
    %286 = vector.shape_cast %285 : vector<5xf32> to vector<5x1xf32>
    %287 = tpu.reciprocal %286 {approx = true} : vector<5x1xf32> -> vector<5x1xf32>
    %288 = vector.broadcast %287 : vector<5x1xf32> to vector<5x5xf32>
    %289 = arith.mulf %284, %288 : vector<5x5xf32>
    %290 = arith.truncf %289 : vector<5x5xf32> to vector<5x5xbf16>
    %cst_108 = arith.constant dense<0.000000e+00> : vector<5x128xf32>
    %291 = tpu.matmul %290, %278, %cst_108 {dimension_numbers = #tpu.dot_dimension_numbers<[1], [0], [0], [1], [0, 0, 1, 1], [], []>} : vector<5x5xbf16>, vector<5x128xbf16>, vector<5x128xf32> -> vector<5x128xf32>
    %292 = tpu.concatenate %234, %253, %272, %291 in 1 : vector<5x128xf32>, vector<5x128xf32>, vector<5x128xf32>, vector<5x128xf32> -> vector<5x512xf32>
    %293 = arith.truncf %292 : vector<5x512xf32> to vector<5x512xbf16>
    %c1_109 = arith.constant 1 : index
    %c0_110 = arith.constant 0 : index
    %c0_111 = arith.constant 0 : index
    %294 = vector.load %arg8[%c1_109, %c0_110, %c0_111] : memref<2x512x64xbf16, #tpu.memory_space<vmem>>, vector<1x512x64xbf16>
    %295 = vector.shape_cast %294 : vector<1x512x64xbf16> to vector<512x64xbf16>
    %cst_112 = arith.constant dense<0.000000e+00> : vector<5x64xf32>
    %296 = tpu.matmul %293, %295, %cst_112 {dimension_numbers = #tpu.dot_dimension_numbers<[1], [0], [0], [1], [0, 0, 1, 1], [], []>} : vector<5x512xbf16>, vector<512x64xbf16>, vector<5x64xf32> -> vector<5x64xf32>
    %c1_113 = arith.constant 1 : index
    %c0_114 = arith.constant 0 : index
    %c0_115 = arith.constant 0 : index
    %297 = vector.load %arg9[%c1_113, %c0_114, %c0_115] : memref<2x1x64xf32, #tpu.memory_space<vmem>>, vector<1x1x64xf32>
    %298 = vector.shape_cast %297 : vector<1x1x64xf32> to vector<1x64xf32>
    %299 = vector.broadcast %298 : vector<1x64xf32> to vector<5x64xf32>
    %300 = arith.addf %296, %299 : vector<5x64xf32>
    %301 = arith.addf %181, %300 : vector<5x64xf32>
    %c1_116 = arith.constant 1 : index
    %c0_117 = arith.constant 0 : index
    %c0_118 = arith.constant 0 : index
    %302 = vector.load %arg10[%c1_116, %c0_117, %c0_118] : memref<2x1x64xf32, #tpu.memory_space<vmem>>, vector<1x1x64xf32>
    %303 = vector.shape_cast %302 : vector<1x1x64xf32> to vector<1x64xf32>
    %c1_119 = arith.constant 1 : index
    %c0_120 = arith.constant 0 : index
    %c0_121 = arith.constant 0 : index
    %304 = vector.load %arg11[%c1_119, %c0_120, %c0_121] : memref<2x1x64xf32, #tpu.memory_space<vmem>>, vector<1x1x64xf32>
    %305 = vector.shape_cast %304 : vector<1x1x64xf32> to vector<1x64xf32>
    %cst_122 = arith.constant dense<0.000000e+00> : vector<5xf32>
    %306 = vector.multi_reduction <add>, %301, %cst_122 [1] : vector<5x64xf32> to vector<5xf32>
    %307 = vector.shape_cast %306 : vector<5xf32> to vector<5x1xf32>
    %cst_123 = arith.constant 6.400000e+01 : f32
    %308 = vector.broadcast %cst_123 : f32 to vector<5x1xf32>
    %309 = arith.divf %307, %308 : vector<5x1xf32>
    %310 = vector.broadcast %309 : vector<5x1xf32> to vector<5x64xf32>
    %311 = arith.subf %301, %310 : vector<5x64xf32>
    %312 = arith.mulf %311, %311 : vector<5x64xf32>
    %cst_124 = arith.constant dense<0.000000e+00> : vector<5xf32>
    %313 = vector.multi_reduction <add>, %312, %cst_124 [1] : vector<5x64xf32> to vector<5xf32>
    %314 = vector.shape_cast %313 : vector<5xf32> to vector<5x1xf32>
    %cst_125 = arith.constant 6.400000e+01 : f32
    %315 = vector.broadcast %cst_125 : f32 to vector<5x1xf32>
    %316 = arith.divf %314, %315 : vector<5x1xf32>
    %317 = vector.broadcast %309 : vector<5x1xf32> to vector<5x64xf32>
    %318 = arith.subf %301, %317 : vector<5x64xf32>
    %cst_126 = arith.constant 9.99999996E-13 : f32
    %319 = vector.broadcast %cst_126 : f32 to vector<5x1xf32>
    %320 = arith.addf %316, %319 : vector<5x1xf32>
    %321 = math.rsqrt %320 : vector<5x1xf32>
    %322 = vector.broadcast %321 : vector<5x1xf32> to vector<5x64xf32>
    %323 = arith.mulf %318, %322 : vector<5x64xf32>
    %324 = vector.broadcast %303 : vector<1x64xf32> to vector<5x64xf32>
    %325 = arith.mulf %323, %324 : vector<5x64xf32>
    %326 = vector.broadcast %305 : vector<1x64xf32> to vector<5x64xf32>
    %327 = arith.addf %325, %326 : vector<5x64xf32>
    %328 = arith.truncf %327 : vector<5x64xf32> to vector<5x64xbf16>
    %c1_127 = arith.constant 1 : index
    %c0_128 = arith.constant 0 : index
    %c0_129 = arith.constant 0 : index
    %329 = vector.load %arg12[%c1_127, %c0_128, %c0_129] : memref<2x64x128xbf16, #tpu.memory_space<vmem>>, vector<1x64x128xbf16>
    %330 = vector.shape_cast %329 : vector<1x64x128xbf16> to vector<64x128xbf16>
    %cst_130 = arith.constant dense<0.000000e+00> : vector<5x128xf32>
    %331 = tpu.matmul %328, %330, %cst_130 {dimension_numbers = #tpu.dot_dimension_numbers<[1], [0], [0], [1], [0, 0, 1, 1], [], []>} : vector<5x64xbf16>, vector<64x128xbf16>, vector<5x128xf32> -> vector<5x128xf32>
    %c1_131 = arith.constant 1 : index
    %c0_132 = arith.constant 0 : index
    %c0_133 = arith.constant 0 : index
    %332 = vector.load %arg13[%c1_131, %c0_132, %c0_133] : memref<2x1x128xf32, #tpu.memory_space<vmem>>, vector<1x1x128xf32>
    %333 = vector.shape_cast %332 : vector<1x1x128xf32> to vector<1x128xf32>
    %334 = vector.broadcast %333 : vector<1x128xf32> to vector<5x128xf32>
    %335 = arith.addf %331, %334 : vector<5x128xf32>
    %cst_134 = arith.constant 5.000000e-01 : f32
    %336 = vector.broadcast %cst_134 : f32 to vector<5x128xf32>
    %337 = arith.mulf %336, %335 : vector<5x128xf32>
    %cst_135 = arith.constant 4.471500e-02 : f32
    %338 = vector.broadcast %cst_135 : f32 to vector<5x128xf32>
    %339 = arith.mulf %338, %335 : vector<5x128xf32>
    %340 = arith.mulf %339, %335 : vector<5x128xf32>
    %341 = arith.mulf %340, %335 : vector<5x128xf32>
    %342 = arith.addf %335, %341 : vector<5x128xf32>
    %cst_136 = arith.constant 0.797884583 : f32
    %343 = vector.broadcast %cst_136 : f32 to vector<5x128xf32>
    %344 = arith.mulf %343, %342 : vector<5x128xf32>
    %345 = math.tanh %344 : vector<5x128xf32>
    %cst_137 = arith.constant 1.000000e+00 : f32
    %346 = vector.broadcast %cst_137 : f32 to vector<5x128xf32>
    %347 = arith.addf %346, %345 : vector<5x128xf32>
    %348 = arith.mulf %337, %347 : vector<5x128xf32>
    %349 = arith.truncf %348 : vector<5x128xf32> to vector<5x128xbf16>
    %c1_138 = arith.constant 1 : index
    %c0_139 = arith.constant 0 : index
    %c0_140 = arith.constant 0 : index
    %350 = vector.load %arg14[%c1_138, %c0_139, %c0_140] : memref<2x128x64xbf16, #tpu.memory_space<vmem>>, vector<1x128x64xbf16>
    %351 = vector.shape_cast %350 : vector<1x128x64xbf16> to vector<128x64xbf16>
    %cst_141 = arith.constant dense<0.000000e+00> : vector<5x64xf32>
    %352 = tpu.matmul %349, %351, %cst_141 {dimension_numbers = #tpu.dot_dimension_numbers<[1], [0], [0], [1], [0, 0, 1, 1], [], []>} : vector<5x128xbf16>, vector<128x64xbf16>, vector<5x64xf32> -> vector<5x64xf32>
    %c1_142 = arith.constant 1 : index
    %c0_143 = arith.constant 0 : index
    %c0_144 = arith.constant 0 : index
    %353 = vector.load %arg15[%c1_142, %c0_143, %c0_144] : memref<2x1x64xf32, #tpu.memory_space<vmem>>, vector<1x1x64xf32>
    %354 = vector.shape_cast %353 : vector<1x1x64xf32> to vector<1x64xf32>
    %355 = vector.broadcast %354 : vector<1x64xf32> to vector<5x64xf32>
    %356 = arith.addf %352, %355 : vector<5x64xf32>
    %357 = arith.addf %301, %356 : vector<5x64xf32>
    %358 = vector.extract_strided_slice %357 {offsets = [0, 0], sizes = [1, 64], strides = [1, 1]} : vector<5x64xf32> to vector<1x64xf32>
    %c0_145 = arith.constant 0 : index
    %c0_146 = arith.constant 0 : index
    %359 = vector.load %arg16[%c0_145, %c0_146] : memref<1x64xf32, #tpu.memory_space<vmem>>, vector<1x64xf32>
    %c0_147 = arith.constant 0 : index
    %c0_148 = arith.constant 0 : index
    %360 = vector.load %arg17[%c0_147, %c0_148] : memref<1x64xf32, #tpu.memory_space<vmem>>, vector<1x64xf32>
    %cst_149 = arith.constant dense<0.000000e+00> : vector<1xf32>
    %361 = vector.multi_reduction <add>, %358, %cst_149 [1] : vector<1x64xf32> to vector<1xf32>
    %362 = vector.shape_cast %361 : vector<1xf32> to vector<1x1xf32>
    %cst_150 = arith.constant 6.400000e+01 : f32
    %363 = vector.broadcast %cst_150 : f32 to vector<1x1xf32>
    %364 = arith.divf %362, %363 : vector<1x1xf32>
    %365 = vector.broadcast %364 : vector<1x1xf32> to vector<1x64xf32>
    %366 = arith.subf %358, %365 : vector<1x64xf32>
    %367 = arith.mulf %366, %366 : vector<1x64xf32>
    %cst_151 = arith.constant dense<0.000000e+00> : vector<1xf32>
    %368 = vector.multi_reduction <add>, %367, %cst_151 [1] : vector<1x64xf32> to vector<1xf32>
    %369 = vector.shape_cast %368 : vector<1xf32> to vector<1x1xf32>
    %cst_152 = arith.constant 6.400000e+01 : f32
    %370 = vector.broadcast %cst_152 : f32 to vector<1x1xf32>
    %371 = arith.divf %369, %370 : vector<1x1xf32>
    %372 = vector.broadcast %364 : vector<1x1xf32> to vector<1x64xf32>
    %373 = arith.subf %358, %372 : vector<1x64xf32>
    %cst_153 = arith.constant 9.99999996E-13 : f32
    %374 = vector.broadcast %cst_153 : f32 to vector<1x1xf32>
    %375 = arith.addf %371, %374 : vector<1x1xf32>
    %376 = math.rsqrt %375 : vector<1x1xf32>
    %377 = vector.broadcast %376 : vector<1x1xf32> to vector<1x64xf32>
    %378 = arith.mulf %373, %377 : vector<1x64xf32>
    %379 = arith.mulf %378, %359 : vector<1x64xf32>
    %380 = arith.addf %379, %360 : vector<1x64xf32>
    %381 = arith.truncf %380 : vector<1x64xf32> to vector<1x64xbf16>
    %c0_154 = arith.constant 0 : index
    %c0_155 = arith.constant 0 : index
    %382 = vector.load %arg18[%c0_154, %c0_155] : memref<64x128xbf16, #tpu.memory_space<vmem>>, vector<64x128xbf16>
    %cst_156 = arith.constant dense<0.000000e+00> : vector<1x128xf32>
    %383 = tpu.matmul %381, %382, %cst_156 {dimension_numbers = #tpu.dot_dimension_numbers<[1], [0], [0], [1], [0, 0, 1, 1], [], []>} : vector<1x64xbf16>, vector<64x128xbf16>, vector<1x128xf32> -> vector<1x128xf32>
    %c0_157 = arith.constant 0 : index
    %c0_158 = arith.constant 0 : index
    %384 = vector.load %arg19[%c0_157, %c0_158] : memref<1x128xf32, #tpu.memory_space<vmem>>, vector<1x128xf32>
    %385 = arith.addf %383, %384 : vector<1x128xf32>
    %386 = vector.shape_cast %385 : vector<1x128xf32> to vector<1x1x128xf32>
    %c0_159 = arith.constant 0 : index
    %c0_160 = arith.constant 0 : index
    %c0_161 = arith.constant 0 : index
    %387 = vector.load %arg20[%c0_159, %c0_160, %c0_161] : memref<1x1x128xf32, #tpu.memory_space<vmem>>, vector<1x1x128xf32>
    tpu.vector_store %arg20[%c0_159, %c0_160, %c0_161], %386 {strides = array<i32>} : memref<1x1x128xf32, #tpu.memory_space<vmem>>, vector<1x1x128xf32>,
    return
  }
  func.func @transform_0(%arg0: i32) -> (i32, i32, i32) {
    %c0_i32 = arith.constant 0 : i32
    %c0_i32_0 = arith.constant 0 : i32
    %c0_i32_1 = arith.constant 0 : i32
    return %arg0, %c0_i32, %c0_i32_0 : i32, i32, i32
  }
  func.func @transform_1(%arg0: i32) -> (i32, i32) {
    %c0_i32 = arith.constant 0 : i32
    %c0_i32_0 = arith.constant 0 : i32
    %c0_i32_1 = arith.constant 0 : i32
    return %c0_i32, %c0_i32_0 : i32, i32
  }
  func.func @transform_2(%arg0: i32) -> (i32, i32) {
    %c0_i32 = arith.constant 0 : i32
    %c0_i32_0 = arith.constant 0 : i32
    %c0_i32_1 = arith.constant 0 : i32
    return %c0_i32, %c0_i32_0 : i32, i32
  }
  func.func @transform_3(%arg0: i32) -> (i32, i32, i32) {
    %c0_i32 = arith.constant 0 : i32
    %c0_i32_0 = arith.constant 0 : i32
    %c0_i32_1 = arith.constant 0 : i32
    %c0_i32_2 = arith.constant 0 : i32
    return %c0_i32, %c0_i32_0, %c0_i32_1 : i32, i32, i32
  }
  func.func @transform_4(%arg0: i32) -> (i32, i32, i32) {
    %c0_i32 = arith.constant 0 : i32
    %c0_i32_0 = arith.constant 0 : i32
    %c0_i32_1 = arith.constant 0 : i32
    %c0_i32_2 = arith.constant 0 : i32
    return %c0_i32, %c0_i32_0, %c0_i32_1 : i32, i32, i32
  }
  func.func @transform_5(%arg0: i32) -> (i32, i32, i32) {
    %c0_i32 = arith.constant 0 : i32
    %c0_i32_0 = arith.constant 0 : i32
    %c0_i32_1 = arith.constant 0 : i32
    %c0_i32_2 = arith.constant 0 : i32
    return %c0_i32, %c0_i32_0, %c0_i32_1 : i32, i32, i32
  }
  func.func @transform_6(%arg0: i32) -> (i32, i32, i32) {
    %c0_i32 = arith.constant 0 : i32
    %c0_i32_0 = arith.constant 0 : i32
    %c0_i32_1 = arith.constant 0 : i32
    %c0_i32_2 = arith.constant 0 : i32
    return %c0_i32, %c0_i32_0, %c0_i32_1 : i32, i32, i32
  }
  func.func @transform_7(%arg0: i32) -> (i32, i32, i32) {
    %c0_i32 = arith.constant 0 : i32
    %c0_i32_0 = arith.constant 0 : i32
    %c0_i32_1 = arith.constant 0 : i32
    %c0_i32_2 = arith.constant 0 : i32
    return %c0_i32, %c0_i32_0, %c0_i32_1 : i32, i32, i32
  }
  func.func @transform_8(%arg0: i32) -> (i32, i32, i32) {
    %c0_i32 = arith.constant 0 : i32
    %c0_i32_0 = arith.constant 0 : i32
    %c0_i32_1 = arith.constant 0 : i32
    %c0_i32_2 = arith.constant 0 : i32
    return %c0_i32, %c0_i32_0, %c0_i32_1 : i32, i32, i32
  }
  func.func @transform_9(%arg0: i32) -> (i32, i32, i32) {
    %c0_i32 = arith.constant 0 : i32
    %c0_i32_0 = arith.constant 0 : i32
    %c0_i32_1 = arith.constant 0 : i32
    %c0_i32_2 = arith.constant 0 : i32
    return %c0_i32, %c0_i32_0, %c0_i32_1 : i32, i32, i32
  }
  func.func @transform_10(%arg0: i32) -> (i32, i32, i32) {
    %c0_i32 = arith.constant 0 : i32
    %c0_i32_0 = arith.constant 0 : i32
    %c0_i32_1 = arith.constant 0 : i32
    %c0_i32_2 = arith.constant 0 : i32
    return %c0_i32, %c0_i32_0, %c0_i32_1 : i32, i32, i32
  }
  func.func @transform_11(%arg0: i32) -> (i32, i32, i32) {
    %c0_i32 = arith.constant 0 : i32
    %c0_i32_0 = arith.constant 0 : i32
    %c0_i32_1 = arith.constant 0 : i32
    %c0_i32_2 = arith.constant 0 : i32
    return %c0_i32, %c0_i32_0, %c0_i32_1 : i32, i32, i32
  }
  func.func @transform_12(%arg0: i32) -> (i32, i32, i32) {
    %c0_i32 = arith.constant 0 : i32
    %c0_i32_0 = arith.constant 0 : i32
    %c0_i32_1 = arith.constant 0 : i32
    %c0_i32_2 = arith.constant 0 : i32
    return %c0_i32, %c0_i32_0, %c0_i32_1 : i32, i32, i32
  }
  func.func @transform_13(%arg0: i32) -> (i32, i32, i32) {
    %c0_i32 = arith.constant 0 : i32
    %c0_i32_0 = arith.constant 0 : i32
    %c0_i32_1 = arith.constant 0 : i32
    %c0_i32_2 = arith.constant 0 : i32
    return %c0_i32, %c0_i32_0, %c0_i32_1 : i32, i32, i32
  }
  func.func @transform_14(%arg0: i32) -> (i32, i32, i32) {
    %c0_i32 = arith.constant 0 : i32
    %c0_i32_0 = arith.constant 0 : i32
    %c0_i32_1 = arith.constant 0 : i32
    %c0_i32_2 = arith.constant 0 : i32
    return %c0_i32, %c0_i32_0, %c0_i32_1 : i32, i32, i32
  }
  func.func @transform_15(%arg0: i32) -> (i32, i32) {
    %c0_i32 = arith.constant 0 : i32
    %c0_i32_0 = arith.constant 0 : i32
    %c0_i32_1 = arith.constant 0 : i32
    return %c0_i32, %c0_i32_0 : i32, i32
  }
  func.func @transform_16(%arg0: i32) -> (i32, i32) {
    %c0_i32 = arith.constant 0 : i32
    %c0_i32_0 = arith.constant 0 : i32
    %c0_i32_1 = arith.constant 0 : i32
    return %c0_i32, %c0_i32_0 : i32, i32
  }
  func.func @transform_17(%arg0: i32) -> (i32, i32) {
    %c0_i32 = arith.constant 0 : i32
    %c0_i32_0 = arith.constant 0 : i32
    %c0_i32_1 = arith.constant 0 : i32
    return %c0_i32, %c0_i32_0 : i32, i32
  }
  func.func @transform_18(%arg0: i32) -> (i32, i32) {
    %c0_i32 = arith.constant 0 : i32
    %c0_i32_0 = arith.constant 0 : i32
    %c0_i32_1 = arith.constant 0 : i32
    return %c0_i32, %c0_i32_0 : i32, i32
  }
  func.func @transform_19(%arg0: i32) -> (i32, i32, i32) {
    %c0_i32 = arith.constant 0 : i32
    %c0_i32_0 = arith.constant 0 : i32
    %c0_i32_1 = arith.constant 0 : i32
    return %arg0, %c0_i32, %c0_i32_0 : i32, i32, i32
  }
}

</mosaic_0001>

<llo_original>
// kernel: vit_forward.1
$region0: #{vit_forward.1}
  #allocation0 [shape = 'u32[]', space=smem, size = 0x4, offset = 0x4, fixed_abs, tag = 'smem constant byte address 0x4 - core index']
  #allocation1 [shape = 'u32[144,128]{1,0:T(1,128)}', space=vmem, size = 0x12000, scoped, tag = 'internal scratch']
  %s0 = inlined_call_operand.vmem [shape: bf16[2,5,768], index: 0, kind: input, shape index: {}]
  %s1 = inlined_call_operand.vmem [shape: bf16[768,64], index: 1, kind: input, shape index: {}]
  %s2 = inlined_call_operand.vmem [shape: f32[5,64], index: 2, kind: input, shape index: {}]
  %s3 = inlined_call_operand.vmem [shape: f32[2,1,64], index: 3, kind: input, shape index: {}]
  %s4 = inlined_call_operand.vmem [shape: f32[2,1,64], index: 4, kind: input, shape index: {}]
  %s5 = inlined_call_operand.vmem [shape: bf16[2,64,1536], index: 5, kind: input, shape index: {}]
  %s6 = inlined_call_operand.vmem [shape: f32[2,1,1536], index: 6, kind: input, shape index: {}]
  %s7 = inlined_call_operand.vmem [shape: bf16[2,512,64], index: 7, kind: input, shape index: {}]
  %s8 = inlined_call_operand.vmem [shape: f32[2,1,64], index: 8, kind: input, shape index: {}]
  %s9 = inlined_call_operand.vmem [shape: f32[2,1,64], index: 9, kind: input, shape index: {}]
  %s10 = inlined_call_operand.vmem [shape: f32[2,1,64], index: 10, kind: input, shape index: {}]
  %s11 = inlined_call_operand.vmem [shape: bf16[2,64,128], index: 11, kind: input, shape index: {}]
  %s12 = inlined_call_operand.vmem [shape: f32[2,1,128], index: 12, kind: input, shape index: {}]
  %s13 = inlined_call_operand.vmem [shape: bf16[2,128,64], index: 13, kind: input, shape index: {}]
  %s14 = inlined_call_operand.vmem [shape: f32[2,1,64], index: 14, kind: input, shape index: {}]
  %s15 = inlined_call_operand.vmem [shape: f32[1,64], index: 15, kind: input, shape index: {}]
  %s16 = inlined_call_operand.vmem [shape: f32[1,64], index: 16, kind: input, shape index: {}]
  %s17 = inlined_call_operand.vmem [shape: bf16[64,128], index: 17, kind: input, shape index: {}]
  %s18 = inlined_call_operand.vmem [shape: f32[1,128], index: 18, kind: input, shape index: {}]
  %s19 = inlined_call_operand.hbm [shape: f32[2,1,128], index: 19, kind: output, shape index: {}]
  %s20 = sld [smem:[#allocation0]]
  $region109: #{vit_forward.1} parent=0
    _
  %s22 = ssub.s32 1, %s20
  %s23 = scalar_select 0, %s22, %s20
  $region1: #{vit_forward.1} parent=0
    #allocation2 [shape = 'u8[1024]{0}', space=vmem, size = 0x400, scoped, tag = 'output window, operand 0']
    #allocation3 [shape = 's32[2]{0}', space=sflag, size = 0x8, scoped, tag = 'scoped memory for vit_forward.1']
    %24 = vsyncpa [#allocation3], 0
    %s25 = scalar_lea.sflag [#allocation3], 1
    %26 = vsyncpa %s25, 0
    loop: start=0, step=1, limit=4
    $region2: #{vit_forward.1} parent=1 // loop_pre_header
      _
    $region3: #{vit_forward.1} parent=1 // loop_header
      %s28 = sphi 0, %s32
      %p29 = scmp.ge.s32.totalorder %s28, 4
      %s38 = sphi 0, %s40
      %s41 = sphi 0, %s38
      %s42 = sphi 0, %s41
      %s58 = sphi 0, %s42
      %s62 = sphi 0, %s62
      %s64 = sphi 0, %s62
      %s65 = sphi 0, %s64
      %s79 = sphi 0, %s65
      %s83 = sphi 0, %s83
      %s85 = sphi 0, %s83
      %s86 = sphi 0, %s85
      %s100 = sphi 0, %s86
      %s104 = sphi 0, %s104
      %s106 = sphi 0, %s104
      %s107 = sphi 0, %s106
      %s121 = sphi 0, %s107
      %s125 = sphi 0, %s125
      %s127 = sphi 0, %s125
      %s128 = sphi 0, %s127
      %s142 = sphi 0, %s128
      %s146 = sphi 0, %s146
      %s148 = sphi 0, %s146
      %s149 = sphi 0, %s148
      %s163 = sphi 0, %s149
      %s167 = sphi 0, %s167
      %s169 = sphi 0, %s167
      %s170 = sphi 0, %s169
      %s184 = sphi 0, %s170
      %s188 = sphi 0, %s188
      %s190 = sphi 0, %s188
      %s191 = sphi 0, %s190
      %s205 = sphi 0, %s191
      %s209 = sphi 0, %s209
      %s211 = sphi 0, %s209
      %s212 = sphi 0, %s211
      %s226 = sphi 0, %s212
      %s230 = sphi 0, %s230
      %s232 = sphi 0, %s230
      %s233 = sphi 0, %s232
      %s247 = sphi 0, %s233
      %s251 = sphi 0, %s251
      %s253 = sphi 0, %s251
      %s254 = sphi 0, %s253
      %s268 = sphi 0, %s254
      %s272 = sphi 0, %s272
      %s274 = sphi 0, %s272
      %s275 = sphi 0, %s274
      %s289 = sphi 0, %s275
      %s293 = sphi 0, %s293
      %s295 = sphi 0, %s293
      %s296 = sphi 0, %s295
      %s310 = sphi 0, %s296
      %s314 = sphi 0, %s314
      %s316 = sphi 0, %s314
      %s317 = sphi 0, %s316
      %s331 = sphi 0, %s317
      %s335 = sphi 0, %s335
      %s337 = sphi 0, %s335
      %s338 = sphi 0, %s337
      %s352 = sphi 0, %s338
      %s356 = sphi 0, %s356
      %s358 = sphi 0, %s356
      %s359 = sphi 0, %s358
      %s373 = sphi 0, %s359
      %s377 = sphi 0, %s377
      %s379 = sphi 0, %s377
      %s380 = sphi 0, %s379
      %s394 = sphi 0, %s380
      %s398 = sphi 0, %s398
      %s400 = sphi 0, %s398
      %s401 = sphi 0, %s400
      %s415 = sphi 0, %s401
      %s419 = sphi 0, %s419
      %s421 = sphi 0, %s419
      %s422 = sphi 0, %s421
      %s436 = sphi 0, %s422
      %s442 = sphi 0, %s444
      %s445 = sphi 0, %s442
      %s446 = sphi 0, %s445
      %s462 = sphi 0, %s446
    $region4: #{vit_forward.1} parent=1 // loop_header_branch
      %31 = sbr.rel (%p29) target = $region8
    $region5: #{vit_forward.1} parent=1 // loop_body
      %s33 = ssub.s32 %s28, 1
      %s34 = ssub.s32 %s28, 2
      %s35 = sadd.s32 %s28, 1
      %s36 = ssub.s32 %s28, %s35
      %p37 = scmp.eq.s32.totalorder %s36, 0
      %s39 = sadd.s32 %s38, 1
      %s40 = scalar_select %p37, %s38, %s39
      %p43 = pneg %p37
      %p44 = scmp.eq.s32.totalorder %s28, 1
      %p45 = por %p43, %p44
      %p46 = scmp.ne.s32.totalorder %s38, %s41
      %p47 = scmp.eq.s32.totalorder %s28, 0
      %p48 = por %p46, %p47
      %p49 = scmp.ne.s32.totalorder %s38, %s41
      %p50 = scmp.eq.s32.totalorder %s33, 1
      %p51 = por %p49, %p50
      %p52 = scmp.ne.s32.totalorder %s41, %s42
      %p53 = scmp.eq.s32.totalorder %s33, 0
      %p54 = por %p52, %p53
      %p55 = scmp.ne.s32.totalorder %s41, %s42
      %p56 = scmp.eq.s32.totalorder %s34, 1
      %p57 = por %p55, %p56
      %p59 = scmp.ne.s32.totalorder %s42, %s58
      %p60 = scmp.eq.s32.totalorder %s34, 0
      %p61 = por %p59, %p60
      %s63 = sadd.s32 %s62, 1
      %p66 = scmp.eq.s32.totalorder %s28, 1
      %p67 = scmp.ne.s32.totalorder %s62, %s64
      %p68 = scmp.eq.s32.totalorder %s28, 0
      %p69 = por %p67, %p68
      %p70 = scmp.ne.s32.totalorder %s62, %s64
      %p71 = scmp.eq.s32.totalorder %s33, 1
      %p72 = por %p70, %p71
      %p73 = scmp.ne.s32.totalorder %s64, %s65
      %p74 = scmp.eq.s32.totalorder %s33, 0
      %p75 = por %p73, %p74
      %p76 = scmp.ne.s32.totalorder %s64, %s65
      %p77 = scmp.eq.s32.totalorder %s34, 1
      %p78 = por %p76, %p77
      %p80 = scmp.ne.s32.totalorder %s65, %s79
      %p81 = scmp.eq.s32.totalorder %s34, 0
      %p82 = por %p80, %p81
      %s84 = sadd.s32 %s83, 1
      %p87 = scmp.eq.s32.totalorder %s28, 1
      %p88 = scmp.ne.s32.totalorder %s83, %s85
      %p89 = scmp.eq.s32.totalorder %s28, 0
      %p90 = por %p88, %p89
      %p91 = scmp.ne.s32.totalorder %s83, %s85
      %p92 = scmp.eq.s32.totalorder %s33, 1
      %p93 = por %p91, %p92
      %p94 = scmp.ne.s32.totalorder %s85, %s86
      %p95 = scmp.eq.s32.totalorder %s33, 0
      %p96 = por %p94, %p95
      %p97 = scmp.ne.s32.totalorder %s85, %s86
      %p98 = scmp.eq.s32.totalorder %s34, 1
      %p99 = por %p97, %p98
      %p101 = scmp.ne.s32.totalorder %s86, %s100
      %p102 = scmp.eq.s32.totalorder %s34, 0
      %p103 = por %p101, %p102
      %s105 = sadd.s32 %s104, 1
      %p108 = scmp.eq.s32.totalorder %s28, 1
      %p109 = scmp.ne.s32.totalorder %s104, %s106
      %p110 = scmp.eq.s32.totalorder %s28, 0
      %p111 = por %p109, %p110
      %p112 = scmp.ne.s32.totalorder %s104, %s106
      %p113 = scmp.eq.s32.totalorder %s33, 1
      %p114 = por %p112, %p113
      %p115 = scmp.ne.s32.totalorder %s106, %s107
      %p116 = scmp.eq.s32.totalorder %s33, 0
      %p117 = por %p115, %p116
      %p118 = scmp.ne.s32.totalorder %s106, %s107
      %p119 = scmp.eq.s32.totalorder %s34, 1
      %p120 = por %p118, %p119
      %p122 = scmp.ne.s32.totalorder %s107, %s121
      %p123 = scmp.eq.s32.totalorder %s34, 0
      %p124 = por %p122, %p123
      %s126 = sadd.s32 %s125, 1
      %p129 = scmp.eq.s32.totalorder %s28, 1
      %p130 = scmp.ne.s32.totalorder %s125, %s127
      %p131 = scmp.eq.s32.totalorder %s28, 0
      %p132 = por %p130, %p131
      %p133 = scmp.ne.s32.totalorder %s125, %s127
      %p134 = scmp.eq.s32.totalorder %s33, 1
      %p135 = por %p133, %p134
      %p136 = scmp.ne.s32.totalorder %s127, %s128
      %p137 = scmp.eq.s32.totalorder %s33, 0
      %p138 = por %p136, %p137
      %p139 = scmp.ne.s32.totalorder %s127, %s128
      %p140 = scmp.eq.s32.totalorder %s34, 1
      %p141 = por %p139, %p140
      %p143 = scmp.ne.s32.totalorder %s128, %s142
      %p144 = scmp.eq.s32.totalorder %s34, 0
      %p145 = por %p143, %p144
      %s147 = sadd.s32 %s146, 1
      %p150 = scmp.eq.s32.totalorder %s28, 1
      %p151 = scmp.ne.s32.totalorder %s146, %s148
      %p152 = scmp.eq.s32.totalorder %s28, 0
      %p153 = por %p151, %p152
      %p154 = scmp.ne.s32.totalorder %s146, %s148
      %p155 = scmp.eq.s32.totalorder %s33, 1
      %p156 = por %p154, %p155
      %p157 = scmp.ne.s32.totalorder %s148, %s149
      %p158 = scmp.eq.s32.totalorder %s33, 0
      %p159 = por %p157, %p158
      %p160 = scmp.ne.s32.totalorder %s148, %s149
      %p161 = scmp.eq.s32.totalorder %s34, 1
      %p162 = por %p160, %p161
      %p164 = scmp.ne.s32.totalorder %s149, %s163
      %p165 = scmp.eq.s32.totalorder %s34, 0
      %p166 = por %p164, %p165
      %s168 = sadd.s32 %s167, 1
      %p171 = scmp.eq.s32.totalorder %s28, 1
      %p172 = scmp.ne.s32.totalorder %s167, %s169
      %p173 = scmp.eq.s32.totalorder %s28, 0
      %p174 = por %p172, %p173
      %p175 = scmp.ne.s32.totalorder %s167, %s169
      %p176 = scmp.eq.s32.totalorder %s33, 1
      %p177 = por %p175, %p176
      %p178 = scmp.ne.s32.totalorder %s169, %s170
      %p179 = scmp.eq.s32.totalorder %s33, 0
      %p180 = por %p178, %p179
      %p181 = scmp.ne.s32.totalorder %s169, %s170
      %p182 = scmp.eq.s32.totalorder %s34, 1
      %p183 = por %p181, %p182
      %p185 = scmp.ne.s32.totalorder %s170, %s184
      %p186 = scmp.eq.s32.totalorder %s34, 0
      %p187 = por %p185, %p186
      %s189 = sadd.s32 %s188, 1
      %p192 = scmp.eq.s32.totalorder %s28, 1
      %p193 = scmp.ne.s32.totalorder %s188, %s190
      %p194 = scmp.eq.s32.totalorder %s28, 0
      %p195 = por %p193, %p194
      %p196 = scmp.ne.s32.totalorder %s188, %s190
      %p197 = scmp.eq.s32.totalorder %s33, 1
      %p198 = por %p196, %p197
      %p199 = scmp.ne.s32.totalorder %s190, %s191
      %p200 = scmp.eq.s32.totalorder %s33, 0
      %p201 = por %p199, %p200
      %p202 = scmp.ne.s32.totalorder %s190, %s191
      %p203 = scmp.eq.s32.totalorder %s34, 1
      %p204 = por %p202, %p203
      %p206 = scmp.ne.s32.totalorder %s191, %s205
      %p207 = scmp.eq.s32.totalorder %s34, 0
      %p208 = por %p206, %p207
      %s210 = sadd.s32 %s209, 1
      %p213 = scmp.eq.s32.totalorder %s28, 1
      %p214 = scmp.ne.s32.totalorder %s209, %s211
      %p215 = scmp.eq.s32.totalorder %s28, 0
      %p216 = por %p214, %p215
      %p217 = scmp.ne.s32.totalorder %s209, %s211
      %p218 = scmp.eq.s32.totalorder %s33, 1
      %p219 = por %p217, %p218
      %p220 = scmp.ne.s32.totalorder %s211, %s212
      %p221 = scmp.eq.s32.totalorder %s33, 0
      %p222 = por %p220, %p221
      %p223 = scmp.ne.s32.totalorder %s211, %s212
      %p224 = scmp.eq.s32.totalorder %s34, 1
      %p225 = por %p223, %p224
      %p227 = scmp.ne.s32.totalorder %s212, %s226
      %p228 = scmp.eq.s32.totalorder %s34, 0
      %p229 = por %p227, %p228
      %s231 = sadd.s32 %s230, 1
      %p234 = scmp.eq.s32.totalorder %s28, 1
      %p235 = scmp.ne.s32.totalorder %s230, %s232
      %p236 = scmp.eq.s32.totalorder %s28, 0
      %p237 = por %p235, %p236
      %p238 = scmp.ne.s32.totalorder %s230, %s232
      %p239 = scmp.eq.s32.totalorder %s33, 1
      %p240 = por %p238, %p239
      %p241 = scmp.ne.s32.totalorder %s232, %s233
      %p242 = scmp.eq.s32.totalorder %s33, 0
      %p243 = por %p241, %p242
      %p244 = scmp.ne.s32.totalorder %s232, %s233
      %p245 = scmp.eq.s32.totalorder %s34, 1
      %p246 = por %p244, %p245
      %p248 = scmp.ne.s32.totalorder %s233, %s247
      %p249 = scmp.eq.s32.totalorder %s34, 0
      %p250 = por %p248, %p249
      %s252 = sadd.s32 %s251, 1
      %p255 = scmp.eq.s32.totalorder %s28, 1
      %p256 = scmp.ne.s32.totalorder %s251, %s253
      %p257 = scmp.eq.s32.totalorder %s28, 0
      %p258 = por %p256, %p257
      %p259 = scmp.ne.s32.totalorder %s251, %s253
      %p260 = scmp.eq.s32.totalorder %s33, 1
      %p261 = por %p259, %p260
      %p262 = scmp.ne.s32.totalorder %s253, %s254
      %p263 = scmp.eq.s32.totalorder %s33, 0
      %p264 = por %p262, %p263
      %p265 = scmp.ne.s32.totalorder %s253, %s254
      %p266 = scmp.eq.s32.totalorder %s34, 1
      %p267 = por %p265, %p266
      %p269 = scmp.ne.s32.totalorder %s254, %s268
      %p270 = scmp.eq.s32.totalorder %s34, 0
      %p271 = por %p269, %p270
      %s273 = sadd.s32 %s272, 1
      %p276 = scmp.eq.s32.totalorder %s28, 1
      %p277 = scmp.ne.s32.totalorder %s272, %s274
      %p278 = scmp.eq.s32.totalorder %s28, 0
      %p279 = por %p277, %p278
      %p280 = scmp.ne.s32.totalorder %s272, %s274
      %p281 = scmp.eq.s32.totalorder %s33, 1
      %p282 = por %p280, %p281
      %p283 = scmp.ne.s32.totalorder %s274, %s275
      %p284 = scmp.eq.s32.totalorder %s33, 0
      %p285 = por %p283, %p284
      %p286 = scmp.ne.s32.totalorder %s274, %s275
      %p287 = scmp.eq.s32.totalorder %s34, 1
      %p288 = por %p286, %p287
      %p290 = scmp.ne.s32.totalorder %s275, %s289
      %p291 = scmp.eq.s32.totalorder %s34, 0
      %p292 = por %p290, %p291
      %s294 = sadd.s32 %s293, 1
      %p297 = scmp.eq.s32.totalorder %s28, 1
      %p298 = scmp.ne.s32.totalorder %s293, %s295
      %p299 = scmp.eq.s32.totalorder %s28, 0
      %p300 = por %p298, %p299
      %p301 = scmp.ne.s32.totalorder %s293, %s295
      %p302 = scmp.eq.s32.totalorder %s33, 1
      %p303 = por %p301, %p302
      %p304 = scmp.ne.s32.totalorder %s295, %s296
      %p305 = scmp.eq.s32.totalorder %s33, 0
      %p306 = por %p304, %p305
      %p307 = scmp.ne.s32.totalorder %s295, %s296
      %p308 = scmp.eq.s32.totalorder %s34, 1
      %p309 = por %p307, %p308
      %p311 = scmp.ne.s32.totalorder %s296, %s310
      %p312 = scmp.eq.s32.totalorder %s34, 0
      %p313 = por %p311, %p312
      %s315 = sadd.s32 %s314, 1
      %p318 = scmp.eq.s32.totalorder %s28, 1
      %p319 = scmp.ne.s32.totalorder %s314, %s316
      %p320 = scmp.eq.s32.totalorder %s28, 0
      %p321 = por %p319, %p320
      %p322 = scmp.ne.s32.totalorder %s314, %s316
      %p323 = scmp.eq.s32.totalorder %s33, 1
      %p324 = por %p322, %p323
      %p325 = scmp.ne.s32.totalorder %s316, %s317
      %p326 = scmp.eq.s32.totalorder %s33, 0
      %p327 = por %p325, %p326
      %p328 = scmp.ne.s32.totalorder %s316, %s317
      %p329 = scmp.eq.s32.totalorder %s34, 1
      %p330 = por %p328, %p329
      %p332 = scmp.ne.s32.totalorder %s317, %s331
      %p333 = scmp.eq.s32.totalorder %s34, 0
      %p334 = por %p332, %p333
      %s336 = sadd.s32 %s335, 1
      %p339 = scmp.eq.s32.totalorder %s28, 1
      %p340 = scmp.ne.s32.totalorder %s335, %s337
      %p341 = scmp.eq.s32.totalorder %s28, 0
      %p342 = por %p340, %p341
      %p343 = scmp.ne.s32.totalorder %s335, %s337
      %p344 = scmp.eq.s32.totalorder %s33, 1
      %p345 = por %p343, %p344
      %p346 = scmp.ne.s32.totalorder %s337, %s338
      %p347 = scmp.eq.s32.totalorder %s33, 0
      %p348 = por %p346, %p347
      %p349 = scmp.ne.s32.totalorder %s337, %s338
      %p350 = scmp.eq.s32.totalorder %s34, 1
      %p351 = por %p349, %p350
      %p353 = scmp.ne.s32.totalorder %s338, %s352
      %p354 = scmp.eq.s32.totalorder %s34, 0
      %p355 = por %p353, %p354
      %s357 = sadd.s32 %s356, 1
      %p360 = scmp.eq.s32.totalorder %s28, 1
      %p361 = scmp.ne.s32.totalorder %s356, %s358
      %p362 = scmp.eq.s32.totalorder %s28, 0
      %p363 = por %p361, %p362
      %p364 = scmp.ne.s32.totalorder %s356, %s358
      %p365 = scmp.eq.s32.totalorder %s33, 1
      %p366 = por %p364, %p365
      %p367 = scmp.ne.s32.totalorder %s358, %s359
      %p368 = scmp.eq.s32.totalorder %s33, 0
      %p369 = por %p367, %p368
      %p370 = scmp.ne.s32.totalorder %s358, %s359
      %p371 = scmp.eq.s32.totalorder %s34, 1
      %p372 = por %p370, %p371
      %p374 = scmp.ne.s32.totalorder %s359, %s373
      %p375 = scmp.eq.s32.totalorder %s34, 0
      %p376 = por %p374, %p375
      %s378 = sadd.s32 %s377, 1
      %p381 = scmp.eq.s32.totalorder %s28, 1
      %p382 = scmp.ne.s32.totalorder %s377, %s379
      %p383 = scmp.eq.s32.totalorder %s28, 0
      %p384 = por %p382, %p383
      %p385 = scmp.ne.s32.totalorder %s377, %s379
      %p386 = scmp.eq.s32.totalorder %s33, 1
      %p387 = por %p385, %p386
      %p388 = scmp.ne.s32.totalorder %s379, %s380
      %p389 = scmp.eq.s32.totalorder %s33, 0
      %p390 = por %p388, %p389
      %p391 = scmp.ne.s32.totalorder %s379, %s380
      %p392 = scmp.eq.s32.totalorder %s34, 1
      %p393 = por %p391, %p392
      %p395 = scmp.ne.s32.totalorder %s380, %s394
      %p396 = scmp.eq.s32.totalorder %s34, 0
      %p397 = por %p395, %p396
      %s399 = sadd.s32 %s398, 1
      %p402 = scmp.eq.s32.totalorder %s28, 1
      %p403 = scmp.ne.s32.totalorder %s398, %s400
      %p404 = scmp.eq.s32.totalorder %s28, 0
      %p405 = por %p403, %p404
      %p406 = scmp.ne.s32.totalorder %s398, %s400
      %p407 = scmp.eq.s32.totalorder %s33, 1
      %p408 = por %p406, %p407
      %p409 = scmp.ne.s32.totalorder %s400, %s401
      %p410 = scmp.eq.s32.totalorder %s33, 0
      %p411 = por %p409, %p410
      %p412 = scmp.ne.s32.totalorder %s400, %s401
      %p413 = scmp.eq.s32.totalorder %s34, 1
      %p414 = por %p412, %p413
      %p416 = scmp.ne.s32.totalorder %s401, %s415
      %p417 = scmp.eq.s32.totalorder %s34, 0
      %p418 = por %p416, %p417
      %s420 = sadd.s32 %s419, 1
      %p423 = scmp.eq.s32.totalorder %s28, 1
      %p424 = scmp.ne.s32.totalorder %s419, %s421
      %p425 = scmp.eq.s32.totalorder %s28, 0
      %p426 = por %p424, %p425
      %p427 = scmp.ne.s32.totalorder %s419, %s421
      %p428 = scmp.eq.s32.totalorder %s33, 1
      %p429 = por %p427, %p428
      %p430 = scmp.ne.s32.totalorder %s421, %s422
      %p431 = scmp.eq.s32.totalorder %s33, 0
      %p432 = por %p430, %p431
      %p433 = scmp.ne.s32.totalorder %s421, %s422
      %p434 = scmp.eq.s32.totalorder %s34, 1
      %p435 = por %p433, %p434
      %p437 = scmp.ne.s32.totalorder %s422, %s436
      %p438 = scmp.eq.s32.totalorder %s34, 0
      %p439 = por %p437, %p438
      %s440 = ssub.s32 %s28, %s35
      %p441 = scmp.eq.s32.totalorder %s440, 0
      %s443 = sadd.s32 %s442, 1
      %s444 = scalar_select %p441, %s442, %s443
      %p447 = pneg %p441
      %p448 = scmp.eq.s32.totalorder %s28, 1
      %p449 = por %p447, %p448
      %p450 = scmp.ne.s32.totalorder %s442, %s445
      %p451 = scmp.eq.s32.totalorder %s28, 0
      %p452 = por %p450, %p451
      %p453 = scmp.ne.s32.totalorder %s442, %s445
      %p454 = scmp.eq.s32.totalorder %s33, 1
      %p455 = por %p453, %p454
      %p456 = scmp.ne.s32.totalorder %s445, %s446
      %p457 = scmp.eq.s32.totalorder %s33, 0
      %p458 = por %p456, %p457
      %p459 = scmp.ne.s32.totalorder %s445, %s446
      %p460 = scmp.eq.s32.totalorder %s34, 1
      %p461 = por %p459, %p460
      %p463 = scmp.ne.s32.totalorder %s446, %s462
      %p464 = scmp.eq.s32.totalorder %s34, 0
      %p465 = por %p463, %p464
      %p466 = scmp.le.s32.totalorder 1, %s28
      %p467 = scmp.lt.s32.totalorder %s28, 3
      %p468 = pnand %p466, %p467
      %p469 = pneg %p468
      // Predicated region
      $region9: #{vit_forward.1} parent=5 // pred_check
        _
      $region10: #{vit_forward.1} parent=5 // pred_check_branch
        %471 = sbr.rel (%p468) target = $region12
      $region11: #{vit_forward.1} parent=5 // pred_region
        %s472 = ssub.s32 %s28, 1
        // Predicated region
        $region13: #{vit_forward.1} parent=11 // pred_check
          %p473 = pneg %p75
        $region14: #{vit_forward.1} parent=11 // pred_check_branch
          %475 = sbr.rel (%p473) target = $region16
        $region15: #{vit_forward.1} parent=11 // pred_region
          _
        $region16: #{vit_forward.1} parent=11 // pred_fallthru
          _
        // Predicated region
        $region17: #{vit_forward.1} parent=11 // pred_check
          %p476 = pneg %p96
        $region18: #{vit_forward.1} parent=11 // pred_check_branch
          %478 = sbr.rel (%p476) target = $region20
        $region19: #{vit_forward.1} parent=11 // pred_region
          _
        $region20: #{vit_forward.1} parent=11 // pred_fallthru
          _
        // Predicated region
        $region21: #{vit_forward.1} parent=11 // pred_check
          %p479 = pneg %p117
        $region22: #{vit_forward.1} parent=11 // pred_check_branch
          %481 = sbr.rel (%p479) target = $region24
        $region23: #{vit_forward.1} parent=11 // pred_region
          _
        $region24: #{vit_forward.1} parent=11 // pred_fallthru
          _
        // Predicated region
        $region25: #{vit_forward.1} parent=11 // pred_check
          %p482 = pneg %p138
        $region26: #{vit_forward.1} parent=11 // pred_check_branch
          %484 = sbr.rel (%p482) target = $region28
        $region27: #{vit_forward.1} parent=11 // pred_region
          _
        $region28: #{vit_forward.1} parent=11 // pred_fallthru
          _
        // Predicated region
        $region29: #{vit_forward.1} parent=11 // pred_check
          %p485 = pneg %p159
        $region30: #{vit_forward.1} parent=11 // pred_check_branch
          %487 = sbr.rel (%p485) target = $region32
        $region31: #{vit_forward.1} parent=11 // pred_region
          _
        $region32: #{vit_forward.1} parent=11 // pred_fallthru
          _
        // Predicated region
        $region33: #{vit_forward.1} parent=11 // pred_check
          %p488 = pneg %p180
        $region34: #{vit_forward.1} parent=11 // pred_check_branch
          %490 = sbr.rel (%p488) target = $region36
        $region35: #{vit_forward.1} parent=11 // pred_region
          _
        $region36: #{vit_forward.1} parent=11 // pred_fallthru
          _
        // Predicated region
        $region37: #{vit_forward.1} parent=11 // pred_check
          %p491 = pneg %p201
        $region38: #{vit_forward.1} parent=11 // pred_check_branch
          %493 = sbr.rel (%p491) target = $region40
        $region39: #{vit_forward.1} parent=11 // pred_region
          _
        $region40: #{vit_forward.1} parent=11 // pred_fallthru
          _
        // Predicated region
        $region41: #{vit_forward.1} parent=11 // pred_check
          %p494 = pneg %p222
        $region42: #{vit_forward.1} parent=11 // pred_check_branch
          %496 = sbr.rel (%p494) target = $region44
        $region43: #{vit_forward.1} parent=11 // pred_region
          _
        $region44: #{vit_forward.1} parent=11 // pred_fallthru
          _
        // Predicated region
        $region45: #{vit_forward.1} parent=11 // pred_check
          %p497 = pneg %p243
        $region46: #{vit_forward.1} parent=11 // pred_check_branch
          %499 = sbr.rel (%p497) target = $region48
        $region47: #{vit_forward.1} parent=11 // pred_region
          _
        $region48: #{vit_forward.1} parent=11 // pred_fallthru
          _
        // Predicated region
        $region49: #{vit_forward.1} parent=11 // pred_check
          %p500 = pneg %p264
        $region50: #{vit_forward.1} parent=11 // pred_check_branch
          %502 = sbr.rel (%p500) target = $region52
        $region51: #{vit_forward.1} parent=11 // pred_region
          _
        $region52: #{vit_forward.1} parent=11 // pred_fallthru
          _
        // Predicated region
        $region53: #{vit_forward.1} parent=11 // pred_check
          %p503 = pneg %p285
        $region54: #{vit_forward.1} parent=11 // pred_check_branch
          %505 = sbr.rel (%p503) target = $region56
        $region55: #{vit_forward.1} parent=11 // pred_region
          _
        $region56: #{vit_forward.1} parent=11 // pred_fallthru
          _
        // Predicated region
        $region57: #{vit_forward.1} parent=11 // pred_check
          %p506 = pneg %p306
        $region58: #{vit_forward.1} parent=11 // pred_check_branch
          %508 = sbr.rel (%p506) target = $region60
        $region59: #{vit_forward.1} parent=11 // pred_region
          _
        $region60: #{vit_forward.1} parent=11 // pred_fallthru
          _
        // Predicated region
        $region61: #{vit_forward.1} parent=11 // pred_check
          %p509 = pneg %p327
        $region62: #{vit_forward.1} parent=11 // pred_check_branch
          %511 = sbr.rel (%p509) target = $region64
        $region63: #{vit_forward.1} parent=11 // pred_region
          _
        $region64: #{vit_forward.1} parent=11 // pred_fallthru
          _
        // Predicated region
        $region65: #{vit_forward.1} parent=11 // pred_check
          %p512 = pneg %p348
        $region66: #{vit_forward.1} parent=11 // pred_check_branch
          %514 = sbr.rel (%p512) target = $region68
        $region67: #{vit_forward.1} parent=11 // pred_region
          _
        $region68: #{vit_forward.1} parent=11 // pred_fallthru
          _
        // Predicated region
        $region69: #{vit_forward.1} parent=11 // pred_check
          %p515 = pneg %p369
        $region70: #{vit_forward.1} parent=11 // pred_check_branch
          %517 = sbr.rel (%p515) target = $region72
        $region71: #{vit_forward.1} parent=11 // pred_region
          _
        $region72: #{vit_forward.1} parent=11 // pred_fallthru
          _
        // Predicated region
        $region73: #{vit_forward.1} parent=11 // pred_check
          %p518 = pneg %p390
        $region74: #{vit_forward.1} parent=11 // pred_check_branch
          %520 = sbr.rel (%p518) target = $region76
        $region75: #{vit_forward.1} parent=11 // pred_region
          _
        $region76: #{vit_forward.1} parent=11 // pred_fallthru
          _
        // Predicated region
        $region77: #{vit_forward.1} parent=11 // pred_check
          %p521 = pneg %p411
        $region78: #{vit_forward.1} parent=11 // pred_check_branch
          %523 = sbr.rel (%p521) target = $region80
        $region79: #{vit_forward.1} parent=11 // pred_region
          _
        $region80: #{vit_forward.1} parent=11 // pred_fallthru
          _
        // Predicated region
        $region81: #{vit_forward.1} parent=11 // pred_check
          %p524 = pneg %p432
        $region82: #{vit_forward.1} parent=11 // pred_check_branch
          %526 = sbr.rel (%p524) target = $region84
        $region83: #{vit_forward.1} parent=11 // pred_region
          _
        $region84: #{vit_forward.1} parent=11 // pred_fallthru
          _
      $region12: #{vit_forward.1} parent=5 // pred_fallthru
        _
      %p527 = scmp.lt.s32.totalorder %s28, 2
      // Predicated region
      $region85: #{vit_forward.1} parent=5 // pred_check
        %p528 = pneg %p527
      $region86: #{vit_forward.1} parent=5 // pred_check_branch
        %530 = sbr.rel (%p528) target = $region88
      $region87: #{vit_forward.1} parent=5 // pred_region
        // Predicated region
        $region89: #{vit_forward.1} parent=87 // pred_check
          %p531 = pneg %p48
        $region90: #{vit_forward.1} parent=87 // pred_check_branch
          %533 = sbr.rel (%p531) target = $region92
        $region91: #{vit_forward.1} parent=87 // pred_region
          %p534 = scmp.lt.s32.totalorder %s28, 1
          %s535 = scalar_select %p534, %s28, 1
          %s536 = smul.addr %s535, 6
          %s537 = smul.addr %s536, 4
          %s538 = scalar_lea.vmem %s0, %s537
        $region92: #{vit_forward.1} parent=87 // pred_fallthru
          _
      $region88: #{vit_forward.1} parent=5 // pred_fallthru
        _
      %p539 = scmp.le.s32.totalorder 1, %s28
      %p540 = scmp.lt.s32.totalorder %s28, 3
      %p541 = pnand %p539, %p540
      %p542 = pneg %p541
      // Predicated region
      $region93: #{vit_forward.1} parent=5 // pred_check
        _
      $region94: #{vit_forward.1} parent=5 // pred_check_branch
        %544 = sbr.rel (%p541) target = $region96
      $region95: #{vit_forward.1} parent=5 // pred_region
        %s545 = ssub.s32 %s28, 1
        %p546 = scmp.lt.s32.totalorder %s33, 1
        %s547 = scalar_select %p546, %s33, 1
        %s548 = smul.addr %s547, 6
        %s549 = smul.addr %s548, 4
        %s550 = scalar_lea.vmem %s0, %s549
        %p551 = pneg %p54
        %p552 = pneg %p51
        %p553 = pneg %p75
        %p554 = pneg %p72
        %p555 = pneg %p96
        %p556 = pneg %p93
        %p557 = pneg %p117
        %p558 = pneg %p114
        %p559 = pneg %p138
        %p560 = pneg %p135
        %p561 = pneg %p159
        %p562 = pneg %p156
        %p563 = pneg %p180
        %p564 = pneg %p177
        %p565 = pneg %p201
        %p566 = pneg %p198
        %p567 = pneg %p222
        %p568 = pneg %p219
        %p569 = pneg %p243
        %p570 = pneg %p240
        %p571 = pneg %p264
        %p572 = pneg %p261
        %p573 = pneg %p285
        %p574 = pneg %p282
        %p575 = pneg %p306
        %p576 = pneg %p303
        %p577 = pneg %p327
        %p578 = pneg %p324
        %p579 = pneg %p348
        %p580 = pneg %p345
        %p581 = pneg %p369
        %p582 = pneg %p366
        %p583 = pneg %p390
        %p584 = pneg %p387
        %p585 = pneg %p411
        %p586 = pneg %p408
        %p587 = pneg %p432
        %p588 = pneg %p429
        %p589 = pneg %p458
        %p590 = pneg %p455
        %s591 = sand.u32 %s445, 1
        %s592 = scalar_lea.sflag [#allocation3], %s591
        %s593 = sand.u32 %s445, 1
        %s594 = scalar_lea.vmem [#allocation2], %s593
        %p595 = scmp.lt.s32.totalorder %s33, 1
        %s596 = scalar_select %p595, %s33, 1
        %s597 = smul.addr %s596, 6
        %s598 = smul.addr %s597, 4
        %s599 = scalar_lea.vmem %s0, %s598
        %v601 = vld [vmem:[%s599] sm:$0x77]
        %v602 = vld [vmem:[%s599 + $0x8] sm:$0x77]
        %v603 = vld [vmem:[%s599 + $0x10] sm:$0x77]
        %v604 = vld [vmem:[%s1] sm:$0xf]
        %v605 = vld [vmem:[%s1 + $0x4] sm:$0xf]
        %v606 = vld [vmem:[%s1 + $0x8] sm:$0xf]
        %v607 = vld [vmem:[%s1 + $0xc] sm:$0xf]
        %v608 = vld [vmem:[%s1 + $0x10] sm:$0xf]
        %v609 = vld [vmem:[%s1 + $0x14] sm:$0xf]
        %v610 = vld [vmem:[%s1 + $0x18] sm:$0xf]
        %v611 = vld [vmem:[%s1 + $0x1c] sm:$0xf]
        %v612 = vld [vmem:[%s1 + $0x20] sm:$0xf]
        %v613 = vld [vmem:[%s1 + $0x24] sm:$0xf]
        %v614 = vld [vmem:[%s1 + $0x28] sm:$0xf]
        %v615 = vld [vmem:[%s1 + $0x2c] sm:$0xf]
        %v616 = vld [vmem:[%s1 + $0x30] sm:$0xf]
        %v617 = vld [vmem:[%s1 + $0x34] sm:$0xf]
        %v618 = vld [vmem:[%s1 + $0x38] sm:$0xf]
        %v619 = vld [vmem:[%s1 + $0x3c] sm:$0xf]
        %v620 = vld [vmem:[%s1 + $0x40] sm:$0xf]
        %v621 = vld [vmem:[%s1 + $0x44] sm:$0xf]
        %v622 = vld [vmem:[%s1 + $0x48] sm:$0xf]
        %v623 = vld [vmem:[%s1 + $0x4c] sm:$0xf]
        %v624 = vld [vmem:[%s1 + $0x50] sm:$0xf]
        %v625 = vld [vmem:[%s1 + $0x54] sm:$0xf]
        %v626 = vld [vmem:[%s1 + $0x58] sm:$0xf]
        %v627 = vld [vmem:[%s1 + $0x5c] sm:$0xf]
        %v628 = vld [vmem:[%s1 + $0x60] sm:$0xf]
        %v629 = vld [vmem:[%s1 + $0x64] sm:$0xf]
        %v630 = vld [vmem:[%s1 + $0x68] sm:$0xf]
        %v631 = vld [vmem:[%s1 + $0x6c] sm:$0xf]
        %v632 = vld [vmem:[%s1 + $0x70] sm:$0xf]
        %v633 = vld [vmem:[%s1 + $0x74] sm:$0xf]
        %v634 = vld [vmem:[%s1 + $0x78] sm:$0xf]
        %v635 = vld [vmem:[%s1 + $0x7c] sm:$0xf]
        %v636 = vld [vmem:[%s1 + $0x80] sm:$0xf]
        %v637 = vld [vmem:[%s1 + $0x84] sm:$0xf]
        %v638 = vld [vmem:[%s1 + $0x88] sm:$0xf]
        %v639 = vld [vmem:[%s1 + $0x8c] sm:$0xf]
        %v640 = vld [vmem:[%s1 + $0x90] sm:$0xf]
        %v641 = vld [vmem:[%s1 + $0x94] sm:$0xf]
        %v642 = vld [vmem:[%s1 + $0x98] sm:$0xf]
        %v643 = vld [vmem:[%s1 + $0x9c] sm:$0xf]
        %v644 = vld [vmem:[%s1 + $0xa0] sm:$0xf]
        %v645 = vld [vmem:[%s1 + $0xa4] sm:$0xf]
        %v646 = vld [vmem:[%s1 + $0xa8] sm:$0xf]
        %v647 = vld [vmem:[%s1 + $0xac] sm:$0xf]
        %v648 = vld [vmem:[%s1 + $0xb0] sm:$0xf]
        %v649 = vld [vmem:[%s1 + $0xb4] sm:$0xf]
        %v650 = vld [vmem:[%s1 + $0xb8] sm:$0xf]
        %v651 = vld [vmem:[%s1 + $0xbc] sm:$0xf]
        %v652 = vld [vmem:[%s1 + $0xc0] sm:$0xf]
        %v653 = vld [vmem:[%s1 + $0xc4] sm:$0xf]
        %v654 = vld [vmem:[%s1 + $0xc8] sm:$0xf]
        %v655 = vld [vmem:[%s1 + $0xcc] sm:$0xf]
        %v656 = vld [vmem:[%s1 + $0xd0] sm:$0xf]
        %v657 = vld [vmem:[%s1 + $0xd4] sm:$0xf]
        %v658 = vld [vmem:[%s1 + $0xd8] sm:$0xf]
        %v659 = vld [vmem:[%s1 + $0xdc] sm:$0xf]
        %v660 = vld [vmem:[%s1 + $0xe0] sm:$0xf]
        %v661 = vld [vmem:[%s1 + $0xe4] sm:$0xf]
        %v662 = vld [vmem:[%s1 + $0xe8] sm:$0xf]
        %v663 = vld [vmem:[%s1 + $0xec] sm:$0xf]
        %v664 = vld [vmem:[%s1 + $0xf0] sm:$0xf]
        %v665 = vld [vmem:[%s1 + $0xf4] sm:$0xf]
        %v666 = vld [vmem:[%s1 + $0xf8] sm:$0xf]
        %v667 = vld [vmem:[%s1 + $0xfc] sm:$0xf]
        %v668 = vld [vmem:[%s1 + $0x100] sm:$0xf]
        %v669 = vld [vmem:[%s1 + $0x104] sm:$0xf]
        %v670 = vld [vmem:[%s1 + $0x108] sm:$0xf]
        %v671 = vld [vmem:[%s1 + $0x10c] sm:$0xf]
        %v672 = vld [vmem:[%s1 + $0x110] sm:$0xf]
        %v673 = vld [vmem:[%s1 + $0x114] sm:$0xf]
        %v674 = vld [vmem:[%s1 + $0x118] sm:$0xf]
        %v675 = vld [vmem:[%s1 + $0x11c] sm:$0xf]
        %v676 = vld [vmem:[%s1 + $0x120] sm:$0xf]
        %v677 = vld [vmem:[%s1 + $0x124] sm:$0xf]
        %v678 = vld [vmem:[%s1 + $0x128] sm:$0xf]
        %v679 = vld [vmem:[%s1 + $0x12c] sm:$0xf]
        %v680 = vld [vmem:[%s1 + $0x130] sm:$0xf]
        %v681 = vld [vmem:[%s1 + $0x134] sm:$0xf]
        %v682 = vld [vmem:[%s1 + $0x138] sm:$0xf]
        %v683 = vld [vmem:[%s1 + $0x13c] sm:$0xf]
        %v684 = vld [vmem:[%s1 + $0x140] sm:$0xf]
        %v685 = vld [vmem:[%s1 + $0x144] sm:$0xf]
        %v686 = vld [vmem:[%s1 + $0x148] sm:$0xf]
        %v687 = vld [vmem:[%s1 + $0x14c] sm:$0xf]
        %v688 = vld [vmem:[%s1 + $0x150] sm:$0xf]
        %v689 = vld [vmem:[%s1 + $0x154] sm:$0xf]
        %v690 = vld [vmem:[%s1 + $0x158] sm:$0xf]
        %v691 = vld [vmem:[%s1 + $0x15c] sm:$0xf]
        %v692 = vld [vmem:[%s1 + $0x160] sm:$0xf]
        %v693 = vld [vmem:[%s1 + $0x164] sm:$0xf]
        %v694 = vld [vmem:[%s1 + $0x168] sm:$0xf]
        %v695 = vld [vmem:[%s1 + $0x16c] sm:$0xf]
        %v696 = vld [vmem:[%s1 + $0x170] sm:$0xf]
        %v697 = vld [vmem:[%s1 + $0x174] sm:$0xf]
        %v698 = vld [vmem:[%s1 + $0x178] sm:$0xf]
        %v699 = vld [vmem:[%s1 + $0x17c] sm:$0xf]
        %v700 = vld [vmem:[%s2] sm:$0x1f]
        %v704 = vunpack.c.l.b16 %v601
        %v705 = vunpack.c.h.b16 %v601
        %v706 = vunpack.c.l.b16 %v602
        %v707 = vunpack.c.h.b16 %v602
        %v708 = vunpack.c.l.b16 %v603
        %v709 = vunpack.c.h.b16 %v603
        %v710 = vpack.c.b16 %v704, %v704
        %v711 = vpack.c.b16 %v705, %v705
        %v712 = vpack.c.b16 %v706, %v706
        %v713 = vpack.c.b16 %v707, %v707
        %v714 = vpack.c.b16 %v708, %v708
        %v715 = vpack.c.b16 %v709, %v709
        %v818 = vunpack.c.l.b16 %v604
        %v819 = vunpack.c.l.b16 %v605
        %v820 = vunpack.c.l.b16 %v606
        %v821 = vunpack.c.l.b16 %v607
        %v822 = vunpack.c.l.b16 %v608
        %v823 = vunpack.c.l.b16 %v609
        %v824 = vunpack.c.l.b16 %v610
        %v825 = vunpack.c.l.b16 %v611
        %v826 = vunpack.c.l.b16 %v612
        %v827 = vunpack.c.l.b16 %v613
        %v828 = vunpack.c.l.b16 %v614
        %v829 = vunpack.c.l.b16 %v615
        %v830 = vunpack.c.l.b16 %v616
        %v831 = vunpack.c.l.b16 %v617
        %v832 = vunpack.c.l.b16 %v618
        %v833 = vunpack.c.l.b16 %v619
        %v834 = vunpack.c.l.b16 %v620
        %v835 = vunpack.c.l.b16 %v621
        %v836 = vunpack.c.l.b16 %v622
        %v837 = vunpack.c.l.b16 %v623
        %v838 = vunpack.c.l.b16 %v624
        %v839 = vunpack.c.l.b16 %v625
        %v840 = vunpack.c.l.b16 %v626
        %v841 = vunpack.c.l.b16 %v627
        %v842 = vunpack.c.l.b16 %v628
        %v843 = vunpack.c.l.b16 %v629
        %v844 = vunpack.c.l.b16 %v630
        %v845 = vunpack.c.l.b16 %v631
        %v846 = vunpack.c.l.b16 %v632
        %v847 = vunpack.c.l.b16 %v633
        %v848 = vunpack.c.l.b16 %v634
        %v849 = vunpack.c.l.b16 %v635
        %v850 = vunpack.c.l.b16 %v636
        %v851 = vunpack.c.l.b16 %v637
        %v852 = vunpack.c.l.b16 %v638
        %v853 = vunpack.c.l.b16 %v639
        %v854 = vunpack.c.l.b16 %v640
        %v855 = vunpack.c.l.b16 %v641
        %v856 = vunpack.c.l.b16 %v642
        %v857 = vunpack.c.l.b16 %v643
        %v858 = vunpack.c.l.b16 %v644
        %v859 = vunpack.c.l.b16 %v645
        %v860 = vunpack.c.l.b16 %v646
        %v861 = vunpack.c.l.b16 %v647
        %v862 = vunpack.c.l.b16 %v648
        %v863 = vunpack.c.l.b16 %v649
        %v864 = vunpack.c.l.b16 %v650
        %v865 = vunpack.c.l.b16 %v651
        %v866 = vunpack.c.l.b16 %v652
        %v867 = vunpack.c.l.b16 %v653
        %v868 = vunpack.c.l.b16 %v654
        %v869 = vunpack.c.l.b16 %v655
        %v870 = vunpack.c.l.b16 %v656
        %v871 = vunpack.c.l.b16 %v657
        %v872 = vunpack.c.l.b16 %v658
        %v873 = vunpack.c.l.b16 %v659
        %v874 = vunpack.c.l.b16 %v660
        %v875 = vunpack.c.l.b16 %v661
        %v876 = vunpack.c.l.b16 %v662
        %v877 = vunpack.c.l.b16 %v663
        %v878 = vunpack.c.l.b16 %v664
        %v879 = vunpack.c.l.b16 %v665
        %v880 = vunpack.c.l.b16 %v666
        %v881 = vunpack.c.l.b16 %v667
        %v882 = vunpack.c.l.b16 %v668
        %v883 = vunpack.c.l.b16 %v669
        %v884 = vunpack.c.l.b16 %v670
        %v885 = vunpack.c.l.b16 %v671
        %v886 = vunpack.c.l.b16 %v672
        %v887 = vunpack.c.l.b16 %v673
        %v888 = vunpack.c.l.b16 %v674
        %v889 = vunpack.c.l.b16 %v675
        %v890 = vunpack.c.l.b16 %v676
        %v891 = vunpack.c.l.b16 %v677
        %v892 = vunpack.c.l.b16 %v678
        %v893 = vunpack.c.l.b16 %v679
        %v894 = vunpack.c.l.b16 %v680
        %v895 = vunpack.c.l.b16 %v681
        %v896 = vunpack.c.l.b16 %v682
        %v897 = vunpack.c.l.b16 %v683
        %v898 = vunpack.c.l.b16 %v684
        %v899 = vunpack.c.l.b16 %v685
        %v900 = vunpack.c.l.b16 %v686
        %v901 = vunpack.c.l.b16 %v687
        %v902 = vunpack.c.l.b16 %v688
        %v903 = vunpack.c.l.b16 %v689
        %v904 = vunpack.c.l.b16 %v690
        %v905 = vunpack.c.l.b16 %v691
        %v906 = vunpack.c.l.b16 %v692
        %v907 = vunpack.c.l.b16 %v693
        %v908 = vunpack.c.l.b16 %v694
        %v909 = vunpack.c.l.b16 %v695
        %v910 = vunpack.c.l.b16 %v696
        %v911 = vunpack.c.l.b16 %v697
        %v912 = vunpack.c.l.b16 %v698
        %v913 = vunpack.c.l.b16 %v699
        %v914 = vpack.c.b16 %v819, %v818
        %v915 = vpack.c.b16 %v821, %v820
        %v916 = vpack.c.b16 %v823, %v822
        %v917 = vpack.c.b16 %v825, %v824
        %v918 = vpack.c.b16 %v827, %v826
        %v919 = vpack.c.b16 %v829, %v828
        %v920 = vpack.c.b16 %v831, %v830
        %v921 = vpack.c.b16 %v833, %v832
        %v922 = vpack.c.b16 %v835, %v834
        %v923 = vpack.c.b16 %v837, %v836
        %v924 = vpack.c.b16 %v839, %v838
        %v925 = vpack.c.b16 %v841, %v840
        %v926 = vpack.c.b16 %v843, %v842
        %v927 = vpack.c.b16 %v845, %v844
        %v928 = vpack.c.b16 %v847, %v846
        %v929 = vpack.c.b16 %v849, %v848
        %v930 = vpack.c.b16 %v851, %v850
        %v931 = vpack.c.b16 %v853, %v852
        %v932 = vpack.c.b16 %v855, %v854
        %v933 = vpack.c.b16 %v857, %v856
        %v934 = vpack.c.b16 %v859, %v858
        %v935 = vpack.c.b16 %v861, %v860
        %v936 = vpack.c.b16 %v863, %v862
        %v937 = vpack.c.b16 %v865, %v864
        %v938 = vpack.c.b16 %v867, %v866
        %v939 = vpack.c.b16 %v869, %v868
        %v940 = vpack.c.b16 %v871, %v870
        %v941 = vpack.c.b16 %v873, %v872
        %v942 = vpack.c.b16 %v875, %v874
        %v943 = vpack.c.b16 %v877, %v876
        %v944 = vpack.c.b16 %v879, %v878
        %v945 = vpack.c.b16 %v881, %v880
        %v946 = vpack.c.b16 %v883, %v882
        %v947 = vpack.c.b16 %v885, %v884
        %v948 = vpack.c.b16 %v887, %v886
        %v949 = vpack.c.b16 %v889, %v888
        %v950 = vpack.c.b16 %v891, %v890
        %v951 = vpack.c.b16 %v893, %v892
        %v952 = vpack.c.b16 %v895, %v894
        %v953 = vpack.c.b16 %v897, %v896
        %v954 = vpack.c.b16 %v899, %v898
        %v955 = vpack.c.b16 %v901, %v900
        %v956 = vpack.c.b16 %v903, %v902
        %v957 = vpack.c.b16 %v905, %v904
        %v958 = vpack.c.b16 %v907, %v906
        %v959 = vpack.c.b16 %v909, %v908
        %v960 = vpack.c.b16 %v911, %v910
        %v961 = vpack.c.b16 %v913, %v912
        %1010 = vmatprep.subr.bf16.mxu0 0
        %1011 = vmatpush1.bf16.msra.mxu0 %v914
        %1012 = vmatprep.subr.bf16.mxu0 0
        %1013 = vmatpush1.bf16.msra.mxu0 %v915
        %1014 = vmatprep.subr.bf16.mxu0 0
        %1015 = vmatpush1.bf16.msra.mxu0 %v916
        %1016 = vmatprep.subr.bf16.mxu0 0
        %1017 = vmatpush1.bf16.msra.mxu0 %v917
        %1018 = vmatprep.subr.bf16.mxu0 0
        %1019 = vmatpush1.bf16.msra.mxu0 %v918
        %1020 = vmatprep.subr.bf16.mxu0 0
        %1021 = vmatpush1.bf16.msra.mxu0 %v919
        %1022 = vmatprep.subr.bf16.mxu0 0
        %1023 = vmatpush1.bf16.msra.mxu0 %v920
        %1024 = vmatprep.subr.bf16.mxu0 0
        %1025 = vmatpush1.bf16.msra.mxu0 %v921
        %1026 = vmatprep.subr.bf16.mxu0 0
        %1027 = vmatpush1.bf16.msra.mxu0 %v922
        %1028 = vmatprep.subr.bf16.mxu0 0
        %1029 = vmatpush1.bf16.msra.mxu0 %v923
        %1030 = vmatprep.subr.bf16.mxu0 0
        %1031 = vmatpush1.bf16.msra.mxu0 %v924
        %1032 = vmatprep.subr.bf16.mxu0 0
        %1033 = vmatpush1.bf16.msra.mxu0 %v925
        %1034 = vmatprep.subr.bf16.mxu0 0
        %1035 = vmatpush1.bf16.msra.mxu0 %v926
        %1036 = vmatprep.subr.bf16.mxu0 0
        %1037 = vmatpush1.bf16.msra.mxu0 %v927
        %1038 = vmatprep.subr.bf16.mxu0 0
        %1039 = vmatpush1.bf16.msra.mxu0 %v928
        %1040 = vmatprep.subr.bf16.mxu0 0
        %1041 = vmatpush1.bf16.msra.mxu0 %v929
        %1042 = vmatprep.mubr.bf16.mxu0 %v711
        %1043 = vmatmul.mubr.bf16.gmra.mrb[0].mxu0 %v710
        %v1044 = vpop.f32.mrb[0].mxu0
        %v1045 = vadd.f32 %v700, %v1044
        %v1046 = vpop.f32.mrb[0].mxu0
        %v1047 = vpop.f32.mrb[0].mxu0
        %v1048 = vpop.f32.mrb[0].mxu0
        %1049 = vdwg.mxu0
        %1050 = vmatprep.subr.bf16.mxu0 0
        %1051 = vmatpush1.bf16.msra.mxu0 %v930
        %1052 = vmatprep.subr.bf16.mxu0 0
        %1053 = vmatpush1.bf16.msra.mxu0 %v931
        %1054 = vmatprep.subr.bf16.mxu0 0
        %1055 = vmatpush1.bf16.msra.mxu0 %v932
        %1056 = vmatprep.subr.bf16.mxu0 0
        %1057 = vmatpush1.bf16.msra.mxu0 %v933
        %1058 = vmatprep.subr.bf16.mxu0 0
        %1059 = vmatpush1.bf16.msra.mxu0 %v934
        %1060 = vmatprep.subr.bf16.mxu0 0
        %1061 = vmatpush1.bf16.msra.mxu0 %v935
        %1062 = vmatprep.subr.bf16.mxu0 0
        %1063 = vmatpush1.bf16.msra.mxu0 %v936
        %1064 = vmatprep.subr.bf16.mxu0 0
        %1065 = vmatpush1.bf16.msra.mxu0 %v937
        %1066 = vmatprep.subr.bf16.mxu0 0
        %1067 = vmatpush1.bf16.msra.mxu0 %v938
        %1068 = vmatprep.subr.bf16.mxu0 0
        %1069 = vmatpush1.bf16.msra.mxu0 %v939
        %1070 = vmatprep.subr.bf16.mxu0 0
        %1071 = vmatpush1.bf16.msra.mxu0 %v940
        %1072 = vmatprep.subr.bf16.mxu0 0
        %1073 = vmatpush1.bf16.msra.mxu0 %v941
        %1074 = vmatprep.subr.bf16.mxu0 0
        %1075 = vmatpush1.bf16.msra.mxu0 %v942
        %1076 = vmatprep.subr.bf16.mxu0 0
        %1077 = vmatpush1.bf16.msra.mxu0 %v943
        %1078 = vmatprep.subr.bf16.mxu0 0
        %1079 = vmatpush1.bf16.msra.mxu0 %v944
        %1080 = vmatprep.subr.bf16.mxu0 0
        %1081 = vmatpush1.bf16.msra.mxu0 %v945
        %1082 = vmatprep.mubr.bf16.mxu0 %v713
        %1083 = vmatmul.mubr.bf16.gmra.mrb[0].mxu0 %v712
        %v1084 = vpop.f32.mrb[0].mxu0
        %v1085 = vadd.f32 %v1045, %v1084
        %v1086 = vpop.f32.mrb[0].mxu0
        %v1087 = vpop.f32.mrb[0].mxu0
        %v1088 = vpop.f32.mrb[0].mxu0
        %1089 = vdwg.mxu0
        %1090 = vmatprep.subr.bf16.mxu0 0
        %1091 = vmatpush1.bf16.msra.mxu0 %v946
        %1092 = vmatprep.subr.bf16.mxu0 0
        %1093 = vmatpush1.bf16.msra.mxu0 %v947
        %1094 = vmatprep.subr.bf16.mxu0 0
        %1095 = vmatpush1.bf16.msra.mxu0 %v948
        %1096 = vmatprep.subr.bf16.mxu0 0
        %1097 = vmatpush1.bf16.msra.mxu0 %v949
        %1098 = vmatprep.subr.bf16.mxu0 0
        %1099 = vmatpush1.bf16.msra.mxu0 %v950
        %1100 = vmatprep.subr.bf16.mxu0 0
        %1101 = vmatpush1.bf16.msra.mxu0 %v951
        %1102 = vmatprep.subr.bf16.mxu0 0
        %1103 = vmatpush1.bf16.msra.mxu0 %v952
        %1104 = vmatprep.subr.bf16.mxu0 0
        %1105 = vmatpush1.bf16.msra.mxu0 %v953
        %1106 = vmatprep.subr.bf16.mxu0 0
        %1107 = vmatpush1.bf16.msra.mxu0 %v954
        %1108 = vmatprep.subr.bf16.mxu0 0
        %1109 = vmatpush1.bf16.msra.mxu0 %v955
        %1110 = vmatprep.subr.bf16.mxu0 0
        %1111 = vmatpush1.bf16.msra.mxu0 %v956
        %1112 = vmatprep.subr.bf16.mxu0 0
        %1113 = vmatpush1.bf16.msra.mxu0 %v957
        %1114 = vmatprep.subr.bf16.mxu0 0
        %1115 = vmatpush1.bf16.msra.mxu0 %v958
        %1116 = vmatprep.subr.bf16.mxu0 0
        %1117 = vmatpush1.bf16.msra.mxu0 %v959
        %1118 = vmatprep.subr.bf16.mxu0 0
        %1119 = vmatpush1.bf16.msra.mxu0 %v960
        %1120 = vmatprep.subr.bf16.mxu0 0
        %1121 = vmatpush1.bf16.msra.mxu0 %v961
        %1122 = vmatprep.mubr.bf16.mxu0 %v715
        %1123 = vmatmul.mubr.bf16.gmra.mrb[0].mxu0 %v714
        %v1124 = vpop.f32.mrb[0].mxu0
        %v1125 = vadd.f32 %v1085, %v1124
        %v1126 = vpop.f32.mrb[0].mxu0
        %v1127 = vpop.f32.mrb[0].mxu0
        %v1128 = vpop.f32.mrb[0].mxu0
        %1129 = vdwg.mxu0
        %v1130 = vld [vmem:[%s3] sm:$0x1]
        %v1131 = vld [vmem:[%s4] sm:$0x1]
        %vm1132 = vcmask 520192
        %v1133 = vsel %vm1132, %v1125, 0.0
        %1134 = vadd.xlane.f32.xlu0 %v1133
        %v1135 = vpop.xlane.xlu0 %1134
        %v1136 = vrcp.pop 64.0
        %v1137 = vmul.f32 %v1135, %v1136
        %v1138 = vsub.f32 %v1125, %v1137
        %v1139 = vmul.f32 %v1138, %v1138
        %v1140 = vsel %vm1132, %v1139, 0.0
        %1141 = vadd.xlane.f32.xlu0 %v1140
        %v1142 = vpop.xlane.xlu0 %1141
        %v1143 = vmul.f32 %v1142, %v1136
        %v1144 = vadd.f32 %v1143, 1e-12
        %v1145 = vrsqrt.pop %v1144
        %v1146 = vmul.f32 %v1138, %v1145
        %v1148 = vlaneseq
        %v1149 = vshrl.u32 %v1148, 7
        %v1150 = vsub.s32 0, %v1149
        %v1151 = vrot.slane %v1130, %v1150
        %v1153 = vmul.f32 %v1146, %v1151
        %v1155 = vlaneseq
        %v1156 = vshrl.u32 %v1155, 7
        %v1157 = vsub.s32 0, %v1156
        %v1158 = vrot.slane %v1131, %v1157
        %v1160 = vadd.f32 %v1153, %v1158
        %v1161 = vpack.c.bf16 %v1160, %v1160
        %v1162 = vld [vmem:[%s5] sm:$0xff]
        %v1163 = vld [vmem:[%s5 + $0x8] sm:$0xff]
        %v1164 = vld [vmem:[%s5 + $0x10] sm:$0xff]
        %v1165 = vld [vmem:[%s5 + $0x18] sm:$0xff]
        %v1166 = vld [vmem:[%s5 + $0x20] sm:$0xff]
        %v1167 = vld [vmem:[%s5 + $0x28] sm:$0xff]
        %v1168 = vld [vmem:[%s5 + $0x30] sm:$0xff]
        %v1169 = vld [vmem:[%s5 + $0x38] sm:$0xff]
        %v1170 = vld [vmem:[%s5 + $0x40] sm:$0xff]
        %v1171 = vld [vmem:[%s5 + $0x48] sm:$0xff]
        %v1172 = vld [vmem:[%s5 + $0x50] sm:$0xff]
        %v1173 = vld [vmem:[%s5 + $0x58] sm:$0xff]
        %v1174 = vld [vmem:[%s5 + $0x60] sm:$0xff]
        %v1175 = vld [vmem:[%s5 + $0x68] sm:$0xff]
        %v1176 = vld [vmem:[%s5 + $0x70] sm:$0xff]
        %v1177 = vld [vmem:[%s5 + $0x78] sm:$0xff]
        %v1178 = vld [vmem:[%s5 + $0x80] sm:$0xff]
        %v1179 = vld [vmem:[%s5 + $0x88] sm:$0xff]
        %v1180 = vld [vmem:[%s5 + $0x90] sm:$0xff]
        %v1181 = vld [vmem:[%s5 + $0x98] sm:$0xff]
        %v1182 = vld [vmem:[%s5 + $0xa0] sm:$0xff]
        %v1183 = vld [vmem:[%s5 + $0xa8] sm:$0xff]
        %v1184 = vld [vmem:[%s5 + $0xb0] sm:$0xff]
        %v1185 = vld [vmem:[%s5 + $0xb8] sm:$0xff]
        %v1186 = vld [vmem:[%s5 + $0xc0] sm:$0xff]
        %v1187 = vld [vmem:[%s5 + $0xc8] sm:$0xff]
        %v1188 = vld [vmem:[%s5 + $0xd0] sm:$0xff]
        %v1189 = vld [vmem:[%s5 + $0xd8] sm:$0xff]
        %v1190 = vld [vmem:[%s5 + $0xe0] sm:$0xff]
        %v1191 = vld [vmem:[%s5 + $0xe8] sm:$0xff]
        %v1192 = vld [vmem:[%s5 + $0xf0] sm:$0xff]
        %v1193 = vld [vmem:[%s5 + $0xf8] sm:$0xff]
        %v1194 = vld [vmem:[%s5 + $0x100] sm:$0xff]
        %v1195 = vld [vmem:[%s5 + $0x108] sm:$0xff]
        %v1196 = vld [vmem:[%s5 + $0x110] sm:$0xff]
        %v1197 = vld [vmem:[%s5 + $0x118] sm:$0xff]
        %v1198 = vld [vmem:[%s5 + $0x120] sm:$0xff]
        %v1199 = vld [vmem:[%s5 + $0x128] sm:$0xff]
        %v1200 = vld [vmem:[%s5 + $0x130] sm:$0xff]
        %v1201 = vld [vmem:[%s5 + $0x138] sm:$0xff]
        %v1202 = vld [vmem:[%s5 + $0x140] sm:$0xff]
        %v1203 = vld [vmem:[%s5 + $0x148] sm:$0xff]
        %v1204 = vld [vmem:[%s5 + $0x150] sm:$0xff]
        %v1205 = vld [vmem:[%s5 + $0x158] sm:$0xff]
        %v1206 = vld [vmem:[%s5 + $0x160] sm:$0xff]
        %v1207 = vld [vmem:[%s5 + $0x168] sm:$0xff]
        %v1208 = vld [vmem:[%s5 + $0x170] sm:$0xff]
        %v1209 = vld [vmem:[%s5 + $0x178] sm:$0xff]
        %v1210 = vld [vmem:[%s6] sm:$0xff]
        %v1211 = vld [vmem:[%s6 + $0x8] sm:$0xf]
        %v1214 = vlaneseq
        %v1215 = vshrl.u32 %v1214, 7
        %v1216 = vsub.s32 0, %v1215
        %v1217 = vrot.slane %v1210, %v1216
        %v1218 = vlaneseq
        %v1219 = vshrl.u32 %v1218, 7
        %v1220 = vsub.s32 1, %v1219
        %v1221 = vrot.slane %v1210, %v1220
        %v1222 = vlaneseq
        %v1223 = vshrl.u32 %v1222, 7
        %v1224 = vsub.s32 2, %v1223
        %v1225 = vrot.slane %v1210, %v1224
        %v1226 = vlaneseq
        %v1227 = vshrl.u32 %v1226, 7
        %v1228 = vsub.s32 3, %v1227
        %v1229 = vrot.slane %v1210, %v1228
        %v1230 = vlaneseq
        %v1231 = vshrl.u32 %v1230, 7
        %v1232 = vsub.s32 4, %v1231
        %v1233 = vrot.slane %v1210, %v1232
        %v1234 = vlaneseq
        %v1235 = vshrl.u32 %v1234, 7
        %v1236 = vsub.s32 5, %v1235
        %v1237 = vrot.slane %v1210, %v1236
        %v1238 = vlaneseq
        %v1239 = vshrl.u32 %v1238, 7
        %v1240 = vsub.s32 6, %v1239
        %v1241 = vrot.slane %v1210, %v1240
        %v1242 = vlaneseq
        %v1243 = vshrl.u32 %v1242, 7
        %v1244 = vsub.s32 7, %v1243
        %v1245 = vrot.slane %v1210, %v1244
        %v1246 = vlaneseq
        %v1247 = vshrl.u32 %v1246, 7
        %v1248 = vsub.s32 0, %v1247
        %v1249 = vrot.slane %v1211, %v1248
        %v1250 = vlaneseq
        %v1251 = vshrl.u32 %v1250, 7
        %v1252 = vsub.s32 1, %v1251
        %v1253 = vrot.slane %v1211, %v1252
        %v1254 = vlaneseq
        %v1255 = vshrl.u32 %v1254, 7
        %v1256 = vsub.s32 2, %v1255
        %v1257 = vrot.slane %v1211, %v1256
        %v1258 = vlaneseq
        %v1259 = vshrl.u32 %v1258, 7
        %v1260 = vsub.s32 3, %v1259
        %v1261 = vrot.slane %v1211, %v1260
        %v1322 = vunpack.c.l.b16 %v1162
        %v1323 = vunpack.c.h.b16 %v1162
        %v1324 = vunpack.c.l.b16 %v1163
        %v1325 = vunpack.c.h.b16 %v1163
        %v1326 = vunpack.c.l.b16 %v1164
        %v1327 = vunpack.c.h.b16 %v1164
        %v1328 = vunpack.c.l.b16 %v1165
        %v1329 = vunpack.c.h.b16 %v1165
        %v1330 = vunpack.c.l.b16 %v1166
        %v1331 = vunpack.c.h.b16 %v1166
        %v1332 = vunpack.c.l.b16 %v1167
        %v1333 = vunpack.c.h.b16 %v1167
        %v1334 = vunpack.c.l.b16 %v1168
        %v1335 = vunpack.c.h.b16 %v1168
        %v1336 = vunpack.c.l.b16 %v1169
        %v1337 = vunpack.c.h.b16 %v1169
        %v1338 = vunpack.c.l.b16 %v1170
        %v1339 = vunpack.c.h.b16 %v1170
        %v1340 = vunpack.c.l.b16 %v1171
        %v1341 = vunpack.c.h.b16 %v1171
        %v1342 = vunpack.c.l.b16 %v1172
        %v1343 = vunpack.c.h.b16 %v1172
        %v1344 = vunpack.c.l.b16 %v1173
        %v1345 = vunpack.c.h.b16 %v1173
        %v1346 = vunpack.c.l.b16 %v1174
        %v1347 = vunpack.c.h.b16 %v1174
        %v1348 = vunpack.c.l.b16 %v1175
        %v1349 = vunpack.c.h.b16 %v1175
        %v1350 = vunpack.c.l.b16 %v1176
        %v1351 = vunpack.c.h.b16 %v1176
        %v1352 = vunpack.c.l.b16 %v1177
        %v1353 = vunpack.c.h.b16 %v1177
        %v1354 = vunpack.c.l.b16 %v1178
        %v1355 = vunpack.c.h.b16 %v1178
        %v1356 = vunpack.c.l.b16 %v1179
        %v1357 = vunpack.c.h.b16 %v1179
        %v1358 = vunpack.c.l.b16 %v1180
        %v1359 = vunpack.c.h.b16 %v1180
        %v1360 = vunpack.c.l.b16 %v1181
        %v1361 = vunpack.c.h.b16 %v1181
        %v1362 = vunpack.c.l.b16 %v1182
        %v1363 = vunpack.c.h.b16 %v1182
        %v1364 = vunpack.c.l.b16 %v1183
        %v1365 = vunpack.c.h.b16 %v1183
        %v1366 = vunpack.c.l.b16 %v1184
        %v1367 = vunpack.c.h.b16 %v1184
        %v1368 = vunpack.c.l.b16 %v1185
        %v1369 = vunpack.c.h.b16 %v1185
        %v1370 = vunpack.c.l.b16 %v1186
        %v1371 = vunpack.c.h.b16 %v1186
        %v1372 = vunpack.c.l.b16 %v1187
        %v1373 = vunpack.c.h.b16 %v1187
        %v1374 = vunpack.c.l.b16 %v1188
        %v1375 = vunpack.c.h.b16 %v1188
        %v1376 = vunpack.c.l.b16 %v1189
        %v1377 = vunpack.c.h.b16 %v1189
        %v1378 = vunpack.c.l.b16 %v1190
        %v1379 = vunpack.c.h.b16 %v1190
        %v1380 = vunpack.c.l.b16 %v1191
        %v1381 = vunpack.c.h.b16 %v1191
        %v1382 = vunpack.c.l.b16 %v1192
        %v1383 = vunpack.c.h.b16 %v1192
        %v1384 = vunpack.c.l.b16 %v1193
        %v1385 = vunpack.c.h.b16 %v1193
        %v1386 = vunpack.c.l.b16 %v1194
        %v1387 = vunpack.c.h.b16 %v1194
        %v1388 = vunpack.c.l.b16 %v1195
        %v1389 = vunpack.c.h.b16 %v1195
        %v1390 = vunpack.c.l.b16 %v1196
        %v1391 = vunpack.c.h.b16 %v1196
        %v1392 = vunpack.c.l.b16 %v1197
        %v1393 = vunpack.c.h.b16 %v1197
        %v1394 = vunpack.c.l.b16 %v1198
        %v1395 = vunpack.c.h.b16 %v1198
        %v1396 = vunpack.c.l.b16 %v1199
        %v1397 = vunpack.c.h.b16 %v1199
        %v1398 = vunpack.c.l.b16 %v1200
        %v1399 = vunpack.c.h.b16 %v1200
        %v1400 = vunpack.c.l.b16 %v1201
        %v1401 = vunpack.c.h.b16 %v1201
        %v1402 = vunpack.c.l.b16 %v1202
        %v1403 = vunpack.c.h.b16 %v1202
        %v1404 = vunpack.c.l.b16 %v1203
        %v1405 = vunpack.c.h.b16 %v1203
        %v1406 = vunpack.c.l.b16 %v1204
        %v1407 = vunpack.c.h.b16 %v1204
        %v1408 = vunpack.c.l.b16 %v1205
        %v1409 = vunpack.c.h.b16 %v1205
        %v1410 = vunpack.c.l.b16 %v1206
        %v1411 = vunpack.c.h.b16 %v1206
        %v1412 = vunpack.c.l.b16 %v1207
        %v1413 = vunpack.c.h.b16 %v1207
        %v1414 = vunpack.c.l.b16 %v1208
        %v1415 = vunpack.c.h.b16 %v1208
        %v1416 = vunpack.c.l.b16 %v1209
        %v1417 = vunpack.c.h.b16 %v1209
        %v1418 = vpack.c.b16 %v1334, %v1322
        %v1419 = vpack.c.b16 %v1335, %v1323
        %v1420 = vpack.c.b16 %v1336, %v1324
        %v1421 = vpack.c.b16 %v1337, %v1325
        %v1422 = vpack.c.b16 %v1338, %v1326
        %v1423 = vpack.c.b16 %v1339, %v1327
        %v1424 = vpack.c.b16 %v1340, %v1328
        %v1425 = vpack.c.b16 %v1341, %v1329
        %v1426 = vpack.c.b16 %v1342, %v1330
        %v1427 = vpack.c.b16 %v1343, %v1331
        %v1428 = vpack.c.b16 %v1344, %v1332
        %v1429 = vpack.c.b16 %v1345, %v1333
        %v1430 = vpack.c.b16 %v1358, %v1346
        %v1431 = vpack.c.b16 %v1359, %v1347
        %v1432 = vpack.c.b16 %v1360, %v1348
        %v1433 = vpack.c.b16 %v1361, %v1349
        %v1434 = vpack.c.b16 %v1362, %v1350
        %v1435 = vpack.c.b16 %v1363, %v1351
        %v1436 = vpack.c.b16 %v1364, %v1352
        %v1437 = vpack.c.b16 %v1365, %v1353
        %v1438 = vpack.c.b16 %v1366, %v1354
        %v1439 = vpack.c.b16 %v1367, %v1355
        %v1440 = vpack.c.b16 %v1368, %v1356
        %v1441 = vpack.c.b16 %v1369, %v1357
        %v1442 = vpack.c.b16 %v1382, %v1370
        %v1443 = vpack.c.b16 %v1383, %v1371
        %v1444 = vpack.c.b16 %v1384, %v1372
        %v1445 = vpack.c.b16 %v1385, %v1373
        %v1446 = vpack.c.b16 %v1386, %v1374
        %v1447 = vpack.c.b16 %v1387, %v1375
        %v1448 = vpack.c.b16 %v1388, %v1376
        %v1449 = vpack.c.b16 %v1389, %v1377
        %v1450 = vpack.c.b16 %v1390, %v1378
        %v1451 = vpack.c.b16 %v1391, %v1379
        %v1452 = vpack.c.b16 %v1392, %v1380
        %v1453 = vpack.c.b16 %v1393, %v1381
        %v1454 = vpack.c.b16 %v1406, %v1394
        %v1455 = vpack.c.b16 %v1407, %v1395
        %v1456 = vpack.c.b16 %v1408, %v1396
        %v1457 = vpack.c.b16 %v1409, %v1397
        %v1458 = vpack.c.b16 %v1410, %v1398
        %v1459 = vpack.c.b16 %v1411, %v1399
        %v1460 = vpack.c.b16 %v1412, %v1400
        %v1461 = vpack.c.b16 %v1413, %v1401
        %v1462 = vpack.c.b16 %v1414, %v1402
        %v1463 = vpack.c.b16 %v1415, %v1403
        %v1464 = vpack.c.b16 %v1416, %v1404
        %v1465 = vpack.c.b16 %v1417, %v1405
        %vm1514 = vcmask 523264
        %v1516 = vsel %vm1514, %v1161, 0
        %1518 = vmatprep.subr.bf16.mxu0 %v1419
        %1519 = vmatpush1.bf16.msra.mxu0 %v1418
        %1520 = vmatprep.subr.bf16.mxu0 %v1431
        %1521 = vmatpush1.bf16.msra.mxu0 %v1430
        %1522 = vmatprep.subr.bf16.mxu0 %v1443
        %1523 = vmatpush1.bf16.msra.mxu0 %v1442
        %1524 = vmatprep.subr.bf16.mxu0 %v1455
        %1525 = vmatpush1.bf16.msra.mxu0 %v1454
        %1526 = vmatprep.subr.bf16.mxu0 0
        %1527 = vmatpush1.bf16.msra.mxu0 0
        %1528 = vmatprep.subr.bf16.mxu0 0
        %1529 = vmatpush1.bf16.msra.mxu0 0
        %1530 = vmatprep.subr.bf16.mxu0 0
        %1531 = vmatpush1.bf16.msra.mxu0 0
        %1532 = vmatprep.subr.bf16.mxu0 0
        %1533 = vmatpush1.bf16.msra.mxu0 0
        %1534 = vmatprep.subr.bf16.mxu0 0
        %1535 = vmatpush1.bf16.msra.mxu0 0
        %1536 = vmatprep.subr.bf16.mxu0 0
        %1537 = vmatpush1.bf16.msra.mxu0 0
        %1538 = vmatprep.subr.bf16.mxu0 0
        %1539 = vmatpush1.bf16.msra.mxu0 0
        %1540 = vmatprep.subr.bf16.mxu0 0
        %1541 = vmatpush1.bf16.msra.mxu0 0
        %1542 = vmatprep.subr.bf16.mxu0 0
        %1543 = vmatpush1.bf16.msra.mxu0 0
        %1544 = vmatprep.subr.bf16.mxu0 0
        %1545 = vmatpush1.bf16.msra.mxu0 0
        %1546 = vmatprep.subr.bf16.mxu0 0
        %1547 = vmatpush1.bf16.msra.mxu0 0
        %1548 = vmatprep.subr.bf16.mxu0 0
        %1549 = vmatpush1.bf16.msra.mxu0 0
        %1550 = vmatprep.mubr.bf16.mxu0 0
        %1551 = vmatmul.mubr.bf16.gmra.mrb[0].mxu0 %v1516
        %v1552 = vpop.f32.mrb[0].mxu0
        %v1553 = vadd.f32 %v1217, %v1552
        %v1554 = vpop.f32.mrb[0].mxu0
        %v1555 = vadd.f32 %v1221, %v1554
        %v1556 = vpop.f32.mrb[0].mxu0
        %v1557 = vpop.f32.mrb[0].mxu0
        %1558 = vdwg.mxu0
        %1559 = vmatprep.subr.bf16.mxu0 %v1421
        %1560 = vmatpush1.bf16.msra.mxu0 %v1420
        %1561 = vmatprep.subr.bf16.mxu0 %v1433
        %1562 = vmatpush1.bf16.msra.mxu0 %v1432
        %1563 = vmatprep.subr.bf16.mxu0 %v1445
        %1564 = vmatpush1.bf16.msra.mxu0 %v1444
        %1565 = vmatprep.subr.bf16.mxu0 %v1457
        %1566 = vmatpush1.bf16.msra.mxu0 %v1456
        %1567 = vmatprep.subr.bf16.mxu0 0
        %1568 = vmatpush1.bf16.msra.mxu0 0
        %1569 = vmatprep.subr.bf16.mxu0 0
        %1570 = vmatpush1.bf16.msra.mxu0 0
        %1571 = vmatprep.subr.bf16.mxu0 0
        %1572 = vmatpush1.bf16.msra.mxu0 0
        %1573 = vmatprep.subr.bf16.mxu0 0
        %1574 = vmatpush1.bf16.msra.mxu0 0
        %1575 = vmatprep.subr.bf16.mxu0 0
        %1576 = vmatpush1.bf16.msra.mxu0 0
        %1577 = vmatprep.subr.bf16.mxu0 0
        %1578 = vmatpush1.bf16.msra.mxu0 0
        %1579 = vmatprep.subr.bf16.mxu0 0
        %1580 = vmatpush1.bf16.msra.mxu0 0
        %1581 = vmatprep.subr.bf16.mxu0 0
        %1582 = vmatpush1.bf16.msra.mxu0 0
        %1583 = vmatprep.subr.bf16.mxu0 0
        %1584 = vmatpush1.bf16.msra.mxu0 0
        %1585 = vmatprep.subr.bf16.mxu0 0
        %1586 = vmatpush1.bf16.msra.mxu0 0
        %1587 = vmatprep.subr.bf16.mxu0 0
        %1588 = vmatpush1.bf16.msra.mxu0 0
        %1589 = vmatprep.subr.bf16.mxu0 0
        %1590 = vmatpush1.bf16.msra.mxu0 0
        %1591 = vmatprep.mubr.bf16.mxu0 0
        %1592 = vmatmul.mubr.bf16.gmra.mrb[0].mxu0 %v1516
        %v1593 = vpop.f32.mrb[0].mxu0
        %v1594 = vadd.f32 %v1225, %v1593
        %v1595 = vpop.f32.mrb[0].mxu0
        %v1596 = vadd.f32 %v1229, %v1595
        %v1597 = vpop.f32.mrb[0].mxu0
        %v1598 = vpop.f32.mrb[0].mxu0
        %1599 = vdwg.mxu0
        %1600 = vmatprep.subr.bf16.mxu0 %v1423
        %1601 = vmatpush1.bf16.msra.mxu0 %v1422
        %1602 = vmatprep.subr.bf16.mxu0 %v1435
        %1603 = vmatpush1.bf16.msra.mxu0 %v1434
        %1604 = vmatprep.subr.bf16.mxu0 %v1447
        %1605 = vmatpush1.bf16.msra.mxu0 %v1446
        %1606 = vmatprep.subr.bf16.mxu0 %v1459
        %1607 = vmatpush1.bf16.msra.mxu0 %v1458
        %1608 = vmatprep.subr.bf16.mxu0 0
        %1609 = vmatpush1.bf16.msra.mxu0 0
        %1610 = vmatprep.subr.bf16.mxu0 0
        %1611 = vmatpush1.bf16.msra.mxu0 0
        %1612 = vmatprep.subr.bf16.mxu0 0
        %1613 = vmatpush1.bf16.msra.mxu0 0
        %1614 = vmatprep.subr.bf16.mxu0 0
        %1615 = vmatpush1.bf16.msra.mxu0 0
        %1616 = vmatprep.subr.bf16.mxu0 0
        %1617 = vmatpush1.bf16.msra.mxu0 0
        %1618 = vmatprep.subr.bf16.mxu0 0
        %1619 = vmatpush1.bf16.msra.mxu0 0
        %1620 = vmatprep.subr.bf16.mxu0 0
        %1621 = vmatpush1.bf16.msra.mxu0 0
        %1622 = vmatprep.subr.bf16.mxu0 0
        %1623 = vmatpush1.bf16.msra.mxu0 0
        %1624 = vmatprep.subr.bf16.mxu0 0
        %1625 = vmatpush1.bf16.msra.mxu0 0
        %1626 = vmatprep.subr.bf16.mxu0 0
        %1627 = vmatpush1.bf16.msra.mxu0 0
        %1628 = vmatprep.subr.bf16.mxu0 0
        %1629 = vmatpush1.bf16.msra.mxu0 0
        %1630 = vmatprep.subr.bf16.mxu0 0
        %1631 = vmatpush1.bf16.msra.mxu0 0
        %1632 = vmatprep.mubr.bf16.mxu0 0
        %1633 = vmatmul.mubr.bf16.gmra.mrb[0].mxu0 %v1516
        %v1634 = vpop.f32.mrb[0].mxu0
        %v1635 = vadd.f32 %v1233, %v1634
        %v1636 = vpop.f32.mrb[0].mxu0
        %v1637 = vadd.f32 %v1237, %v1636
        %v1638 = vpop.f32.mrb[0].mxu0
        %v1639 = vpop.f32.mrb[0].mxu0
        %1640 = vdwg.mxu0
        %1641 = vmatprep.subr.bf16.mxu0 %v1425
        %1642 = vmatpush1.bf16.msra.mxu0 %v1424
        %1643 = vmatprep.subr.bf16.mxu0 %v1437
        %1644 = vmatpush1.bf16.msra.mxu0 %v1436
        %1645 = vmatprep.subr.bf16.mxu0 %v1449
        %1646 = vmatpush1.bf16.msra.mxu0 %v1448
        %1647 = vmatprep.subr.bf16.mxu0 %v1461
        %1648 = vmatpush1.bf16.msra.mxu0 %v1460
        %1649 = vmatprep.subr.bf16.mxu0 0
        %1650 = vmatpush1.bf16.msra.mxu0 0
        %1651 = vmatprep.subr.bf16.mxu0 0
        %1652 = vmatpush1.bf16.msra.mxu0 0
        %1653 = vmatprep.subr.bf16.mxu0 0
        %1654 = vmatpush1.bf16.msra.mxu0 0
        %1655 = vmatprep.subr.bf16.mxu0 0
        %1656 = vmatpush1.bf16.msra.mxu0 0
        %1657 = vmatprep.subr.bf16.mxu0 0
        %1658 = vmatpush1.bf16.msra.mxu0 0
        %1659 = vmatprep.subr.bf16.mxu0 0
        %1660 = vmatpush1.bf16.msra.mxu0 0
        %1661 = vmatprep.subr.bf16.mxu0 0
        %1662 = vmatpush1.bf16.msra.mxu0 0
        %1663 = vmatprep.subr.bf16.mxu0 0
        %1664 = vmatpush1.bf16.msra.mxu0 0
        %1665 = vmatprep.subr.bf16.mxu0 0
        %1666 = vmatpush1.bf16.msra.mxu0 0
        %1667 = vmatprep.subr.bf16.mxu0 0
        %1668 = vmatpush1.bf16.msra.mxu0 0
        %1669 = vmatprep.subr.bf16.mxu0 0
        %1670 = vmatpush1.bf16.msra.mxu0 0
        %1671 = vmatprep.subr.bf16.mxu0 0
        %1672 = vmatpush1.bf16.msra.mxu0 0
        %1673 = vmatprep.mubr.bf16.mxu0 0
        %1674 = vmatmul.mubr.bf16.gmra.mrb[0].mxu0 %v1516
        %v1675 = vpop.f32.mrb[0].mxu0
        %v1676 = vadd.f32 %v1241, %v1675
        %v1677 = vpop.f32.mrb[0].mxu0
        %v1678 = vadd.f32 %v1245, %v1677
        %v1679 = vpop.f32.mrb[0].mxu0
        %v1680 = vpop.f32.mrb[0].mxu0
        %1681 = vdwg.mxu0
        %1682 = vmatprep.subr.bf16.mxu0 %v1427
        %1683 = vmatpush1.bf16.msra.mxu0 %v1426
        %1684 = vmatprep.subr.bf16.mxu0 %v1439
        %1685 = vmatpush1.bf16.msra.mxu0 %v1438
        %1686 = vmatprep.subr.bf16.mxu0 %v1451
        %1687 = vmatpush1.bf16.msra.mxu0 %v1450
        %1688 = vmatprep.subr.bf16.mxu0 %v1463
        %1689 = vmatpush1.bf16.msra.mxu0 %v1462
        %1690 = vmatprep.subr.bf16.mxu0 0
        %1691 = vmatpush1.bf16.msra.mxu0 0
        %1692 = vmatprep.subr.bf16.mxu0 0
        %1693 = vmatpush1.bf16.msra.mxu0 0
        %1694 = vmatprep.subr.bf16.mxu0 0
        %1695 = vmatpush1.bf16.msra.mxu0 0
        %1696 = vmatprep.subr.bf16.mxu0 0
        %1697 = vmatpush1.bf16.msra.mxu0 0
        %1698 = vmatprep.subr.bf16.mxu0 0
        %1699 = vmatpush1.bf16.msra.mxu0 0
        %1700 = vmatprep.subr.bf16.mxu0 0
        %1701 = vmatpush1.bf16.msra.mxu0 0
        %1702 = vmatprep.subr.bf16.mxu0 0
        %1703 = vmatpush1.bf16.msra.mxu0 0
        %1704 = vmatprep.subr.bf16.mxu0 0
        %1705 = vmatpush1.bf16.msra.mxu0 0
        %1706 = vmatprep.subr.bf16.mxu0 0
        %1707 = vmatpush1.bf16.msra.mxu0 0
        %1708 = vmatprep.subr.bf16.mxu0 0
        %1709 = vmatpush1.bf16.msra.mxu0 0
        %1710 = vmatprep.subr.bf16.mxu0 0
        %1711 = vmatpush1.bf16.msra.mxu0 0
        %1712 = vmatprep.subr.bf16.mxu0 0
        %1713 = vmatpush1.bf16.msra.mxu0 0
        %1714 = vmatprep.mubr.bf16.mxu0 0
        %1715 = vmatmul.mubr.bf16.gmra.mrb[0].mxu0 %v1516
        %v1716 = vpop.f32.mrb[0].mxu0
        %v1717 = vadd.f32 %v1249, %v1716
        %v1718 = vpop.f32.mrb[0].mxu0
        %v1719 = vadd.f32 %v1253, %v1718
        %v1720 = vpop.f32.mrb[0].mxu0
        %v1721 = vpop.f32.mrb[0].mxu0
        %1722 = vdwg.mxu0
        %1723 = vmatprep.subr.bf16.mxu0 %v1429
        %1724 = vmatpush1.bf16.msra.mxu0 %v1428
        %1725 = vmatprep.subr.bf16.mxu0 %v1441
        %1726 = vmatpush1.bf16.msra.mxu0 %v1440
        %1727 = vmatprep.subr.bf16.mxu0 %v1453
        %1728 = vmatpush1.bf16.msra.mxu0 %v1452
        %1729 = vmatprep.subr.bf16.mxu0 %v1465
        %1730 = vmatpush1.bf16.msra.mxu0 %v1464
        %1731 = vmatprep.subr.bf16.mxu0 0
        %1732 = vmatpush1.bf16.msra.mxu0 0
        %1733 = vmatprep.subr.bf16.mxu0 0
        %1734 = vmatpush1.bf16.msra.mxu0 0
        %1735 = vmatprep.subr.bf16.mxu0 0
        %1736 = vmatpush1.bf16.msra.mxu0 0
        %1737 = vmatprep.subr.bf16.mxu0 0
        %1738 = vmatpush1.bf16.msra.mxu0 0
        %1739 = vmatprep.subr.bf16.mxu0 0
        %1740 = vmatpush1.bf16.msra.mxu0 0
        %1741 = vmatprep.subr.bf16.mxu0 0
        %1742 = vmatpush1.bf16.msra.mxu0 0
        %1743 = vmatprep.subr.bf16.mxu0 0
        %1744 = vmatpush1.bf16.msra.mxu0 0
        %1745 = vmatprep.subr.bf16.mxu0 0
        %1746 = vmatpush1.bf16.msra.mxu0 0
        %1747 = vmatprep.subr.bf16.mxu0 0
        %1748 = vmatpush1.bf16.msra.mxu0 0
        %1749 = vmatprep.subr.bf16.mxu0 0
        %1750 = vmatpush1.bf16.msra.mxu0 0
        %1751 = vmatprep.subr.bf16.mxu0 0
        %1752 = vmatpush1.bf16.msra.mxu0 0
        %1753 = vmatprep.subr.bf16.mxu0 0
        %1754 = vmatpush1.bf16.msra.mxu0 0
        %1755 = vmatprep.mubr.bf16.mxu0 0
        %1756 = vmatmul.mubr.bf16.gmra.mrb[0].mxu0 %v1516
        %v1757 = vpop.f32.mrb[0].mxu0
        %v1758 = vadd.f32 %v1257, %v1757
        %v1759 = vpop.f32.mrb[0].mxu0
        %v1760 = vadd.f32 %v1261, %v1759
        %v1761 = vpop.f32.mrb[0].mxu0
        %v1762 = vpop.f32.mrb[0].mxu0
        %1763 = vdwg.mxu0
        %v1764 = vpack.c.bf16 %v1553, %v1553
        %v1765 = vpack.c.bf16 %v1635, %v1635
        %v1766 = vpack.c.bf16 %v1717, %v1717
        %1767 = vmatprep.subr.bf16.mxu0 0
        %1768 = vmatpush1.bf16.xpose.msra.mxu0 %v1765
        %1769 = vmatprep.subr.bf16.mxu0 0
        %1770 = vmatpush1.bf16.xpose.msra.mxu0 0
        %1771 = vmatprep.subr.bf16.mxu0 0
        %1772 = vmatpush1.bf16.xpose.msra.mxu0 0
        %1773 = vmatprep.subr.bf16.mxu0 0
        %1774 = vmatpush1.bf16.xpose.msra.mxu0 0
        %1775 = vmatprep.subr.bf16.mxu0 0
        %1776 = vmatpush1.bf16.xpose.msra.mxu0 0
        %1777 = vmatprep.subr.bf16.mxu0 0
        %1778 = vmatpush1.bf16.xpose.msra.mxu0 0
        %1779 = vmatprep.subr.bf16.mxu0 0
        %1780 = vmatpush1.bf16.xpose.msra.mxu0 0
        %1781 = vmatprep.subr.bf16.mxu0 0
        %1782 = vmatpush1.bf16.xpose.msra.mxu0 0
        %1783 = vmatprep.subr.bf16.mxu0 0
        %1784 = vmatpush1.bf16.xpose.msra.mxu0 0
        %1785 = vmatprep.subr.bf16.mxu0 0
        %1786 = vmatpush1.bf16.xpose.msra.mxu0 0
        %1787 = vmatprep.subr.bf16.mxu0 0
        %1788 = vmatpush1.bf16.xpose.msra.mxu0 0
        %1789 = vmatprep.subr.bf16.mxu0 0
        %1790 = vmatpush1.bf16.xpose.msra.mxu0 0
        %1791 = vmatprep.subr.bf16.mxu0 0
        %1792 = vmatpush1.bf16.xpose.msra.mxu0 0
        %1793 = vmatprep.subr.bf16.mxu0 0
        %1794 = vmatpush1.bf16.xpose.msra.mxu0 0
        %1795 = vmatprep.subr.bf16.mxu0 0
        %1796 = vmatpush1.bf16.xpose.msra.mxu0 0
        %1797 = vmatprep.subr.bf16.mxu0 0
        %1798 = vmatpush1.bf16.xpose.msra.mxu0 0
        %1799 = vmatprep.mubr.bf16.mxu0 0
        %1800 = vmatmul.mubr.bf16.gmra.mrb[0].mxu0 %v1764
        %v1801 = vpop.f32.mrb[0].mxu0
        %v1802 = vadd.f32 0.0, %v1801
        %v1803 = vpop.f32.mrb[0].mxu0
        %v1804 = vpop.f32.mrb[0].mxu0
        %v1805 = vpop.f32.mrb[0].mxu0
        %1806 = vdwg.mxu0
        %vm1807 = vcmask 36864
        %v1808 = vsel %vm1807, %v1802, -inf
        %1809 = vmax.xlane.f32.xlu0 %v1808
        %v1810 = vpop.xlane.xlu0 %1809
        %v1811 = vsub.f32 %v1802, %v1810
        %v1812 = vmul.f32 %v1811, 1.442695
        %v1813 = vpow.pop %v1812
        %v1814 = vsel %vm1807, %v1813, 0.0
        %1815 = vadd.xlane.f32.xlu0 %v1814
        %v1816 = vpop.xlane.xlu0 %1815
        %v1817 = vrcp.pop %v1816
        %v1818 = vmul.f32 %v1813, %v1817
        %v1819 = vpack.c.bf16 %v1818, %v1818
        %vm1820 = vcmask 39936
        %v1822 = vsel %vm1820, %v1819, 0
        %vm1824 = vcmask 1041408
        %vm1825 = vcmask 1042432
        %v1826 = vsel %vm1824, 4294967295, 65535
        %v1827 = vsel %vm1825, %v1826, 0
        %v1829 = vand.u32 %v1766, %v1827
        %1831 = vmatprep.subr.bf16.mxu0 0
        %1832 = vmatpush1.bf16.msra.mxu0 %v1829
        %1833 = vmatprep.subr.bf16.mxu0 0
        %1834 = vmatpush1.bf16.msra.mxu0 0
        %1835 = vmatprep.subr.bf16.mxu0 0
        %1836 = vmatpush1.bf16.msra.mxu0 0
        %1837 = vmatprep.subr.bf16.mxu0 0
        %1838 = vmatpush1.bf16.msra.mxu0 0
        %1839 = vmatprep.subr.bf16.mxu0 0
        %1840 = vmatpush1.bf16.msra.mxu0 0
        %1841 = vmatprep.subr.bf16.mxu0 0
        %1842 = vmatpush1.bf16.msra.mxu0 0
        %1843 = vmatprep.subr.bf16.mxu0 0
        %1844 = vmatpush1.bf16.msra.mxu0 0
        %1845 = vmatprep.subr.bf16.mxu0 0
        %1846 = vmatpush1.bf16.msra.mxu0 0
        %1847 = vmatprep.subr.bf16.mxu0 0
        %1848 = vmatpush1.bf16.msra.mxu0 0
        %1849 = vmatprep.subr.bf16.mxu0 0
        %1850 = vmatpush1.bf16.msra.mxu0 0
        %1851 = vmatprep.subr.bf16.mxu0 0
        %1852 = vmatpush1.bf16.msra.mxu0 0
        %1853 = vmatprep.subr.bf16.mxu0 0
        %1854 = vmatpush1.bf16.msra.mxu0 0
        %1855 = vmatprep.subr.bf16.mxu0 0
        %1856 = vmatpush1.bf16.msra.mxu0 0
        %1857 = vmatprep.subr.bf16.mxu0 0
        %1858 = vmatpush1.bf16.msra.mxu0 0
        %1859 = vmatprep.subr.bf16.mxu0 0
        %1860 = vmatpush1.bf16.msra.mxu0 0
        %1861 = vmatprep.subr.bf16.mxu0 0
        %1862 = vmatpush1.bf16.msra.mxu0 0
        %1863 = vmatprep.mubr.bf16.mxu0 0
        %1864 = vmatmul.mubr.bf16.gmra.mrb[0].mxu0 %v1822
        %v1865 = vpop.f32.mrb[0].mxu0
        %v1866 = vadd.f32 0.0, %v1865
        %v1867 = vpop.f32.mrb[0].mxu0
        %v1868 = vpop.f32.mrb[0].mxu0
        %v1869 = vpop.f32.mrb[0].mxu0
        %1870 = vdwg.mxu0
        %v1871 = vpack.c.bf16 %v1555, %v1555
        %v1872 = vpack.c.bf16 %v1637, %v1637
        %v1873 = vpack.c.bf16 %v1719, %v1719
        %1874 = vmatprep.subr.bf16.mxu0 0
        %1875 = vmatpush1.bf16.xpose.msra.mxu0 %v1872
        %1876 = vmatprep.subr.bf16.mxu0 0
        %1877 = vmatpush1.bf16.xpose.msra.mxu0 0
        %1878 = vmatprep.subr.bf16.mxu0 0
        %1879 = vmatpush1.bf16.xpose.msra.mxu0 0
        %1880 = vmatprep.subr.bf16.mxu0 0
        %1881 = vmatpush1.bf16.xpose.msra.mxu0 0
        %1882 = vmatprep.subr.bf16.mxu0 0
        %1883 = vmatpush1.bf16.xpose.msra.mxu0 0
        %1884 = vmatprep.subr.bf16.mxu0 0
        %1885 = vmatpush1.bf16.xpose.msra.mxu0 0
        %1886 = vmatprep.subr.bf16.mxu0 0
        %1887 = vmatpush1.bf16.xpose.msra.mxu0 0
        %1888 = vmatprep.subr.bf16.mxu0 0
        %1889 = vmatpush1.bf16.xpose.msra.mxu0 0
        %1890 = vmatprep.subr.bf16.mxu0 0
        %1891 = vmatpush1.bf16.xpose.msra.mxu0 0
        %1892 = vmatprep.subr.bf16.mxu0 0
        %1893 = vmatpush1.bf16.xpose.msra.mxu0 0
        %1894 = vmatprep.subr.bf16.mxu0 0
        %1895 = vmatpush1.bf16.xpose.msra.mxu0 0
        %1896 = vmatprep.subr.bf16.mxu0 0
        %1897 = vmatpush1.bf16.xpose.msra.mxu0 0
        %1898 = vmatprep.subr.bf16.mxu0 0
        %1899 = vmatpush1.bf16.xpose.msra.mxu0 0
        %1900 = vmatprep.subr.bf16.mxu0 0
        %1901 = vmatpush1.bf16.xpose.msra.mxu0 0
        %1902 = vmatprep.subr.bf16.mxu0 0
        %1903 = vmatpush1.bf16.xpose.msra.mxu0 0
        %1904 = vmatprep.subr.bf16.mxu0 0
        %1905 = vmatpush1.bf16.xpose.msra.mxu0 0
        %1906 = vmatprep.mubr.bf16.mxu0 0
        %1907 = vmatmul.mubr.bf16.gmra.mrb[0].mxu0 %v1871
        %v1908 = vpop.f32.mrb[0].mxu0
        %v1909 = vadd.f32 0.0, %v1908
        %v1910 = vpop.f32.mrb[0].mxu0
        %v1911 = vpop.f32.mrb[0].mxu0
        %v1912 = vpop.f32.mrb[0].mxu0
        %1913 = vdwg.mxu0
        %v1914 = vsel %vm1807, %v1909, -inf
        %1915 = vmax.xlane.f32.xlu0 %v1914
        %v1916 = vpop.xlane.xlu0 %1915
        %v1917 = vsub.f32 %v1909, %v1916
        %v1918 = vmul.f32 %v1917, 1.442695
        %v1919 = vpow.pop %v1918
        %v1920 = vsel %vm1807, %v1919, 0.0
        %1921 = vadd.xlane.f32.xlu0 %v1920
        %v1922 = vpop.xlane.xlu0 %1921
        %v1923 = vrcp.pop %v1922
        %v1924 = vmul.f32 %v1919, %v1923
        %v1925 = vpack.c.bf16 %v1924, %v1924
        %v1927 = vsel %vm1820, %v1925, 0
        %v1930 = vand.u32 %v1873, %v1827
        %1932 = vmatprep.subr.bf16.mxu0 0
        %1933 = vmatpush1.bf16.msra.mxu0 %v1930
        %1934 = vmatprep.subr.bf16.mxu0 0
        %1935 = vmatpush1.bf16.msra.mxu0 0
        %1936 = vmatprep.subr.bf16.mxu0 0
        %1937 = vmatpush1.bf16.msra.mxu0 0
        %1938 = vmatprep.subr.bf16.mxu0 0
        %1939 = vmatpush1.bf16.msra.mxu0 0
        %1940 = vmatprep.subr.bf16.mxu0 0
        %1941 = vmatpush1.bf16.msra.mxu0 0
        %1942 = vmatprep.subr.bf16.mxu0 0
        %1943 = vmatpush1.bf16.msra.mxu0 0
        %1944 = vmatprep.subr.bf16.mxu0 0
        %1945 = vmatpush1.bf16.msra.mxu0 0
        %1946 = vmatprep.subr.bf16.mxu0 0
        %1947 = vmatpush1.bf16.msra.mxu0 0
        %1948 = vmatprep.subr.bf16.mxu0 0
        %1949 = vmatpush1.bf16.msra.mxu0 0
        %1950 = vmatprep.subr.bf16.mxu0 0
        %1951 = vmatpush1.bf16.msra.mxu0 0
        %1952 = vmatprep.subr.bf16.mxu0 0
        %1953 = vmatpush1.bf16.msra.mxu0 0
        %1954 = vmatprep.subr.bf16.mxu0 0
        %1955 = vmatpush1.bf16.msra.mxu0 0
        %1956 = vmatprep.subr.bf16.mxu0 0
        %1957 = vmatpush1.bf16.msra.mxu0 0
        %1958 = vmatprep.subr.bf16.mxu0 0
        %1959 = vmatpush1.bf16.msra.mxu0 0
        %1960 = vmatprep.subr.bf16.mxu0 0
        %1961 = vmatpush1.bf16.msra.mxu0 0
        %1962 = vmatprep.subr.bf16.mxu0 0
        %1963 = vmatpush1.bf16.msra.mxu0 0
        %1964 = vmatprep.mubr.bf16.mxu0 0
        %1965 = vmatmul.mubr.bf16.gmra.mrb[0].mxu0 %v1927
        %v1966 = vpop.f32.mrb[0].mxu0
        %v1967 = vadd.f32 0.0, %v1966
        %v1968 = vpop.f32.mrb[0].mxu0
        %v1969 = vpop.f32.mrb[0].mxu0
        %v1970 = vpop.f32.mrb[0].mxu0
        %1971 = vdwg.mxu0
        %v1972 = vpack.c.bf16 %v1594, %v1594
        %v1973 = vpack.c.bf16 %v1676, %v1676
        %v1974 = vpack.c.bf16 %v1758, %v1758
        %1975 = vmatprep.subr.bf16.mxu0 0
        %1976 = vmatpush1.bf16.xpose.msra.mxu0 %v1973
        %1977 = vmatprep.subr.bf16.mxu0 0
        %1978 = vmatpush1.bf16.xpose.msra.mxu0 0
        %1979 = vmatprep.subr.bf16.mxu0 0
        %1980 = vmatpush1.bf16.xpose.msra.mxu0 0
        %1981 = vmatprep.subr.bf16.mxu0 0
        %1982 = vmatpush1.bf16.xpose.msra.mxu0 0
        %1983 = vmatprep.subr.bf16.mxu0 0
        %1984 = vmatpush1.bf16.xpose.msra.mxu0 0
        %1985 = vmatprep.subr.bf16.mxu0 0
        %1986 = vmatpush1.bf16.xpose.msra.mxu0 0
        %1987 = vmatprep.subr.bf16.mxu0 0
        %1988 = vmatpush1.bf16.xpose.msra.mxu0 0
        %1989 = vmatprep.subr.bf16.mxu0 0
        %1990 = vmatpush1.bf16.xpose.msra.mxu0 0
        %1991 = vmatprep.subr.bf16.mxu0 0
        %1992 = vmatpush1.bf16.xpose.msra.mxu0 0
        %1993 = vmatprep.subr.bf16.mxu0 0
        %1994 = vmatpush1.bf16.xpose.msra.mxu0 0
        %1995 = vmatprep.subr.bf16.mxu0 0
        %1996 = vmatpush1.bf16.xpose.msra.mxu0 0
        %1997 = vmatprep.subr.bf16.mxu0 0
        %1998 = vmatpush1.bf16.xpose.msra.mxu0 0
        %1999 = vmatprep.subr.bf16.mxu0 0
        %2000 = vmatpush1.bf16.xpose.msra.mxu0 0
        %2001 = vmatprep.subr.bf16.mxu0 0
        %2002 = vmatpush1.bf16.xpose.msra.mxu0 0
        %2003 = vmatprep.subr.bf16.mxu0 0
        %2004 = vmatpush1.bf16.xpose.msra.mxu0 0
        %2005 = vmatprep.subr.bf16.mxu0 0
        %2006 = vmatpush1.bf16.xpose.msra.mxu0 0
        %2007 = vmatprep.mubr.bf16.mxu0 0
        %2008 = vmatmul.mubr.bf16.gmra.mrb[0].mxu0 %v1972
        %v2009 = vpop.f32.mrb[0].mxu0
        %v2010 = vadd.f32 0.0, %v2009
        %v2011 = vpop.f32.mrb[0].mxu0
        %v2012 = vpop.f32.mrb[0].mxu0
        %v2013 = vpop.f32.mrb[0].mxu0
        %2014 = vdwg.mxu0
        %v2015 = vsel %vm1807, %v2010, -inf
        %2016 = vmax.xlane.f32.xlu0 %v2015
        %v2017 = vpop.xlane.xlu0 %2016
        %v2018 = vsub.f32 %v2010, %v2017
        %v2019 = vmul.f32 %v2018, 1.442695
        %v2020 = vpow.pop %v2019
        %v2021 = vsel %vm1807, %v2020, 0.0
        %2022 = vadd.xlane.f32.xlu0 %v2021
        %v2023 = vpop.xlane.xlu0 %2022
        %v2024 = vrcp.pop %v2023
        %v2025 = vmul.f32 %v2020, %v2024
        %v2026 = vpack.c.bf16 %v2025, %v2025
        %v2028 = vsel %vm1820, %v2026, 0
        %v2031 = vand.u32 %v1974, %v1827
        %2033 = vmatprep.subr.bf16.mxu0 0
        %2034 = vmatpush1.bf16.msra.mxu0 %v2031
        %2035 = vmatprep.subr.bf16.mxu0 0
        %2036 = vmatpush1.bf16.msra.mxu0 0
        %2037 = vmatprep.subr.bf16.mxu0 0
        %2038 = vmatpush1.bf16.msra.mxu0 0
        %2039 = vmatprep.subr.bf16.mxu0 0
        %2040 = vmatpush1.bf16.msra.mxu0 0
        %2041 = vmatprep.subr.bf16.mxu0 0
        %2042 = vmatpush1.bf16.msra.mxu0 0
        %2043 = vmatprep.subr.bf16.mxu0 0
        %2044 = vmatpush1.bf16.msra.mxu0 0
        %2045 = vmatprep.subr.bf16.mxu0 0
        %2046 = vmatpush1.bf16.msra.mxu0 0
        %2047 = vmatprep.subr.bf16.mxu0 0
        %2048 = vmatpush1.bf16.msra.mxu0 0
        %2049 = vmatprep.subr.bf16.mxu0 0
        %2050 = vmatpush1.bf16.msra.mxu0 0
        %2051 = vmatprep.subr.bf16.mxu0 0
        %2052 = vmatpush1.bf16.msra.mxu0 0
        %2053 = vmatprep.subr.bf16.mxu0 0
        %2054 = vmatpush1.bf16.msra.mxu0 0
        %2055 = vmatprep.subr.bf16.mxu0 0
        %2056 = vmatpush1.bf16.msra.mxu0 0
        %2057 = vmatprep.subr.bf16.mxu0 0
        %2058 = vmatpush1.bf16.msra.mxu0 0
        %2059 = vmatprep.subr.bf16.mxu0 0
        %2060 = vmatpush1.bf16.msra.mxu0 0
        %2061 = vmatprep.subr.bf16.mxu0 0
        %2062 = vmatpush1.bf16.msra.mxu0 0
        %2063 = vmatprep.subr.bf16.mxu0 0
        %2064 = vmatpush1.bf16.msra.mxu0 0
        %2065 = vmatprep.mubr.bf16.mxu0 0
        %2066 = vmatmul.mubr.bf16.gmra.mrb[0].mxu0 %v2028
        %v2067 = vpop.f32.mrb[0].mxu0
        %v2068 = vadd.f32 0.0, %v2067
        %v2069 = vpop.f32.mrb[0].mxu0
        %v2070 = vpop.f32.mrb[0].mxu0
        %v2071 = vpop.f32.mrb[0].mxu0
        %2072 = vdwg.mxu0
        %v2073 = vpack.c.bf16 %v1596, %v1596
        %v2074 = vpack.c.bf16 %v1678, %v1678
        %v2075 = vpack.c.bf16 %v1760, %v1760
        %2076 = vmatprep.subr.bf16.mxu0 0
        %2077 = vmatpush1.bf16.xpose.msra.mxu0 %v2074
        %2078 = vmatprep.subr.bf16.mxu0 0
        %2079 = vmatpush1.bf16.xpose.msra.mxu0 0
        %2080 = vmatprep.subr.bf16.mxu0 0
        %2081 = vmatpush1.bf16.xpose.msra.mxu0 0
        %2082 = vmatprep.subr.bf16.mxu0 0
        %2083 = vmatpush1.bf16.xpose.msra.mxu0 0
        %2084 = vmatprep.subr.bf16.mxu0 0
        %2085 = vmatpush1.bf16.xpose.msra.mxu0 0
        %2086 = vmatprep.subr.bf16.mxu0 0
        %2087 = vmatpush1.bf16.xpose.msra.mxu0 0
        %2088 = vmatprep.subr.bf16.mxu0 0
        %2089 = vmatpush1.bf16.xpose.msra.mxu0 0
        %2090 = vmatprep.subr.bf16.mxu0 0
        %2091 = vmatpush1.bf16.xpose.msra.mxu0 0
        %2092 = vmatprep.subr.bf16.mxu0 0
        %2093 = vmatpush1.bf16.xpose.msra.mxu0 0
        %2094 = vmatprep.subr.bf16.mxu0 0
        %2095 = vmatpush1.bf16.xpose.msra.mxu0 0
        %2096 = vmatprep.subr.bf16.mxu0 0
        %2097 = vmatpush1.bf16.xpose.msra.mxu0 0
        %2098 = vmatprep.subr.bf16.mxu0 0
        %2099 = vmatpush1.bf16.xpose.msra.mxu0 0
        %2100 = vmatprep.subr.bf16.mxu0 0
        %2101 = vmatpush1.bf16.xpose.msra.mxu0 0
        %2102 = vmatprep.subr.bf16.mxu0 0
        %2103 = vmatpush1.bf16.xpose.msra.mxu0 0
        %2104 = vmatprep.subr.bf16.mxu0 0
        %2105 = vmatpush1.bf16.xpose.msra.mxu0 0
        %2106 = vmatprep.subr.bf16.mxu0 0
        %2107 = vmatpush1.bf16.xpose.msra.mxu0 0
        %2108 = vmatprep.mubr.bf16.mxu0 0
        %2109 = vmatmul.mubr.bf16.gmra.mrb[0].mxu0 %v2073
        %v2110 = vpop.f32.mrb[0].mxu0
        %v2111 = vadd.f32 0.0, %v2110
        %v2112 = vpop.f32.mrb[0].mxu0
        %v2113 = vpop.f32.mrb[0].mxu0
        %v2114 = vpop.f32.mrb[0].mxu0
        %2115 = vdwg.mxu0
        %v2116 = vsel %vm1807, %v2111, -inf
        %2117 = vmax.xlane.f32.xlu0 %v2116
        %v2118 = vpop.xlane.xlu0 %2117
        %v2119 = vsub.f32 %v2111, %v2118
        %v2120 = vmul.f32 %v2119, 1.442695
        %v2121 = vpow.pop %v2120
        %v2122 = vsel %vm1807, %v2121, 0.0
        %2123 = vadd.xlane.f32.xlu0 %v2122
        %v2124 = vpop.xlane.xlu0 %2123
        %v2125 = vrcp.pop %v2124
        %v2126 = vmul.f32 %v2121, %v2125
        %v2127 = vpack.c.bf16 %v2126, %v2126
        %v2129 = vsel %vm1820, %v2127, 0
        %v2132 = vand.u32 %v2075, %v1827
        %2134 = vmatprep.subr.bf16.mxu0 0
        %2135 = vmatpush1.bf16.msra.mxu0 %v2132
        %2136 = vmatprep.subr.bf16.mxu0 0
        %2137 = vmatpush1.bf16.msra.mxu0 0
        %2138 = vmatprep.subr.bf16.mxu0 0
        %2139 = vmatpush1.bf16.msra.mxu0 0
        %2140 = vmatprep.subr.bf16.mxu0 0
        %2141 = vmatpush1.bf16.msra.mxu0 0
        %2142 = vmatprep.subr.bf16.mxu0 0
        %2143 = vmatpush1.bf16.msra.mxu0 0
        %2144 = vmatprep.subr.bf16.mxu0 0
        %2145 = vmatpush1.bf16.msra.mxu0 0
        %2146 = vmatprep.subr.bf16.mxu0 0
        %2147 = vmatpush1.bf16.msra.mxu0 0
        %2148 = vmatprep.subr.bf16.mxu0 0
        %2149 = vmatpush1.bf16.msra.mxu0 0
        %2150 = vmatprep.subr.bf16.mxu0 0
        %2151 = vmatpush1.bf16.msra.mxu0 0
        %2152 = vmatprep.subr.bf16.mxu0 0
        %2153 = vmatpush1.bf16.msra.mxu0 0
        %2154 = vmatprep.subr.bf16.mxu0 0
        %2155 = vmatpush1.bf16.msra.mxu0 0
        %2156 = vmatprep.subr.bf16.mxu0 0
        %2157 = vmatpush1.bf16.msra.mxu0 0
        %2158 = vmatprep.subr.bf16.mxu0 0
        %2159 = vmatpush1.bf16.msra.mxu0 0
        %2160 = vmatprep.subr.bf16.mxu0 0
        %2161 = vmatpush1.bf16.msra.mxu0 0
        %2162 = vmatprep.subr.bf16.mxu0 0
        %2163 = vmatpush1.bf16.msra.mxu0 0
        %2164 = vmatprep.subr.bf16.mxu0 0
        %2165 = vmatpush1.bf16.msra.mxu0 0
        %2166 = vmatprep.mubr.bf16.mxu0 0
        %2167 = vmatmul.mubr.bf16.gmra.mrb[0].mxu0 %v2129
        %v2168 = vpop.f32.mrb[0].mxu0
        %v2169 = vadd.f32 0.0, %v2168
        %v2170 = vpop.f32.mrb[0].mxu0
        %v2171 = vpop.f32.mrb[0].mxu0
        %v2172 = vpop.f32.mrb[0].mxu0
        %2173 = vdwg.mxu0
        %v2174 = vpack.c.bf16 %v1866, %v1866
        %v2175 = vpack.c.bf16 %v1967, %v1967
        %v2176 = vpack.c.bf16 %v2068, %v2068
        %v2177 = vpack.c.bf16 %v2169, %v2169
        %v2178 = vld [vmem:[%s7] sm:$0xf]
        %v2179 = vld [vmem:[%s7 + $0x4] sm:$0xf]
        %v2180 = vld [vmem:[%s7 + $0x8] sm:$0xf]
        %v2181 = vld [vmem:[%s7 + $0xc] sm:$0xf]
        %v2182 = vld [vmem:[%s7 + $0x10] sm:$0xf]
        %v2183 = vld [vmem:[%s7 + $0x14] sm:$0xf]
        %v2184 = vld [vmem:[%s7 + $0x18] sm:$0xf]
        %v2185 = vld [vmem:[%s7 + $0x1c] sm:$0xf]
        %v2186 = vld [vmem:[%s7 + $0x20] sm:$0xf]
        %v2187 = vld [vmem:[%s7 + $0x24] sm:$0xf]
        %v2188 = vld [vmem:[%s7 + $0x28] sm:$0xf]
        %v2189 = vld [vmem:[%s7 + $0x2c] sm:$0xf]
        %v2190 = vld [vmem:[%s7 + $0x30] sm:$0xf]
        %v2191 = vld [vmem:[%s7 + $0x34] sm:$0xf]
        %v2192 = vld [vmem:[%s7 + $0x38] sm:$0xf]
        %v2193 = vld [vmem:[%s7 + $0x3c] sm:$0xf]
        %v2194 = vld [vmem:[%s7 + $0x40] sm:$0xf]
        %v2195 = vld [vmem:[%s7 + $0x44] sm:$0xf]
        %v2196 = vld [vmem:[%s7 + $0x48] sm:$0xf]
        %v2197 = vld [vmem:[%s7 + $0x4c] sm:$0xf]
        %v2198 = vld [vmem:[%s7 + $0x50] sm:$0xf]
        %v2199 = vld [vmem:[%s7 + $0x54] sm:$0xf]
        %v2200 = vld [vmem:[%s7 + $0x58] sm:$0xf]
        %v2201 = vld [vmem:[%s7 + $0x5c] sm:$0xf]
        %v2202 = vld [vmem:[%s7 + $0x60] sm:$0xf]
        %v2203 = vld [vmem:[%s7 + $0x64] sm:$0xf]
        %v2204 = vld [vmem:[%s7 + $0x68] sm:$0xf]
        %v2205 = vld [vmem:[%s7 + $0x6c] sm:$0xf]
        %v2206 = vld [vmem:[%s7 + $0x70] sm:$0xf]
        %v2207 = vld [vmem:[%s7 + $0x74] sm:$0xf]
        %v2208 = vld [vmem:[%s7 + $0x78] sm:$0xf]
        %v2209 = vld [vmem:[%s7 + $0x7c] sm:$0xf]
        %v2210 = vld [vmem:[%s7 + $0x80] sm:$0xf]
        %v2211 = vld [vmem:[%s7 + $0x84] sm:$0xf]
        %v2212 = vld [vmem:[%s7 + $0x88] sm:$0xf]
        %v2213 = vld [vmem:[%s7 + $0x8c] sm:$0xf]
        %v2214 = vld [vmem:[%s7 + $0x90] sm:$0xf]
        %v2215 = vld [vmem:[%s7 + $0x94] sm:$0xf]
        %v2216 = vld [vmem:[%s7 + $0x98] sm:$0xf]
        %v2217 = vld [vmem:[%s7 + $0x9c] sm:$0xf]
        %v2218 = vld [vmem:[%s7 + $0xa0] sm:$0xf]
        %v2219 = vld [vmem:[%s7 + $0xa4] sm:$0xf]
        %v2220 = vld [vmem:[%s7 + $0xa8] sm:$0xf]
        %v2221 = vld [vmem:[%s7 + $0xac] sm:$0xf]
        %v2222 = vld [vmem:[%s7 + $0xb0] sm:$0xf]
        %v2223 = vld [vmem:[%s7 + $0xb4] sm:$0xf]
        %v2224 = vld [vmem:[%s7 + $0xb8] sm:$0xf]
        %v2225 = vld [vmem:[%s7 + $0xbc] sm:$0xf]
        %v2226 = vld [vmem:[%s7 + $0xc0] sm:$0xf]
        %v2227 = vld [vmem:[%s7 + $0xc4] sm:$0xf]
        %v2228 = vld [vmem:[%s7 + $0xc8] sm:$0xf]
        %v2229 = vld [vmem:[%s7 + $0xcc] sm:$0xf]
        %v2230 = vld [vmem:[%s7 + $0xd0] sm:$0xf]
        %v2231 = vld [vmem:[%s7 + $0xd4] sm:$0xf]
        %v2232 = vld [vmem:[%s7 + $0xd8] sm:$0xf]
        %v2233 = vld [vmem:[%s7 + $0xdc] sm:$0xf]
        %v2234 = vld [vmem:[%s7 + $0xe0] sm:$0xf]
        %v2235 = vld [vmem:[%s7 + $0xe4] sm:$0xf]
        %v2236 = vld [vmem:[%s7 + $0xe8] sm:$0xf]
        %v2237 = vld [vmem:[%s7 + $0xec] sm:$0xf]
        %v2238 = vld [vmem:[%s7 + $0xf0] sm:$0xf]
        %v2239 = vld [vmem:[%s7 + $0xf4] sm:$0xf]
        %v2240 = vld [vmem:[%s7 + $0xf8] sm:$0xf]
        %v2241 = vld [vmem:[%s7 + $0xfc] sm:$0xf]
        %v2242 = vld [vmem:[%s8] sm:$0x1]
        %v2244 = vlaneseq
        %v2245 = vshrl.u32 %v2244, 7
        %v2246 = vsub.s32 0, %v2245
        %v2247 = vrot.slane %v2242, %v2246
        %v2313 = vunpack.c.l.b16 %v2178
        %v2314 = vunpack.c.l.b16 %v2179
        %v2315 = vunpack.c.l.b16 %v2180
        %v2316 = vunpack.c.l.b16 %v2181
        %v2317 = vunpack.c.l.b16 %v2182
        %v2318 = vunpack.c.l.b16 %v2183
        %v2319 = vunpack.c.l.b16 %v2184
        %v2320 = vunpack.c.l.b16 %v2185
        %v2321 = vunpack.c.l.b16 %v2186
        %v2322 = vunpack.c.l.b16 %v2187
        %v2323 = vunpack.c.l.b16 %v2188
        %v2324 = vunpack.c.l.b16 %v2189
        %v2325 = vunpack.c.l.b16 %v2190
        %v2326 = vunpack.c.l.b16 %v2191
        %v2327 = vunpack.c.l.b16 %v2192
        %v2328 = vunpack.c.l.b16 %v2193
        %v2329 = vunpack.c.l.b16 %v2194
        %v2330 = vunpack.c.l.b16 %v2195
        %v2331 = vunpack.c.l.b16 %v2196
        %v2332 = vunpack.c.l.b16 %v2197
        %v2333 = vunpack.c.l.b16 %v2198
        %v2334 = vunpack.c.l.b16 %v2199
        %v2335 = vunpack.c.l.b16 %v2200
        %v2336 = vunpack.c.l.b16 %v2201
        %v2337 = vunpack.c.l.b16 %v2202
        %v2338 = vunpack.c.l.b16 %v2203
        %v2339 = vunpack.c.l.b16 %v2204
        %v2340 = vunpack.c.l.b16 %v2205
        %v2341 = vunpack.c.l.b16 %v2206
        %v2342 = vunpack.c.l.b16 %v2207
        %v2343 = vunpack.c.l.b16 %v2208
        %v2344 = vunpack.c.l.b16 %v2209
        %v2345 = vunpack.c.l.b16 %v2210
        %v2346 = vunpack.c.l.b16 %v2211
        %v2347 = vunpack.c.l.b16 %v2212
        %v2348 = vunpack.c.l.b16 %v2213
        %v2349 = vunpack.c.l.b16 %v2214
        %v2350 = vunpack.c.l.b16 %v2215
        %v2351 = vunpack.c.l.b16 %v2216
        %v2352 = vunpack.c.l.b16 %v2217
        %v2353 = vunpack.c.l.b16 %v2218
        %v2354 = vunpack.c.l.b16 %v2219
        %v2355 = vunpack.c.l.b16 %v2220
        %v2356 = vunpack.c.l.b16 %v2221
        %v2357 = vunpack.c.l.b16 %v2222
        %v2358 = vunpack.c.l.b16 %v2223
        %v2359 = vunpack.c.l.b16 %v2224
        %v2360 = vunpack.c.l.b16 %v2225
        %v2361 = vunpack.c.l.b16 %v2226
        %v2362 = vunpack.c.l.b16 %v2227
        %v2363 = vunpack.c.l.b16 %v2228
        %v2364 = vunpack.c.l.b16 %v2229
        %v2365 = vunpack.c.l.b16 %v2230
        %v2366 = vunpack.c.l.b16 %v2231
        %v2367 = vunpack.c.l.b16 %v2232
        %v2368 = vunpack.c.l.b16 %v2233
        %v2369 = vunpack.c.l.b16 %v2234
        %v2370 = vunpack.c.l.b16 %v2235
        %v2371 = vunpack.c.l.b16 %v2236
        %v2372 = vunpack.c.l.b16 %v2237
        %v2373 = vunpack.c.l.b16 %v2238
        %v2374 = vunpack.c.l.b16 %v2239
        %v2375 = vunpack.c.l.b16 %v2240
        %v2376 = vunpack.c.l.b16 %v2241
        %v2377 = vpack.c.b16 %v2314, %v2313
        %v2378 = vpack.c.b16 %v2316, %v2315
        %v2379 = vpack.c.b16 %v2318, %v2317
        %v2380 = vpack.c.b16 %v2320, %v2319
        %v2381 = vpack.c.b16 %v2322, %v2321
        %v2382 = vpack.c.b16 %v2324, %v2323
        %v2383 = vpack.c.b16 %v2326, %v2325
        %v2384 = vpack.c.b16 %v2328, %v2327
        %v2385 = vpack.c.b16 %v2330, %v2329
        %v2386 = vpack.c.b16 %v2332, %v2331
        %v2387 = vpack.c.b16 %v2334, %v2333
        %v2388 = vpack.c.b16 %v2336, %v2335
        %v2389 = vpack.c.b16 %v2338, %v2337
        %v2390 = vpack.c.b16 %v2340, %v2339
        %v2391 = vpack.c.b16 %v2342, %v2341
        %v2392 = vpack.c.b16 %v2344, %v2343
        %v2393 = vpack.c.b16 %v2346, %v2345
        %v2394 = vpack.c.b16 %v2348, %v2347
        %v2395 = vpack.c.b16 %v2350, %v2349
        %v2396 = vpack.c.b16 %v2352, %v2351
        %v2397 = vpack.c.b16 %v2354, %v2353
        %v2398 = vpack.c.b16 %v2356, %v2355
        %v2399 = vpack.c.b16 %v2358, %v2357
        %v2400 = vpack.c.b16 %v2360, %v2359
        %v2401 = vpack.c.b16 %v2362, %v2361
        %v2402 = vpack.c.b16 %v2364, %v2363
        %v2403 = vpack.c.b16 %v2366, %v2365
        %v2404 = vpack.c.b16 %v2368, %v2367
        %v2405 = vpack.c.b16 %v2370, %v2369
        %v2406 = vpack.c.b16 %v2372, %v2371
        %v2407 = vpack.c.b16 %v2374, %v2373
        %v2408 = vpack.c.b16 %v2376, %v2375
        %2441 = vmatprep.subr.bf16.mxu0 0
        %2442 = vmatpush1.bf16.msra.mxu0 %v2377
        %2443 = vmatprep.subr.bf16.mxu0 0
        %2444 = vmatpush1.bf16.msra.mxu0 %v2378
        %2445 = vmatprep.subr.bf16.mxu0 0
        %2446 = vmatpush1.bf16.msra.mxu0 %v2379
        %2447 = vmatprep.subr.bf16.mxu0 0
        %2448 = vmatpush1.bf16.msra.mxu0 %v2380
        %2449 = vmatprep.subr.bf16.mxu0 0
        %2450 = vmatpush1.bf16.msra.mxu0 %v2381
        %2451 = vmatprep.subr.bf16.mxu0 0
        %2452 = vmatpush1.bf16.msra.mxu0 %v2382
        %2453 = vmatprep.subr.bf16.mxu0 0
        %2454 = vmatpush1.bf16.msra.mxu0 %v2383
        %2455 = vmatprep.subr.bf16.mxu0 0
        %2456 = vmatpush1.bf16.msra.mxu0 %v2384
        %2457 = vmatprep.subr.bf16.mxu0 0
        %2458 = vmatpush1.bf16.msra.mxu0 %v2385
        %2459 = vmatprep.subr.bf16.mxu0 0
        %2460 = vmatpush1.bf16.msra.mxu0 %v2386
        %2461 = vmatprep.subr.bf16.mxu0 0
        %2462 = vmatpush1.bf16.msra.mxu0 %v2387
        %2463 = vmatprep.subr.bf16.mxu0 0
        %2464 = vmatpush1.bf16.msra.mxu0 %v2388
        %2465 = vmatprep.subr.bf16.mxu0 0
        %2466 = vmatpush1.bf16.msra.mxu0 %v2389
        %2467 = vmatprep.subr.bf16.mxu0 0
        %2468 = vmatpush1.bf16.msra.mxu0 %v2390
        %2469 = vmatprep.subr.bf16.mxu0 0
        %2470 = vmatpush1.bf16.msra.mxu0 %v2391
        %2471 = vmatprep.subr.bf16.mxu0 0
        %2472 = vmatpush1.bf16.msra.mxu0 %v2392
        %2473 = vmatprep.mubr.bf16.mxu0 %v2175
        %2474 = vmatmul.mubr.bf16.gmra.mrb[0].mxu0 %v2174
        %v2475 = vpop.f32.mrb[0].mxu0
        %v2476 = vadd.f32 %v2247, %v2475
        %v2477 = vpop.f32.mrb[0].mxu0
        %v2478 = vpop.f32.mrb[0].mxu0
        %v2479 = vpop.f32.mrb[0].mxu0
        %2480 = vdwg.mxu0
        %2481 = vmatprep.subr.bf16.mxu0 0
        %2482 = vmatpush1.bf16.msra.mxu0 %v2393
        %2483 = vmatprep.subr.bf16.mxu0 0
        %2484 = vmatpush1.bf16.msra.mxu0 %v2394
        %2485 = vmatprep.subr.bf16.mxu0 0
        %2486 = vmatpush1.bf16.msra.mxu0 %v2395
        %2487 = vmatprep.subr.bf16.mxu0 0
        %2488 = vmatpush1.bf16.msra.mxu0 %v2396
        %2489 = vmatprep.subr.bf16.mxu0 0
        %2490 = vmatpush1.bf16.msra.mxu0 %v2397
        %2491 = vmatprep.subr.bf16.mxu0 0
        %2492 = vmatpush1.bf16.msra.mxu0 %v2398
        %2493 = vmatprep.subr.bf16.mxu0 0
        %2494 = vmatpush1.bf16.msra.mxu0 %v2399
        %2495 = vmatprep.subr.bf16.mxu0 0
        %2496 = vmatpush1.bf16.msra.mxu0 %v2400
        %2497 = vmatprep.subr.bf16.mxu0 0
        %2498 = vmatpush1.bf16.msra.mxu0 %v2401
        %2499 = vmatprep.subr.bf16.mxu0 0
        %2500 = vmatpush1.bf16.msra.mxu0 %v2402
        %2501 = vmatprep.subr.bf16.mxu0 0
        %2502 = vmatpush1.bf16.msra.mxu0 %v2403
        %2503 = vmatprep.subr.bf16.mxu0 0
        %2504 = vmatpush1.bf16.msra.mxu0 %v2404
        %2505 = vmatprep.subr.bf16.mxu0 0
        %2506 = vmatpush1.bf16.msra.mxu0 %v2405
        %2507 = vmatprep.subr.bf16.mxu0 0
        %2508 = vmatpush1.bf16.msra.mxu0 %v2406
        %2509 = vmatprep.subr.bf16.mxu0 0
        %2510 = vmatpush1.bf16.msra.mxu0 %v2407
        %2511 = vmatprep.subr.bf16.mxu0 0
        %2512 = vmatpush1.bf16.msra.mxu0 %v2408
        %2513 = vmatprep.mubr.bf16.mxu0 %v2177
        %2514 = vmatmul.mubr.bf16.gmra.mrb[0].mxu0 %v2176
        %v2515 = vpop.f32.mrb[0].mxu0
        %v2516 = vadd.f32 %v2476, %v2515
        %v2517 = vpop.f32.mrb[0].mxu0
        %v2518 = vpop.f32.mrb[0].mxu0
        %v2519 = vpop.f32.mrb[0].mxu0
        %2520 = vdwg.mxu0
        %v2521 = vadd.f32 %v1125, %v2516
        %v2522 = vld [vmem:[%s9] sm:$0x1]
        %v2523 = vld [vmem:[%s10] sm:$0x1]
        %v2524 = vsel %vm1132, %v2521, 0.0
        %2525 = vadd.xlane.f32.xlu0 %v2524
        %v2526 = vpop.xlane.xlu0 %2525
        %v2527 = vmul.f32 %v2526, %v1136
        %v2528 = vsub.f32 %v2521, %v2527
        %v2529 = vmul.f32 %v2528, %v2528
        %v2530 = vsel %vm1132, %v2529, 0.0
        %2531 = vadd.xlane.f32.xlu0 %v2530
        %v2532 = vpop.xlane.xlu0 %2531
        %v2533 = vmul.f32 %v2532, %v1136
        %v2534 = vadd.f32 %v2533, 1e-12
        %v2535 = vrsqrt.pop %v2534
        %v2536 = vmul.f32 %v2528, %v2535
        %v2538 = vlaneseq
        %v2539 = vshrl.u32 %v2538, 7
        %v2540 = vsub.s32 0, %v2539
        %v2541 = vrot.slane %v2522, %v2540
        %v2543 = vmul.f32 %v2536, %v2541
        %v2545 = vlaneseq
        %v2546 = vshrl.u32 %v2545, 7
        %v2547 = vsub.s32 0, %v2546
        %v2548 = vrot.slane %v2523, %v2547
        %v2550 = vadd.f32 %v2543, %v2548
        %v2551 = vpack.c.bf16 %v2550, %v2550
        %v2552 = vld [vmem:[%s11] sm:$0xf]
        %v2553 = vld [vmem:[%s11 + $0x4] sm:$0xf]
        %v2554 = vld [vmem:[%s11 + $0x8] sm:$0xf]
        %v2555 = vld [vmem:[%s11 + $0xc] sm:$0xf]
        %v2556 = vld [vmem:[%s11 + $0x10] sm:$0xf]
        %v2557 = vld [vmem:[%s11 + $0x14] sm:$0xf]
        %v2558 = vld [vmem:[%s11 + $0x18] sm:$0xf]
        %v2559 = vld [vmem:[%s11 + $0x1c] sm:$0xf]
        %v2560 = vld [vmem:[%s12] sm:$0x1]
        %v2562 = vlaneseq
        %v2563 = vshrl.u32 %v2562, 7
        %v2564 = vsub.s32 0, %v2563
        %v2565 = vrot.slane %v2560, %v2564
        %v2575 = vunpack.c.l.b16 %v2552
        %v2576 = vunpack.c.l.b16 %v2553
        %v2577 = vunpack.c.l.b16 %v2554
        %v2578 = vunpack.c.l.b16 %v2555
        %v2579 = vunpack.c.l.b16 %v2556
        %v2580 = vunpack.c.l.b16 %v2557
        %v2581 = vunpack.c.l.b16 %v2558
        %v2582 = vunpack.c.l.b16 %v2559
        %v2583 = vpack.c.b16 %v2576, %v2575
        %v2584 = vpack.c.b16 %v2578, %v2577
        %v2585 = vpack.c.b16 %v2580, %v2579
        %v2586 = vpack.c.b16 %v2582, %v2581
        %v2592 = vsel %vm1514, %v2551, 0
        %2594 = vmatprep.subr.bf16.mxu0 0
        %2595 = vmatpush1.bf16.msra.mxu0 %v2583
        %2596 = vmatprep.subr.bf16.mxu0 0
        %2597 = vmatpush1.bf16.msra.mxu0 %v2584
        %2598 = vmatprep.subr.bf16.mxu0 0
        %2599 = vmatpush1.bf16.msra.mxu0 %v2585
        %2600 = vmatprep.subr.bf16.mxu0 0
        %2601 = vmatpush1.bf16.msra.mxu0 %v2586
        %2602 = vmatprep.subr.bf16.mxu0 0
        %2603 = vmatpush1.bf16.msra.mxu0 0
        %2604 = vmatprep.subr.bf16.mxu0 0
        %2605 = vmatpush1.bf16.msra.mxu0 0
        %2606 = vmatprep.subr.bf16.mxu0 0
        %2607 = vmatpush1.bf16.msra.mxu0 0
        %2608 = vmatprep.subr.bf16.mxu0 0
        %2609 = vmatpush1.bf16.msra.mxu0 0
        %2610 = vmatprep.subr.bf16.mxu0 0
        %2611 = vmatpush1.bf16.msra.mxu0 0
        %2612 = vmatprep.subr.bf16.mxu0 0
        %2613 = vmatpush1.bf16.msra.mxu0 0
        %2614 = vmatprep.subr.bf16.mxu0 0
        %2615 = vmatpush1.bf16.msra.mxu0 0
        %2616 = vmatprep.subr.bf16.mxu0 0
        %2617 = vmatpush1.bf16.msra.mxu0 0
        %2618 = vmatprep.subr.bf16.mxu0 0
        %2619 = vmatpush1.bf16.msra.mxu0 0
        %2620 = vmatprep.subr.bf16.mxu0 0
        %2621 = vmatpush1.bf16.msra.mxu0 0
        %2622 = vmatprep.subr.bf16.mxu0 0
        %2623 = vmatpush1.bf16.msra.mxu0 0
        %2624 = vmatprep.subr.bf16.mxu0 0
        %2625 = vmatpush1.bf16.msra.mxu0 0
        %2626 = vmatprep.mubr.bf16.mxu0 0
        %2627 = vmatmul.mubr.bf16.gmra.mrb[0].mxu0 %v2592
        %v2628 = vpop.f32.mrb[0].mxu0
        %v2629 = vadd.f32 %v2565, %v2628
        %v2630 = vpop.f32.mrb[0].mxu0
        %v2631 = vpop.f32.mrb[0].mxu0
        %v2632 = vpop.f32.mrb[0].mxu0
        %2633 = vdwg.mxu0
        %v2634 = vmul.f32 %v2629, 0.5
        %v2635 = vmul.f32 %v2629, 0.044715
        %v2636 = vmul.f32 %v2635, %v2629
        %v2637 = vmul.f32 %v2636, %v2629
        %v2638 = vadd.f32 %v2629, %v2637
        %v2639 = vmul.f32 %v2638, 0.7978846
        %v2640 = vtanh.pop %v2639
        %v2641 = vadd.f32 %v2640, 1.0
        %v2642 = vmul.f32 %v2634, %v2641
        %v2643 = vpack.c.bf16 %v2642, %v2642
        %v2644 = vld [vmem:[%s13] sm:$0xf]
        %v2645 = vld [vmem:[%s13 + $0x4] sm:$0xf]
        %v2646 = vld [vmem:[%s13 + $0x8] sm:$0xf]
        %v2647 = vld [vmem:[%s13 + $0xc] sm:$0xf]
        %v2648 = vld [vmem:[%s13 + $0x10] sm:$0xf]
        %v2649 = vld [vmem:[%s13 + $0x14] sm:$0xf]
        %v2650 = vld [vmem:[%s13 + $0x18] sm:$0xf]
        %v2651 = vld [vmem:[%s13 + $0x1c] sm:$0xf]
        %v2652 = vld [vmem:[%s13 + $0x20] sm:$0xf]
        %v2653 = vld [vmem:[%s13 + $0x24] sm:$0xf]
        %v2654 = vld [vmem:[%s13 + $0x28] sm:$0xf]
        %v2655 = vld [vmem:[%s13 + $0x2c] sm:$0xf]
        %v2656 = vld [vmem:[%s13 + $0x30] sm:$0xf]
        %v2657 = vld [vmem:[%s13 + $0x34] sm:$0xf]
        %v2658 = vld [vmem:[%s13 + $0x38] sm:$0xf]
        %v2659 = vld [vmem:[%s13 + $0x3c] sm:$0xf]
        %v2660 = vld [vmem:[%s14] sm:$0x1]
        %v2662 = vlaneseq
        %v2663 = vshrl.u32 %v2662, 7
        %v2664 = vsub.s32 0, %v2663
        %v2665 = vrot.slane %v2660, %v2664
        %v2683 = vunpack.c.l.b16 %v2644
        %v2684 = vunpack.c.l.b16 %v2645
        %v2685 = vunpack.c.l.b16 %v2646
        %v2686 = vunpack.c.l.b16 %v2647
        %v2687 = vunpack.c.l.b16 %v2648
        %v2688 = vunpack.c.l.b16 %v2649
        %v2689 = vunpack.c.l.b16 %v2650
        %v2690 = vunpack.c.l.b16 %v2651
        %v2691 = vunpack.c.l.b16 %v2652
        %v2692 = vunpack.c.l.b16 %v2653
        %v2693 = vunpack.c.l.b16 %v2654
        %v2694 = vunpack.c.l.b16 %v2655
        %v2695 = vunpack.c.l.b16 %v2656
        %v2696 = vunpack.c.l.b16 %v2657
        %v2697 = vunpack.c.l.b16 %v2658
        %v2698 = vunpack.c.l.b16 %v2659
        %v2699 = vpack.c.b16 %v2684, %v2683
        %v2700 = vpack.c.b16 %v2686, %v2685
        %v2701 = vpack.c.b16 %v2688, %v2687
        %v2702 = vpack.c.b16 %v2690, %v2689
        %v2703 = vpack.c.b16 %v2692, %v2691
        %v2704 = vpack.c.b16 %v2694, %v2693
        %v2705 = vpack.c.b16 %v2696, %v2695
        %v2706 = vpack.c.b16 %v2698, %v2697
        %2715 = vmatprep.subr.bf16.mxu0 0
        %2716 = vmatpush1.bf16.msra.mxu0 %v2699
        %2717 = vmatprep.subr.bf16.mxu0 0
        %2718 = vmatpush1.bf16.msra.mxu0 %v2700
        %2719 = vmatprep.subr.bf16.mxu0 0
        %2720 = vmatpush1.bf16.msra.mxu0 %v2701
        %2721 = vmatprep.subr.bf16.mxu0 0
        %2722 = vmatpush1.bf16.msra.mxu0 %v2702
        %2723 = vmatprep.subr.bf16.mxu0 0
        %2724 = vmatpush1.bf16.msra.mxu0 %v2703
        %2725 = vmatprep.subr.bf16.mxu0 0
        %2726 = vmatpush1.bf16.msra.mxu0 %v2704
        %2727 = vmatprep.subr.bf16.mxu0 0
        %2728 = vmatpush1.bf16.msra.mxu0 %v2705
        %2729 = vmatprep.subr.bf16.mxu0 0
        %2730 = vmatpush1.bf16.msra.mxu0 %v2706
        %2731 = vmatprep.subr.bf16.mxu0 0
        %2732 = vmatpush1.bf16.msra.mxu0 0
        %2733 = vmatprep.subr.bf16.mxu0 0
        %2734 = vmatpush1.bf16.msra.mxu0 0
        %2735 = vmatprep.subr.bf16.mxu0 0
        %2736 = vmatpush1.bf16.msra.mxu0 0
        %2737 = vmatprep.subr.bf16.mxu0 0
        %2738 = vmatpush1.bf16.msra.mxu0 0
        %2739 = vmatprep.subr.bf16.mxu0 0
        %2740 = vmatpush1.bf16.msra.mxu0 0
        %2741 = vmatprep.subr.bf16.mxu0 0
        %2742 = vmatpush1.bf16.msra.mxu0 0
        %2743 = vmatprep.subr.bf16.mxu0 0
        %2744 = vmatpush1.bf16.msra.mxu0 0
        %2745 = vmatprep.subr.bf16.mxu0 0
        %2746 = vmatpush1.bf16.msra.mxu0 0
        %2747 = vmatprep.mubr.bf16.mxu0 0
        %2748 = vmatmul.mubr.bf16.gmra.mrb[0].mxu0 %v2643
        %v2749 = vpop.f32.mrb[0].mxu0
        %v2750 = vadd.f32 %v2665, %v2749
        %v2751 = vpop.f32.mrb[0].mxu0
        %v2752 = vpop.f32.mrb[0].mxu0
        %v2753 = vpop.f32.mrb[0].mxu0
        %2754 = vdwg.mxu0
        %v2755 = vadd.f32 %v2521, %v2750
        %s2756 = scalar_lea.vmem %s3, 1
        %v2757 = vld [vmem:[%s2756] sm:$0x1]
        %s2758 = scalar_lea.vmem %s4, 1
        %v2759 = vld [vmem:[%s2758] sm:$0x1]
        %v2760 = vsel %vm1132, %v2755, 0.0
        %2761 = vadd.xlane.f32.xlu0 %v2760
        %v2762 = vpop.xlane.xlu0 %2761
        %v2763 = vmul.f32 %v2762, %v1136
        %v2764 = vsub.f32 %v2755, %v2763
        %v2765 = vmul.f32 %v2764, %v2764
        %v2766 = vsel %vm1132, %v2765, 0.0
        %2767 = vadd.xlane.f32.xlu0 %v2766
        %v2768 = vpop.xlane.xlu0 %2767
        %v2769 = vmul.f32 %v2768, %v1136
        %v2770 = vadd.f32 %v2769, 1e-12
        %v2771 = vrsqrt.pop %v2770
        %v2772 = vmul.f32 %v2764, %v2771
        %v2774 = vlaneseq
        %v2775 = vshrl.u32 %v2774, 7
        %v2776 = vsub.s32 0, %v2775
        %v2777 = vrot.slane %v2757, %v2776
        %v2779 = vmul.f32 %v2772, %v2777
        %v2781 = vlaneseq
        %v2782 = vshrl.u32 %v2781, 7
        %v2783 = vsub.s32 0, %v2782
        %v2784 = vrot.slane %v2759, %v2783
        %v2786 = vadd.f32 %v2779, %v2784
        %v2787 = vpack.c.bf16 %v2786, %v2786
        %s2788 = scalar_lea.vmem %s5, 384
        %v2789 = vld [vmem:[%s2788] sm:$0xff]
        %v2790 = vld [vmem:[%s2788 + $0x8] sm:$0xff]
        %v2791 = vld [vmem:[%s2788 + $0x10] sm:$0xff]
        %v2792 = vld [vmem:[%s2788 + $0x18] sm:$0xff]
        %v2793 = vld [vmem:[%s2788 + $0x20] sm:$0xff]
        %v2794 = vld [vmem:[%s2788 + $0x28] sm:$0xff]
        %v2795 = vld [vmem:[%s2788 + $0x30] sm:$0xff]
        %v2796 = vld [vmem:[%s2788 + $0x38] sm:$0xff]
        %v2797 = vld [vmem:[%s2788 + $0x40] sm:$0xff]
        %v2798 = vld [vmem:[%s2788 + $0x48] sm:$0xff]
        %v2799 = vld [vmem:[%s2788 + $0x50] sm:$0xff]
        %v2800 = vld [vmem:[%s2788 + $0x58] sm:$0xff]
        %v2801 = vld [vmem:[%s2788 + $0x60] sm:$0xff]
        %v2802 = vld [vmem:[%s2788 + $0x68] sm:$0xff]
        %v2803 = vld [vmem:[%s2788 + $0x70] sm:$0xff]
        %v2804 = vld [vmem:[%s2788 + $0x78] sm:$0xff]
        %v2805 = vld [vmem:[%s2788 + $0x80] sm:$0xff]
        %v2806 = vld [vmem:[%s2788 + $0x88] sm:$0xff]
        %v2807 = vld [vmem:[%s2788 + $0x90] sm:$0xff]
        %v2808 = vld [vmem:[%s2788 + $0x98] sm:$0xff]
        %v2809 = vld [vmem:[%s2788 + $0xa0] sm:$0xff]
        %v2810 = vld [vmem:[%s2788 + $0xa8] sm:$0xff]
        %v2811 = vld [vmem:[%s2788 + $0xb0] sm:$0xff]
        %v2812 = vld [vmem:[%s2788 + $0xb8] sm:$0xff]
        %v2813 = vld [vmem:[%s2788 + $0xc0] sm:$0xff]
        %v2814 = vld [vmem:[%s2788 + $0xc8] sm:$0xff]
        %v2815 = vld [vmem:[%s2788 + $0xd0] sm:$0xff]
        %v2816 = vld [vmem:[%s2788 + $0xd8] sm:$0xff]
        %v2817 = vld [vmem:[%s2788 + $0xe0] sm:$0xff]
        %v2818 = vld [vmem:[%s2788 + $0xe8] sm:$0xff]
        %v2819 = vld [vmem:[%s2788 + $0xf0] sm:$0xff]
        %v2820 = vld [vmem:[%s2788 + $0xf8] sm:$0xff]
        %v2821 = vld [vmem:[%s2788 + $0x100] sm:$0xff]
        %v2822 = vld [vmem:[%s2788 + $0x108] sm:$0xff]
        %v2823 = vld [vmem:[%s2788 + $0x110] sm:$0xff]
        %v2824 = vld [vmem:[%s2788 + $0x118] sm:$0xff]
        %v2825 = vld [vmem:[%s2788 + $0x120] sm:$0xff]
        %v2826 = vld [vmem:[%s2788 + $0x128] sm:$0xff]
        %v2827 = vld [vmem:[%s2788 + $0x130] sm:$0xff]
        %v2828 = vld [vmem:[%s2788 + $0x138] sm:$0xff]
        %v2829 = vld [vmem:[%s2788 + $0x140] sm:$0xff]
        %v2830 = vld [vmem:[%s2788 + $0x148] sm:$0xff]
        %v2831 = vld [vmem:[%s2788 + $0x150] sm:$0xff]
        %v2832 = vld [vmem:[%s2788 + $0x158] sm:$0xff]
        %v2833 = vld [vmem:[%s2788 + $0x160] sm:$0xff]
        %v2834 = vld [vmem:[%s2788 + $0x168] sm:$0xff]
        %v2835 = vld [vmem:[%s2788 + $0x170] sm:$0xff]
        %v2836 = vld [vmem:[%s2788 + $0x178] sm:$0xff]
        %s2837 = scalar_lea.vmem %s6, 12
        %v2838 = vld [vmem:[%s2837] sm:$0xff]
        %v2839 = vld [vmem:[%s2837 + $0x8] sm:$0xf]
        %v2842 = vlaneseq
        %v2843 = vshrl.u32 %v2842, 7
        %v2844 = vsub.s32 0, %v2843
        %v2845 = vrot.slane %v2838, %v2844
        %v2846 = vlaneseq
        %v2847 = vshrl.u32 %v2846, 7
        %v2848 = vsub.s32 1, %v2847
        %v2849 = vrot.slane %v2838, %v2848
        %v2850 = vlaneseq
        %v2851 = vshrl.u32 %v2850, 7
        %v2852 = vsub.s32 2, %v2851
        %v2853 = vrot.slane %v2838, %v2852
        %v2854 = vlaneseq
        %v2855 = vshrl.u32 %v2854, 7
        %v2856 = vsub.s32 3, %v2855
        %v2857 = vrot.slane %v2838, %v2856
        %v2858 = vlaneseq
        %v2859 = vshrl.u32 %v2858, 7
        %v2860 = vsub.s32 4, %v2859
        %v2861 = vrot.slane %v2838, %v2860
        %v2862 = vlaneseq
        %v2863 = vshrl.u32 %v2862, 7
        %v2864 = vsub.s32 5, %v2863
        %v2865 = vrot.slane %v2838, %v2864
        %v2866 = vlaneseq
        %v2867 = vshrl.u32 %v2866, 7
        %v2868 = vsub.s32 6, %v2867
        %v2869 = vrot.slane %v2838, %v2868
        %v2870 = vlaneseq
        %v2871 = vshrl.u32 %v2870, 7
        %v2872 = vsub.s32 7, %v2871
        %v2873 = vrot.slane %v2838, %v2872
        %v2874 = vlaneseq
        %v2875 = vshrl.u32 %v2874, 7
        %v2876 = vsub.s32 0, %v2875
        %v2877 = vrot.slane %v2839, %v2876
        %v2878 = vlaneseq
        %v2879 = vshrl.u32 %v2878, 7
        %v2880 = vsub.s32 1, %v2879
        %v2881 = vrot.slane %v2839, %v2880
        %v2882 = vlaneseq
        %v2883 = vshrl.u32 %v2882, 7
        %v2884 = vsub.s32 2, %v2883
        %v2885 = vrot.slane %v2839, %v2884
        %v2886 = vlaneseq
        %v2887 = vshrl.u32 %v2886, 7
        %v2888 = vsub.s32 3, %v2887
        %v2889 = vrot.slane %v2839, %v2888
        %v2950 = vunpack.c.l.b16 %v2789
        %v2951 = vunpack.c.h.b16 %v2789
        %v2952 = vunpack.c.l.b16 %v2790
        %v2953 = vunpack.c.h.b16 %v2790
        %v2954 = vunpack.c.l.b16 %v2791
        %v2955 = vunpack.c.h.b16 %v2791
        %v2956 = vunpack.c.l.b16 %v2792
        %v2957 = vunpack.c.h.b16 %v2792
        %v2958 = vunpack.c.l.b16 %v2793
        %v2959 = vunpack.c.h.b16 %v2793
        %v2960 = vunpack.c.l.b16 %v2794
        %v2961 = vunpack.c.h.b16 %v2794
        %v2962 = vunpack.c.l.b16 %v2795
        %v2963 = vunpack.c.h.b16 %v2795
        %v2964 = vunpack.c.l.b16 %v2796
        %v2965 = vunpack.c.h.b16 %v2796
        %v2966 = vunpack.c.l.b16 %v2797
        %v2967 = vunpack.c.h.b16 %v2797
        %v2968 = vunpack.c.l.b16 %v2798
        %v2969 = vunpack.c.h.b16 %v2798
        %v2970 = vunpack.c.l.b16 %v2799
        %v2971 = vunpack.c.h.b16 %v2799
        %v2972 = vunpack.c.l.b16 %v2800
        %v2973 = vunpack.c.h.b16 %v2800
        %v2974 = vunpack.c.l.b16 %v2801
        %v2975 = vunpack.c.h.b16 %v2801
        %v2976 = vunpack.c.l.b16 %v2802
        %v2977 = vunpack.c.h.b16 %v2802
        %v2978 = vunpack.c.l.b16 %v2803
        %v2979 = vunpack.c.h.b16 %v2803
        %v2980 = vunpack.c.l.b16 %v2804
        %v2981 = vunpack.c.h.b16 %v2804
        %v2982 = vunpack.c.l.b16 %v2805
        %v2983 = vunpack.c.h.b16 %v2805
        %v2984 = vunpack.c.l.b16 %v2806
        %v2985 = vunpack.c.h.b16 %v2806
        %v2986 = vunpack.c.l.b16 %v2807
        %v2987 = vunpack.c.h.b16 %v2807
        %v2988 = vunpack.c.l.b16 %v2808
        %v2989 = vunpack.c.h.b16 %v2808
        %v2990 = vunpack.c.l.b16 %v2809
        %v2991 = vunpack.c.h.b16 %v2809
        %v2992 = vunpack.c.l.b16 %v2810
        %v2993 = vunpack.c.h.b16 %v2810
        %v2994 = vunpack.c.l.b16 %v2811
        %v2995 = vunpack.c.h.b16 %v2811
        %v2996 = vunpack.c.l.b16 %v2812
        %v2997 = vunpack.c.h.b16 %v2812
        %v2998 = vunpack.c.l.b16 %v2813
        %v2999 = vunpack.c.h.b16 %v2813
        %v3000 = vunpack.c.l.b16 %v2814
        %v3001 = vunpack.c.h.b16 %v2814
        %v3002 = vunpack.c.l.b16 %v2815
        %v3003 = vunpack.c.h.b16 %v2815
        %v3004 = vunpack.c.l.b16 %v2816
        %v3005 = vunpack.c.h.b16 %v2816
        %v3006 = vunpack.c.l.b16 %v2817
        %v3007 = vunpack.c.h.b16 %v2817
        %v3008 = vunpack.c.l.b16 %v2818
        %v3009 = vunpack.c.h.b16 %v2818
        %v3010 = vunpack.c.l.b16 %v2819
        %v3011 = vunpack.c.h.b16 %v2819
        %v3012 = vunpack.c.l.b16 %v2820
        %v3013 = vunpack.c.h.b16 %v2820
        %v3014 = vunpack.c.l.b16 %v2821
        %v3015 = vunpack.c.h.b16 %v2821
        %v3016 = vunpack.c.l.b16 %v2822
        %v3017 = vunpack.c.h.b16 %v2822
        %v3018 = vunpack.c.l.b16 %v2823
        %v3019 = vunpack.c.h.b16 %v2823
        %v3020 = vunpack.c.l.b16 %v2824
        %v3021 = vunpack.c.h.b16 %v2824
        %v3022 = vunpack.c.l.b16 %v2825
        %v3023 = vunpack.c.h.b16 %v2825
        %v3024 = vunpack.c.l.b16 %v2826
        %v3025 = vunpack.c.h.b16 %v2826
        %v3026 = vunpack.c.l.b16 %v2827
        %v3027 = vunpack.c.h.b16 %v2827
        %v3028 = vunpack.c.l.b16 %v2828
        %v3029 = vunpack.c.h.b16 %v2828
        %v3030 = vunpack.c.l.b16 %v2829
        %v3031 = vunpack.c.h.b16 %v2829
        %v3032 = vunpack.c.l.b16 %v2830
        %v3033 = vunpack.c.h.b16 %v2830
        %v3034 = vunpack.c.l.b16 %v2831
        %v3035 = vunpack.c.h.b16 %v2831
        %v3036 = vunpack.c.l.b16 %v2832
        %v3037 = vunpack.c.h.b16 %v2832
        %v3038 = vunpack.c.l.b16 %v2833
        %v3039 = vunpack.c.h.b16 %v2833
        %v3040 = vunpack.c.l.b16 %v2834
        %v3041 = vunpack.c.h.b16 %v2834
        %v3042 = vunpack.c.l.b16 %v2835
        %v3043 = vunpack.c.h.b16 %v2835
        %v3044 = vunpack.c.l.b16 %v2836
        %v3045 = vunpack.c.h.b16 %v2836
        %v3046 = vpack.c.b16 %v2962, %v2950
        %v3047 = vpack.c.b16 %v2963, %v2951
        %v3048 = vpack.c.b16 %v2964, %v2952
        %v3049 = vpack.c.b16 %v2965, %v2953
        %v3050 = vpack.c.b16 %v2966, %v2954
        %v3051 = vpack.c.b16 %v2967, %v2955
        %v3052 = vpack.c.b16 %v2968, %v2956
        %v3053 = vpack.c.b16 %v2969, %v2957
        %v3054 = vpack.c.b16 %v2970, %v2958
        %v3055 = vpack.c.b16 %v2971, %v2959
        %v3056 = vpack.c.b16 %v2972, %v2960
        %v3057 = vpack.c.b16 %v2973, %v2961
        %v3058 = vpack.c.b16 %v2986, %v2974
        %v3059 = vpack.c.b16 %v2987, %v2975
        %v3060 = vpack.c.b16 %v2988, %v2976
        %v3061 = vpack.c.b16 %v2989, %v2977
        %v3062 = vpack.c.b16 %v2990, %v2978
        %v3063 = vpack.c.b16 %v2991, %v2979
        %v3064 = vpack.c.b16 %v2992, %v2980
        %v3065 = vpack.c.b16 %v2993, %v2981
        %v3066 = vpack.c.b16 %v2994, %v2982
        %v3067 = vpack.c.b16 %v2995, %v2983
        %v3068 = vpack.c.b16 %v2996, %v2984
        %v3069 = vpack.c.b16 %v2997, %v2985
        %v3070 = vpack.c.b16 %v3010, %v2998
        %v3071 = vpack.c.b16 %v3011, %v2999
        %v3072 = vpack.c.b16 %v3012, %v3000
        %v3073 = vpack.c.b16 %v3013, %v3001
        %v3074 = vpack.c.b16 %v3014, %v3002
        %v3075 = vpack.c.b16 %v3015, %v3003
        %v3076 = vpack.c.b16 %v3016, %v3004
        %v3077 = vpack.c.b16 %v3017, %v3005
        %v3078 = vpack.c.b16 %v3018, %v3006
        %v3079 = vpack.c.b16 %v3019, %v3007
        %v3080 = vpack.c.b16 %v3020, %v3008
        %v3081 = vpack.c.b16 %v3021, %v3009
        %v3082 = vpack.c.b16 %v3034, %v3022
        %v3083 = vpack.c.b16 %v3035, %v3023
        %v3084 = vpack.c.b16 %v3036, %v3024
        %v3085 = vpack.c.b16 %v3037, %v3025
        %v3086 = vpack.c.b16 %v3038, %v3026
        %v3087 = vpack.c.b16 %v3039, %v3027
        %v3088 = vpack.c.b16 %v3040, %v3028
        %v3089 = vpack.c.b16 %v3041, %v3029
        %v3090 = vpack.c.b16 %v3042, %v3030
        %v3091 = vpack.c.b16 %v3043, %v3031
        %v3092 = vpack.c.b16 %v3044, %v3032
        %v3093 = vpack.c.b16 %v3045, %v3033
        %v3143 = vsel %vm1514, %v2787, 0
        %3145 = vmatprep.subr.bf16.mxu0 %v3047
        %3146 = vmatpush1.bf16.msra.mxu0 %v3046
        %3147 = vmatprep.subr.bf16.mxu0 %v3059
        %3148 = vmatpush1.bf16.msra.mxu0 %v3058
        %3149 = vmatprep.subr.bf16.mxu0 %v3071
        %3150 = vmatpush1.bf16.msra.mxu0 %v3070
        %3151 = vmatprep.subr.bf16.mxu0 %v3083
        %3152 = vmatpush1.bf16.msra.mxu0 %v3082
        %3153 = vmatprep.subr.bf16.mxu0 0
        %3154 = vmatpush1.bf16.msra.mxu0 0
        %3155 = vmatprep.subr.bf16.mxu0 0
        %3156 = vmatpush1.bf16.msra.mxu0 0
        %3157 = vmatprep.subr.bf16.mxu0 0
        %3158 = vmatpush1.bf16.msra.mxu0 0
        %3159 = vmatprep.subr.bf16.mxu0 0
        %3160 = vmatpush1.bf16.msra.mxu0 0
        %3161 = vmatprep.subr.bf16.mxu0 0
        %3162 = vmatpush1.bf16.msra.mxu0 0
        %3163 = vmatprep.subr.bf16.mxu0 0
        %3164 = vmatpush1.bf16.msra.mxu0 0
        %3165 = vmatprep.subr.bf16.mxu0 0
        %3166 = vmatpush1.bf16.msra.mxu0 0
        %3167 = vmatprep.subr.bf16.mxu0 0
        %3168 = vmatpush1.bf16.msra.mxu0 0
        %3169 = vmatprep.subr.bf16.mxu0 0
        %3170 = vmatpush1.bf16.msra.mxu0 0
        %3171 = vmatprep.subr.bf16.mxu0 0
        %3172 = vmatpush1.bf16.msra.mxu0 0
        %3173 = vmatprep.subr.bf16.mxu0 0
        %3174 = vmatpush1.bf16.msra.mxu0 0
        %3175 = vmatprep.subr.bf16.mxu0 0
        %3176 = vmatpush1.bf16.msra.mxu0 0
        %3177 = vmatprep.mubr.bf16.mxu0 0
        %3178 = vmatmul.mubr.bf16.gmra.mrb[0].mxu0 %v3143
        %v3179 = vpop.f32.mrb[0].mxu0
        %v3180 = vadd.f32 %v2845, %v3179
        %v3181 = vpop.f32.mrb[0].mxu0
        %v3182 = vadd.f32 %v2849, %v3181
        %v3183 = vpop.f32.mrb[0].mxu0
        %v3184 = vpop.f32.mrb[0].mxu0
        %3185 = vdwg.mxu0
        %3186 = vmatprep.subr.bf16.mxu0 %v3049
        %3187 = vmatpush1.bf16.msra.mxu0 %v3048
        %3188 = vmatprep.subr.bf16.mxu0 %v3061
        %3189 = vmatpush1.bf16.msra.mxu0 %v3060
        %3190 = vmatprep.subr.bf16.mxu0 %v3073
        %3191 = vmatpush1.bf16.msra.mxu0 %v3072
        %3192 = vmatprep.subr.bf16.mxu0 %v3085
        %3193 = vmatpush1.bf16.msra.mxu0 %v3084
        %3194 = vmatprep.subr.bf16.mxu0 0
        %3195 = vmatpush1.bf16.msra.mxu0 0
        %3196 = vmatprep.subr.bf16.mxu0 0
        %3197 = vmatpush1.bf16.msra.mxu0 0
        %3198 = vmatprep.subr.bf16.mxu0 0
        %3199 = vmatpush1.bf16.msra.mxu0 0
        %3200 = vmatprep.subr.bf16.mxu0 0
        %3201 = vmatpush1.bf16.msra.mxu0 0
        %3202 = vmatprep.subr.bf16.mxu0 0
        %3203 = vmatpush1.bf16.msra.mxu0 0
        %3204 = vmatprep.subr.bf16.mxu0 0
        %3205 = vmatpush1.bf16.msra.mxu0 0
        %3206 = vmatprep.subr.bf16.mxu0 0
        %3207 = vmatpush1.bf16.msra.mxu0 0
        %3208 = vmatprep.subr.bf16.mxu0 0
        %3209 = vmatpush1.bf16.msra.mxu0 0
        %3210 = vmatprep.subr.bf16.mxu0 0
        %3211 = vmatpush1.bf16.msra.mxu0 0
        %3212 = vmatprep.subr.bf16.mxu0 0
        %3213 = vmatpush1.bf16.msra.mxu0 0
        %3214 = vmatprep.subr.bf16.mxu0 0
        %3215 = vmatpush1.bf16.msra.mxu0 0
        %3216 = vmatprep.subr.bf16.mxu0 0
        %3217 = vmatpush1.bf16.msra.mxu0 0
        %3218 = vmatprep.mubr.bf16.mxu0 0
        %3219 = vmatmul.mubr.bf16.gmra.mrb[0].mxu0 %v3143
        %v3220 = vpop.f32.mrb[0].mxu0
        %v3221 = vadd.f32 %v2853, %v3220
        %v3222 = vpop.f32.mrb[0].mxu0
        %v3223 = vadd.f32 %v2857, %v3222
        %v3224 = vpop.f32.mrb[0].mxu0
        %v3225 = vpop.f32.mrb[0].mxu0
        %3226 = vdwg.mxu0
        %3227 = vmatprep.subr.bf16.mxu0 %v3051
        %3228 = vmatpush1.bf16.msra.mxu0 %v3050
        %3229 = vmatprep.subr.bf16.mxu0 %v3063
        %3230 = vmatpush1.bf16.msra.mxu0 %v3062
        %3231 = vmatprep.subr.bf16.mxu0 %v3075
        %3232 = vmatpush1.bf16.msra.mxu0 %v3074
        %3233 = vmatprep.subr.bf16.mxu0 %v3087
        %3234 = vmatpush1.bf16.msra.mxu0 %v3086
        %3235 = vmatprep.subr.bf16.mxu0 0
        %3236 = vmatpush1.bf16.msra.mxu0 0
        %3237 = vmatprep.subr.bf16.mxu0 0
        %3238 = vmatpush1.bf16.msra.mxu0 0
        %3239 = vmatprep.subr.bf16.mxu0 0
        %3240 = vmatpush1.bf16.msra.mxu0 0
        %3241 = vmatprep.subr.bf16.mxu0 0
        %3242 = vmatpush1.bf16.msra.mxu0 0
        %3243 = vmatprep.subr.bf16.mxu0 0
        %3244 = vmatpush1.bf16.msra.mxu0 0
        %3245 = vmatprep.subr.bf16.mxu0 0
        %3246 = vmatpush1.bf16.msra.mxu0 0
        %3247 = vmatprep.subr.bf16.mxu0 0
        %3248 = vmatpush1.bf16.msra.mxu0 0
        %3249 = vmatprep.subr.bf16.mxu0 0
        %3250 = vmatpush1.bf16.msra.mxu0 0
        %3251 = vmatprep.subr.bf16.mxu0 0
        %3252 = vmatpush1.bf16.msra.mxu0 0
        %3253 = vmatprep.subr.bf16.mxu0 0
        %3254 = vmatpush1.bf16.msra.mxu0 0
        %3255 = vmatprep.subr.bf16.mxu0 0
        %3256 = vmatpush1.bf16.msra.mxu0 0
        %3257 = vmatprep.subr.bf16.mxu0 0
        %3258 = vmatpush1.bf16.msra.mxu0 0
        %3259 = vmatprep.mubr.bf16.mxu0 0
        %3260 = vmatmul.mubr.bf16.gmra.mrb[0].mxu0 %v3143
        %v3261 = vpop.f32.mrb[0].mxu0
        %v3262 = vadd.f32 %v2861, %v3261
        %v3263 = vpop.f32.mrb[0].mxu0
        %v3264 = vadd.f32 %v2865, %v3263
        %v3265 = vpop.f32.mrb[0].mxu0
        %v3266 = vpop.f32.mrb[0].mxu0
        %3267 = vdwg.mxu0
        %3268 = vmatprep.subr.bf16.mxu0 %v3053
        %3269 = vmatpush1.bf16.msra.mxu0 %v3052
        %3270 = vmatprep.subr.bf16.mxu0 %v3065
        %3271 = vmatpush1.bf16.msra.mxu0 %v3064
        %3272 = vmatprep.subr.bf16.mxu0 %v3077
        %3273 = vmatpush1.bf16.msra.mxu0 %v3076
        %3274 = vmatprep.subr.bf16.mxu0 %v3089
        %3275 = vmatpush1.bf16.msra.mxu0 %v3088
        %3276 = vmatprep.subr.bf16.mxu0 0
        %3277 = vmatpush1.bf16.msra.mxu0 0
        %3278 = vmatprep.subr.bf16.mxu0 0
        %3279 = vmatpush1.bf16.msra.mxu0 0
        %3280 = vmatprep.subr.bf16.mxu0 0
        %3281 = vmatpush1.bf16.msra.mxu0 0
        %3282 = vmatprep.subr.bf16.mxu0 0
        %3283 = vmatpush1.bf16.msra.mxu0 0
        %3284 = vmatprep.subr.bf16.mxu0 0
        %3285 = vmatpush1.bf16.msra.mxu0 0
        %3286 = vmatprep.subr.bf16.mxu0 0
        %3287 = vmatpush1.bf16.msra.mxu0 0
        %3288 = vmatprep.subr.bf16.mxu0 0
        %3289 = vmatpush1.bf16.msra.mxu0 0
        %3290 = vmatprep.subr.bf16.mxu0 0
        %3291 = vmatpush1.bf16.msra.mxu0 0
        %3292 = vmatprep.subr.bf16.mxu0 0
        %3293 = vmatpush1.bf16.msra.mxu0 0
        %3294 = vmatprep.subr.bf16.mxu0 0
        %3295 = vmatpush1.bf16.msra.mxu0 0
        %3296 = vmatprep.subr.bf16.mxu0 0
        %3297 = vmatpush1.bf16.msra.mxu0 0
        %3298 = vmatprep.subr.bf16.mxu0 0
        %3299 = vmatpush1.bf16.msra.mxu0 0
        %3300 = vmatprep.mubr.bf16.mxu0 0
        %3301 = vmatmul.mubr.bf16.gmra.mrb[0].mxu0 %v3143
        %v3302 = vpop.f32.mrb[0].mxu0
        %v3303 = vadd.f32 %v2869, %v3302
        %v3304 = vpop.f32.mrb[0].mxu0
        %v3305 = vadd.f32 %v2873, %v3304
        %v3306 = vpop.f32.mrb[0].mxu0
        %v3307 = vpop.f32.mrb[0].mxu0
        %3308 = vdwg.mxu0
        %3309 = vmatprep.subr.bf16.mxu0 %v3055
        %3310 = vmatpush1.bf16.msra.mxu0 %v3054
        %3311 = vmatprep.subr.bf16.mxu0 %v3067
        %3312 = vmatpush1.bf16.msra.mxu0 %v3066
        %3313 = vmatprep.subr.bf16.mxu0 %v3079
        %3314 = vmatpush1.bf16.msra.mxu0 %v3078
        %3315 = vmatprep.subr.bf16.mxu0 %v3091
        %3316 = vmatpush1.bf16.msra.mxu0 %v3090
        %3317 = vmatprep.subr.bf16.mxu0 0
        %3318 = vmatpush1.bf16.msra.mxu0 0
        %3319 = vmatprep.subr.bf16.mxu0 0
        %3320 = vmatpush1.bf16.msra.mxu0 0
        %3321 = vmatprep.subr.bf16.mxu0 0
        %3322 = vmatpush1.bf16.msra.mxu0 0
        %3323 = vmatprep.subr.bf16.mxu0 0
        %3324 = vmatpush1.bf16.msra.mxu0 0
        %3325 = vmatprep.subr.bf16.mxu0 0
        %3326 = vmatpush1.bf16.msra.mxu0 0
        %3327 = vmatprep.subr.bf16.mxu0 0
        %3328 = vmatpush1.bf16.msra.mxu0 0
        %3329 = vmatprep.subr.bf16.mxu0 0
        %3330 = vmatpush1.bf16.msra.mxu0 0
        %3331 = vmatprep.subr.bf16.mxu0 0
        %3332 = vmatpush1.bf16.msra.mxu0 0
        %3333 = vmatprep.subr.bf16.mxu0 0
        %3334 = vmatpush1.bf16.msra.mxu0 0
        %3335 = vmatprep.subr.bf16.mxu0 0
        %3336 = vmatpush1.bf16.msra.mxu0 0
        %3337 = vmatprep.subr.bf16.mxu0 0
        %3338 = vmatpush1.bf16.msra.mxu0 0
        %3339 = vmatprep.subr.bf16.mxu0 0
        %3340 = vmatpush1.bf16.msra.mxu0 0
        %3341 = vmatprep.mubr.bf16.mxu0 0
        %3342 = vmatmul.mubr.bf16.gmra.mrb[0].mxu0 %v3143
        %v3343 = vpop.f32.mrb[0].mxu0
        %v3344 = vadd.f32 %v2877, %v3343
        %v3345 = vpop.f32.mrb[0].mxu0
        %v3346 = vadd.f32 %v2881, %v3345
        %v3347 = vpop.f32.mrb[0].mxu0
        %v3348 = vpop.f32.mrb[0].mxu0
        %3349 = vdwg.mxu0
        %3350 = vmatprep.subr.bf16.mxu0 %v3057
        %3351 = vmatpush1.bf16.msra.mxu0 %v3056
        %3352 = vmatprep.subr.bf16.mxu0 %v3069
        %3353 = vmatpush1.bf16.msra.mxu0 %v3068
        %3354 = vmatprep.subr.bf16.mxu0 %v3081
        %3355 = vmatpush1.bf16.msra.mxu0 %v3080
        %3356 = vmatprep.subr.bf16.mxu0 %v3093
        %3357 = vmatpush1.bf16.msra.mxu0 %v3092
        %3358 = vmatprep.subr.bf16.mxu0 0
        %3359 = vmatpush1.bf16.msra.mxu0 0
        %3360 = vmatprep.subr.bf16.mxu0 0
        %3361 = vmatpush1.bf16.msra.mxu0 0
        %3362 = vmatprep.subr.bf16.mxu0 0
        %3363 = vmatpush1.bf16.msra.mxu0 0
        %3364 = vmatprep.subr.bf16.mxu0 0
        %3365 = vmatpush1.bf16.msra.mxu0 0
        %3366 = vmatprep.subr.bf16.mxu0 0
        %3367 = vmatpush1.bf16.msra.mxu0 0
        %3368 = vmatprep.subr.bf16.mxu0 0
        %3369 = vmatpush1.bf16.msra.mxu0 0
        %3370 = vmatprep.subr.bf16.mxu0 0
        %3371 = vmatpush1.bf16.msra.mxu0 0
        %3372 = vmatprep.subr.bf16.mxu0 0
        %3373 = vmatpush1.bf16.msra.mxu0 0
        %3374 = vmatprep.subr.bf16.mxu0 0
        %3375 = vmatpush1.bf16.msra.mxu0 0
        %3376 = vmatprep.subr.bf16.mxu0 0
        %3377 = vmatpush1.bf16.msra.mxu0 0
        %3378 = vmatprep.subr.bf16.mxu0 0
        %3379 = vmatpush1.bf16.msra.mxu0 0
        %3380 = vmatprep.subr.bf16.mxu0 0
        %3381 = vmatpush1.bf16.msra.mxu0 0
        %3382 = vmatprep.mubr.bf16.mxu0 0
        %3383 = vmatmul.mubr.bf16.gmra.mrb[0].mxu0 %v3143
        %v3384 = vpop.f32.mrb[0].mxu0
        %v3385 = vadd.f32 %v2885, %v3384
        %v3386 = vpop.f32.mrb[0].mxu0
        %v3387 = vadd.f32 %v2889, %v3386
        %v3388 = vpop.f32.mrb[0].mxu0
        %v3389 = vpop.f32.mrb[0].mxu0
        %3390 = vdwg.mxu0
        %v3391 = vpack.c.bf16 %v3180, %v3180
        %v3392 = vpack.c.bf16 %v3262, %v3262
        %v3393 = vpack.c.bf16 %v3344, %v3344
        %3394 = vmatprep.subr.bf16.mxu0 0
        %3395 = vmatpush1.bf16.xpose.msra.mxu0 %v3392
        %3396 = vmatprep.subr.bf16.mxu0 0
        %3397 = vmatpush1.bf16.xpose.msra.mxu0 0
        %3398 = vmatprep.subr.bf16.mxu0 0
        %3399 = vmatpush1.bf16.xpose.msra.mxu0 0
        %3400 = vmatprep.subr.bf16.mxu0 0
        %3401 = vmatpush1.bf16.xpose.msra.mxu0 0
        %3402 = vmatprep.subr.bf16.mxu0 0
        %3403 = vmatpush1.bf16.xpose.msra.mxu0 0
        %3404 = vmatprep.subr.bf16.mxu0 0
        %3405 = vmatpush1.bf16.xpose.msra.mxu0 0
        %3406 = vmatprep.subr.bf16.mxu0 0
        %3407 = vmatpush1.bf16.xpose.msra.mxu0 0
        %3408 = vmatprep.subr.bf16.mxu0 0
        %3409 = vmatpush1.bf16.xpose.msra.mxu0 0
        %3410 = vmatprep.subr.bf16.mxu0 0
        %3411 = vmatpush1.bf16.xpose.msra.mxu0 0
        %3412 = vmatprep.subr.bf16.mxu0 0
        %3413 = vmatpush1.bf16.xpose.msra.mxu0 0
        %3414 = vmatprep.subr.bf16.mxu0 0
        %3415 = vmatpush1.bf16.xpose.msra.mxu0 0
        %3416 = vmatprep.subr.bf16.mxu0 0
        %3417 = vmatpush1.bf16.xpose.msra.mxu0 0
        %3418 = vmatprep.subr.bf16.mxu0 0
        %3419 = vmatpush1.bf16.xpose.msra.mxu0 0
        %3420 = vmatprep.subr.bf16.mxu0 0
        %3421 = vmatpush1.bf16.xpose.msra.mxu0 0
        %3422 = vmatprep.subr.bf16.mxu0 0
        %3423 = vmatpush1.bf16.xpose.msra.mxu0 0
        %3424 = vmatprep.subr.bf16.mxu0 0
        %3425 = vmatpush1.bf16.xpose.msra.mxu0 0
        %3426 = vmatprep.mubr.bf16.mxu0 0
        %3427 = vmatmul.mubr.bf16.gmra.mrb[0].mxu0 %v3391
        %v3428 = vpop.f32.mrb[0].mxu0
        %v3429 = vadd.f32 0.0, %v3428
        %v3430 = vpop.f32.mrb[0].mxu0
        %v3431 = vpop.f32.mrb[0].mxu0
        %v3432 = vpop.f32.mrb[0].mxu0
        %3433 = vdwg.mxu0
        %v3434 = vsel %vm1807, %v3429, -inf
        %3435 = vmax.xlane.f32.xlu0 %v3434
        %v3436 = vpop.xlane.xlu0 %3435
        %v3437 = vsub.f32 %v3429, %v3436
        %v3438 = vmul.f32 %v3437, 1.442695
        %v3439 = vpow.pop %v3438
        %v3440 = vsel %vm1807, %v3439, 0.0
        %3441 = vadd.xlane.f32.xlu0 %v3440
        %v3442 = vpop.xlane.xlu0 %3441
        %v3443 = vrcp.pop %v3442
        %v3444 = vmul.f32 %v3439, %v3443
        %v3445 = vpack.c.bf16 %v3444, %v3444
        %v3447 = vsel %vm1820, %v3445, 0
        %v3450 = vand.u32 %v3393, %v1827
        %3452 = vmatprep.subr.bf16.mxu0 0
        %3453 = vmatpush1.bf16.msra.mxu0 %v3450
        %3454 = vmatprep.subr.bf16.mxu0 0
        %3455 = vmatpush1.bf16.msra.mxu0 0
        %3456 = vmatprep.subr.bf16.mxu0 0
        %3457 = vmatpush1.bf16.msra.mxu0 0
        %3458 = vmatprep.subr.bf16.mxu0 0
        %3459 = vmatpush1.bf16.msra.mxu0 0
        %3460 = vmatprep.subr.bf16.mxu0 0
        %3461 = vmatpush1.bf16.msra.mxu0 0
        %3462 = vmatprep.subr.bf16.mxu0 0
        %3463 = vmatpush1.bf16.msra.mxu0 0
        %3464 = vmatprep.subr.bf16.mxu0 0
        %3465 = vmatpush1.bf16.msra.mxu0 0
        %3466 = vmatprep.subr.bf16.mxu0 0
        %3467 = vmatpush1.bf16.msra.mxu0 0
        %3468 = vmatprep.subr.bf16.mxu0 0
        %3469 = vmatpush1.bf16.msra.mxu0 0
        %3470 = vmatprep.subr.bf16.mxu0 0
        %3471 = vmatpush1.bf16.msra.mxu0 0
        %3472 = vmatprep.subr.bf16.mxu0 0
        %3473 = vmatpush1.bf16.msra.mxu0 0
        %3474 = vmatprep.subr.bf16.mxu0 0
        %3475 = vmatpush1.bf16.msra.mxu0 0
        %3476 = vmatprep.subr.bf16.mxu0 0
        %3477 = vmatpush1.bf16.msra.mxu0 0
        %3478 = vmatprep.subr.bf16.mxu0 0
        %3479 = vmatpush1.bf16.msra.mxu0 0
        %3480 = vmatprep.subr.bf16.mxu0 0
        %3481 = vmatpush1.bf16.msra.mxu0 0
        %3482 = vmatprep.subr.bf16.mxu0 0
        %3483 = vmatpush1.bf16.msra.mxu0 0
        %3484 = vmatprep.mubr.bf16.mxu0 0
        %3485 = vmatmul.mubr.bf16.gmra.mrb[0].mxu0 %v3447
        %v3486 = vpop.f32.mrb[0].mxu0
        %v3487 = vadd.f32 0.0, %v3486
        %v3488 = vpop.f32.mrb[0].mxu0
        %v3489 = vpop.f32.mrb[0].mxu0
        %v3490 = vpop.f32.mrb[0].mxu0
        %3491 = vdwg.mxu0
        %v3492 = vpack.c.bf16 %v3182, %v3182
        %v3493 = vpack.c.bf16 %v3264, %v3264
        %v3494 = vpack.c.bf16 %v3346, %v3346
        %3495 = vmatprep.subr.bf16.mxu0 0
        %3496 = vmatpush1.bf16.xpose.msra.mxu0 %v3493
        %3497 = vmatprep.subr.bf16.mxu0 0
        %3498 = vmatpush1.bf16.xpose.msra.mxu0 0
        %3499 = vmatprep.subr.bf16.mxu0 0
        %3500 = vmatpush1.bf16.xpose.msra.mxu0 0
        %3501 = vmatprep.subr.bf16.mxu0 0
        %3502 = vmatpush1.bf16.xpose.msra.mxu0 0
        %3503 = vmatprep.subr.bf16.mxu0 0
        %3504 = vmatpush1.bf16.xpose.msra.mxu0 0
        %3505 = vmatprep.subr.bf16.mxu0 0
        %3506 = vmatpush1.bf16.xpose.msra.mxu0 0
        %3507 = vmatprep.subr.bf16.mxu0 0
        %3508 = vmatpush1.bf16.xpose.msra.mxu0 0
        %3509 = vmatprep.subr.bf16.mxu0 0
        %3510 = vmatpush1.bf16.xpose.msra.mxu0 0
        %3511 = vmatprep.subr.bf16.mxu0 0
        %3512 = vmatpush1.bf16.xpose.msra.mxu0 0
        %3513 = vmatprep.subr.bf16.mxu0 0
        %3514 = vmatpush1.bf16.xpose.msra.mxu0 0
        %3515 = vmatprep.subr.bf16.mxu0 0
        %3516 = vmatpush1.bf16.xpose.msra.mxu0 0
        %3517 = vmatprep.subr.bf16.mxu0 0
        %3518 = vmatpush1.bf16.xpose.msra.mxu0 0
        %3519 = vmatprep.subr.bf16.mxu0 0
        %3520 = vmatpush1.bf16.xpose.msra.mxu0 0
        %3521 = vmatprep.subr.bf16.mxu0 0
        %3522 = vmatpush1.bf16.xpose.msra.mxu0 0
        %3523 = vmatprep.subr.bf16.mxu0 0
        %3524 = vmatpush1.bf16.xpose.msra.mxu0 0
        %3525 = vmatprep.subr.bf16.mxu0 0
        %3526 = vmatpush1.bf16.xpose.msra.mxu0 0
        %3527 = vmatprep.mubr.bf16.mxu0 0
        %3528 = vmatmul.mubr.bf16.gmra.mrb[0].mxu0 %v3492
        %v3529 = vpop.f32.mrb[0].mxu0
        %v3530 = vadd.f32 0.0, %v3529
        %v3531 = vpop.f32.mrb[0].mxu0
        %v3532 = vpop.f32.mrb[0].mxu0
        %v3533 = vpop.f32.mrb[0].mxu0
        %3534 = vdwg.mxu0
        %v3535 = vsel %vm1807, %v3530, -inf
        %3536 = vmax.xlane.f32.xlu0 %v3535
        %v3537 = vpop.xlane.xlu0 %3536
        %v3538 = vsub.f32 %v3530, %v3537
        %v3539 = vmul.f32 %v3538, 1.442695
        %v3540 = vpow.pop %v3539
        %v3541 = vsel %vm1807, %v3540, 0.0
        %3542 = vadd.xlane.f32.xlu0 %v3541
        %v3543 = vpop.xlane.xlu0 %3542
        %v3544 = vrcp.pop %v3543
        %v3545 = vmul.f32 %v3540, %v3544
        %v3546 = vpack.c.bf16 %v3545, %v3545
        %v3548 = vsel %vm1820, %v3546, 0
        %v3551 = vand.u32 %v3494, %v1827
        %3553 = vmatprep.subr.bf16.mxu0 0
        %3554 = vmatpush1.bf16.msra.mxu0 %v3551
        %3555 = vmatprep.subr.bf16.mxu0 0
        %3556 = vmatpush1.bf16.msra.mxu0 0
        %3557 = vmatprep.subr.bf16.mxu0 0
        %3558 = vmatpush1.bf16.msra.mxu0 0
        %3559 = vmatprep.subr.bf16.mxu0 0
        %3560 = vmatpush1.bf16.msra.mxu0 0
        %3561 = vmatprep.subr.bf16.mxu0 0
        %3562 = vmatpush1.bf16.msra.mxu0 0
        %3563 = vmatprep.subr.bf16.mxu0 0
        %3564 = vmatpush1.bf16.msra.mxu0 0
        %3565 = vmatprep.subr.bf16.mxu0 0
        %3566 = vmatpush1.bf16.msra.mxu0 0
        %3567 = vmatprep.subr.bf16.mxu0 0
        %3568 = vmatpush1.bf16.msra.mxu0 0
        %3569 = vmatprep.subr.bf16.mxu0 0
        %3570 = vmatpush1.bf16.msra.mxu0 0
        %3571 = vmatprep.subr.bf16.mxu0 0
        %3572 = vmatpush1.bf16.msra.mxu0 0
        %3573 = vmatprep.subr.bf16.mxu0 0
        %3574 = vmatpush1.bf16.msra.mxu0 0
        %3575 = vmatprep.subr.bf16.mxu0 0
        %3576 = vmatpush1.bf16.msra.mxu0 0
        %3577 = vmatprep.subr.bf16.mxu0 0
        %3578 = vmatpush1.bf16.msra.mxu0 0
        %3579 = vmatprep.subr.bf16.mxu0 0
        %3580 = vmatpush1.bf16.msra.mxu0 0
        %3581 = vmatprep.subr.bf16.mxu0 0
        %3582 = vmatpush1.bf16.msra.mxu0 0
        %3583 = vmatprep.subr.bf16.mxu0 0
        %3584 = vmatpush1.bf16.msra.mxu0 0
        %3585 = vmatprep.mubr.bf16.mxu0 0
        %3586 = vmatmul.mubr.bf16.gmra.mrb[0].mxu0 %v3548
        %v3587 = vpop.f32.mrb[0].mxu0
        %v3588 = vadd.f32 0.0, %v3587
        %v3589 = vpop.f32.mrb[0].mxu0
        %v3590 = vpop.f32.mrb[0].mxu0
        %v3591 = vpop.f32.mrb[0].mxu0
        %3592 = vdwg.mxu0
        %v3593 = vpack.c.bf16 %v3221, %v3221
        %v3594 = vpack.c.bf16 %v3303, %v3303
        %v3595 = vpack.c.bf16 %v3385, %v3385
        %3596 = vmatprep.subr.bf16.mxu0 0
        %3597 = vmatpush1.bf16.xpose.msra.mxu0 %v3594
        %3598 = vmatprep.subr.bf16.mxu0 0
        %3599 = vmatpush1.bf16.xpose.msra.mxu0 0
        %3600 = vmatprep.subr.bf16.mxu0 0
        %3601 = vmatpush1.bf16.xpose.msra.mxu0 0
        %3602 = vmatprep.subr.bf16.mxu0 0
        %3603 = vmatpush1.bf16.xpose.msra.mxu0 0
        %3604 = vmatprep.subr.bf16.mxu0 0
        %3605 = vmatpush1.bf16.xpose.msra.mxu0 0
        %3606 = vmatprep.subr.bf16.mxu0 0
        %3607 = vmatpush1.bf16.xpose.msra.mxu0 0
        %3608 = vmatprep.subr.bf16.mxu0 0
        %3609 = vmatpush1.bf16.xpose.msra.mxu0 0
        %3610 = vmatprep.subr.bf16.mxu0 0
        %3611 = vmatpush1.bf16.xpose.msra.mxu0 0
        %3612 = vmatprep.subr.bf16.mxu0 0
        %3613 = vmatpush1.bf16.xpose.msra.mxu0 0
        %3614 = vmatprep.subr.bf16.mxu0 0
        %3615 = vmatpush1.bf16.xpose.msra.mxu0 0
        %3616 = vmatprep.subr.bf16.mxu0 0
        %3617 = vmatpush1.bf16.xpose.msra.mxu0 0
        %3618 = vmatprep.subr.bf16.mxu0 0
        %3619 = vmatpush1.bf16.xpose.msra.mxu0 0
        %3620 = vmatprep.subr.bf16.mxu0 0
        %3621 = vmatpush1.bf16.xpose.msra.mxu0 0
        %3622 = vmatprep.subr.bf16.mxu0 0
        %3623 = vmatpush1.bf16.xpose.msra.mxu0 0
        %3624 = vmatprep.subr.bf16.mxu0 0
        %3625 = vmatpush1.bf16.xpose.msra.mxu0 0
        %3626 = vmatprep.subr.bf16.mxu0 0
        %3627 = vmatpush1.bf16.xpose.msra.mxu0 0
        %3628 = vmatprep.mubr.bf16.mxu0 0
        %3629 = vmatmul.mubr.bf16.gmra.mrb[0].mxu0 %v3593
        %v3630 = vpop.f32.mrb[0].mxu0
        %v3631 = vadd.f32 0.0, %v3630
        %v3632 = vpop.f32.mrb[0].mxu0
        %v3633 = vpop.f32.mrb[0].mxu0
        %v3634 = vpop.f32.mrb[0].mxu0
        %3635 = vdwg.mxu0
        %v3636 = vsel %vm1807, %v3631, -inf
        %3637 = vmax.xlane.f32.xlu0 %v3636
        %v3638 = vpop.xlane.xlu0 %3637
        %v3639 = vsub.f32 %v3631, %v3638
        %v3640 = vmul.f32 %v3639, 1.442695
        %v3641 = vpow.pop %v3640
        %v3642 = vsel %vm1807, %v3641, 0.0
        %3643 = vadd.xlane.f32.xlu0 %v3642
        %v3644 = vpop.xlane.xlu0 %3643
        %v3645 = vrcp.pop %v3644
        %v3646 = vmul.f32 %v3641, %v3645
        %v3647 = vpack.c.bf16 %v3646, %v3646
        %v3649 = vsel %vm1820, %v3647, 0
        %v3652 = vand.u32 %v3595, %v1827
        %3654 = vmatprep.subr.bf16.mxu0 0
        %3655 = vmatpush1.bf16.msra.mxu0 %v3652
        %3656 = vmatprep.subr.bf16.mxu0 0
        %3657 = vmatpush1.bf16.msra.mxu0 0
        %3658 = vmatprep.subr.bf16.mxu0 0
        %3659 = vmatpush1.bf16.msra.mxu0 0
        %3660 = vmatprep.subr.bf16.mxu0 0
        %3661 = vmatpush1.bf16.msra.mxu0 0
        %3662 = vmatprep.subr.bf16.mxu0 0
        %3663 = vmatpush1.bf16.msra.mxu0 0
        %3664 = vmatprep.subr.bf16.mxu0 0
        %3665 = vmatpush1.bf16.msra.mxu0 0
        %3666 = vmatprep.subr.bf16.mxu0 0
        %3667 = vmatpush1.bf16.msra.mxu0 0
        %3668 = vmatprep.subr.bf16.mxu0 0
        %3669 = vmatpush1.bf16.msra.mxu0 0
        %3670 = vmatprep.subr.bf16.mxu0 0
        %3671 = vmatpush1.bf16.msra.mxu0 0
        %3672 = vmatprep.subr.bf16.mxu0 0
        %3673 = vmatpush1.bf16.msra.mxu0 0
        %3674 = vmatprep.subr.bf16.mxu0 0
        %3675 = vmatpush1.bf16.msra.mxu0 0
        %3676 = vmatprep.subr.bf16.mxu0 0
        %3677 = vmatpush1.bf16.msra.mxu0 0
        %3678 = vmatprep.subr.bf16.mxu0 0
        %3679 = vmatpush1.bf16.msra.mxu0 0
        %3680 = vmatprep.subr.bf16.mxu0 0
        %3681 = vmatpush1.bf16.msra.mxu0 0
        %3682 = vmatprep.subr.bf16.mxu0 0
        %3683 = vmatpush1.bf16.msra.mxu0 0
        %3684 = vmatprep.subr.bf16.mxu0 0
        %3685 = vmatpush1.bf16.msra.mxu0 0
        %3686 = vmatprep.mubr.bf16.mxu0 0
        %3687 = vmatmul.mubr.bf16.gmra.mrb[0].mxu0 %v3649
        %v3688 = vpop.f32.mrb[0].mxu0
        %v3689 = vadd.f32 0.0, %v3688
        %v3690 = vpop.f32.mrb[0].mxu0
        %v3691 = vpop.f32.mrb[0].mxu0
        %v3692 = vpop.f32.mrb[0].mxu0
        %3693 = vdwg.mxu0
        %v3694 = vpack.c.bf16 %v3223, %v3223
        %v3695 = vpack.c.bf16 %v3305, %v3305
        %v3696 = vpack.c.bf16 %v3387, %v3387
        %3697 = vmatprep.subr.bf16.mxu0 0
        %3698 = vmatpush1.bf16.xpose.msra.mxu0 %v3695
        %3699 = vmatprep.subr.bf16.mxu0 0
        %3700 = vmatpush1.bf16.xpose.msra.mxu0 0
        %3701 = vmatprep.subr.bf16.mxu0 0
        %3702 = vmatpush1.bf16.xpose.msra.mxu0 0
        %3703 = vmatprep.subr.bf16.mxu0 0
        %3704 = vmatpush1.bf16.xpose.msra.mxu0 0
        %3705 = vmatprep.subr.bf16.mxu0 0
        %3706 = vmatpush1.bf16.xpose.msra.mxu0 0
        %3707 = vmatprep.subr.bf16.mxu0 0
        %3708 = vmatpush1.bf16.xpose.msra.mxu0 0
        %3709 = vmatprep.subr.bf16.mxu0 0
        %3710 = vmatpush1.bf16.xpose.msra.mxu0 0
        %3711 = vmatprep.subr.bf16.mxu0 0
        %3712 = vmatpush1.bf16.xpose.msra.mxu0 0
        %3713 = vmatprep.subr.bf16.mxu0 0
        %3714 = vmatpush1.bf16.xpose.msra.mxu0 0
        %3715 = vmatprep.subr.bf16.mxu0 0
        %3716 = vmatpush1.bf16.xpose.msra.mxu0 0
        %3717 = vmatprep.subr.bf16.mxu0 0
        %3718 = vmatpush1.bf16.xpose.msra.mxu0 0
        %3719 = vmatprep.subr.bf16.mxu0 0
        %3720 = vmatpush1.bf16.xpose.msra.mxu0 0
        %3721 = vmatprep.subr.bf16.mxu0 0
        %3722 = vmatpush1.bf16.xpose.msra.mxu0 0
        %3723 = vmatprep.subr.bf16.mxu0 0
        %3724 = vmatpush1.bf16.xpose.msra.mxu0 0
        %3725 = vmatprep.subr.bf16.mxu0 0
        %3726 = vmatpush1.bf16.xpose.msra.mxu0 0
        %3727 = vmatprep.subr.bf16.mxu0 0
        %3728 = vmatpush1.bf16.xpose.msra.mxu0 0
        %3729 = vmatprep.mubr.bf16.mxu0 0
        %3730 = vmatmul.mubr.bf16.gmra.mrb[0].mxu0 %v3694
        %v3731 = vpop.f32.mrb[0].mxu0
        %v3732 = vadd.f32 0.0, %v3731
        %v3733 = vpop.f32.mrb[0].mxu0
        %v3734 = vpop.f32.mrb[0].mxu0
        %v3735 = vpop.f32.mrb[0].mxu0
        %3736 = vdwg.mxu0
        %v3737 = vsel %vm1807, %v3732, -inf
        %3738 = vmax.xlane.f32.xlu0 %v3737
        %v3739 = vpop.xlane.xlu0 %3738
        %v3740 = vsub.f32 %v3732, %v3739
        %v3741 = vmul.f32 %v3740, 1.442695
        %v3742 = vpow.pop %v3741
        %v3743 = vsel %vm1807, %v3742, 0.0
        %3744 = vadd.xlane.f32.xlu0 %v3743
        %v3745 = vpop.xlane.xlu0 %3744
        %v3746 = vrcp.pop %v3745
        %v3747 = vmul.f32 %v3742, %v3746
        %v3748 = vpack.c.bf16 %v3747, %v3747
        %v3750 = vsel %vm1820, %v3748, 0
        %v3753 = vand.u32 %v3696, %v1827
        %3755 = vmatprep.subr.bf16.mxu0 0
        %3756 = vmatpush1.bf16.msra.mxu0 %v3753
        %3757 = vmatprep.subr.bf16.mxu0 0
        %3758 = vmatpush1.bf16.msra.mxu0 0
        %3759 = vmatprep.subr.bf16.mxu0 0
        %3760 = vmatpush1.bf16.msra.mxu0 0
        %3761 = vmatprep.subr.bf16.mxu0 0
        %3762 = vmatpush1.bf16.msra.mxu0 0
        %3763 = vmatprep.subr.bf16.mxu0 0
        %3764 = vmatpush1.bf16.msra.mxu0 0
        %3765 = vmatprep.subr.bf16.mxu0 0
        %3766 = vmatpush1.bf16.msra.mxu0 0
        %3767 = vmatprep.subr.bf16.mxu0 0
        %3768 = vmatpush1.bf16.msra.mxu0 0
        %3769 = vmatprep.subr.bf16.mxu0 0
        %3770 = vmatpush1.bf16.msra.mxu0 0
        %3771 = vmatprep.subr.bf16.mxu0 0
        %3772 = vmatpush1.bf16.msra.mxu0 0
        %3773 = vmatprep.subr.bf16.mxu0 0
        %3774 = vmatpush1.bf16.msra.mxu0 0
        %3775 = vmatprep.subr.bf16.mxu0 0
        %3776 = vmatpush1.bf16.msra.mxu0 0
        %3777 = vmatprep.subr.bf16.mxu0 0
        %3778 = vmatpush1.bf16.msra.mxu0 0
        %3779 = vmatprep.subr.bf16.mxu0 0
        %3780 = vmatpush1.bf16.msra.mxu0 0
        %3781 = vmatprep.subr.bf16.mxu0 0
        %3782 = vmatpush1.bf16.msra.mxu0 0
        %3783 = vmatprep.subr.bf16.mxu0 0
        %3784 = vmatpush1.bf16.msra.mxu0 0
        %3785 = vmatprep.subr.bf16.mxu0 0
        %3786 = vmatpush1.bf16.msra.mxu0 0
        %3787 = vmatprep.mubr.bf16.mxu0 0
        %3788 = vmatmul.mubr.bf16.gmra.mrb[0].mxu0 %v3750
        %v3789 = vpop.f32.mrb[0].mxu0
        %v3790 = vadd.f32 0.0, %v3789
        %v3791 = vpop.f32.mrb[0].mxu0
        %v3792 = vpop.f32.mrb[0].mxu0
        %v3793 = vpop.f32.mrb[0].mxu0
        %3794 = vdwg.mxu0
        %v3795 = vpack.c.bf16 %v3487, %v3487
        %v3796 = vpack.c.bf16 %v3588, %v3588
        %v3797 = vpack.c.bf16 %v3689, %v3689
        %v3798 = vpack.c.bf16 %v3790, %v3790
        %s3799 = scalar_lea.vmem %s7, 256
        %v3800 = vld [vmem:[%s3799] sm:$0xf]
        %v3801 = vld [vmem:[%s3799 + $0x4] sm:$0xf]
        %v3802 = vld [vmem:[%s3799 + $0x8] sm:$0xf]
        %v3803 = vld [vmem:[%s3799 + $0xc] sm:$0xf]
        %v3804 = vld [vmem:[%s3799 + $0x10] sm:$0xf]
        %v3805 = vld [vmem:[%s3799 + $0x14] sm:$0xf]
        %v3806 = vld [vmem:[%s3799 + $0x18] sm:$0xf]
        %v3807 = vld [vmem:[%s3799 + $0x1c] sm:$0xf]
        %v3808 = vld [vmem:[%s3799 + $0x20] sm:$0xf]
        %v3809 = vld [vmem:[%s3799 + $0x24] sm:$0xf]
        %v3810 = vld [vmem:[%s3799 + $0x28] sm:$0xf]
        %v3811 = vld [vmem:[%s3799 + $0x2c] sm:$0xf]
        %v3812 = vld [vmem:[%s3799 + $0x30] sm:$0xf]
        %v3813 = vld [vmem:[%s3799 + $0x34] sm:$0xf]
        %v3814 = vld [vmem:[%s3799 + $0x38] sm:$0xf]
        %v3815 = vld [vmem:[%s3799 + $0x3c] sm:$0xf]
        %v3816 = vld [vmem:[%s3799 + $0x40] sm:$0xf]
        %v3817 = vld [vmem:[%s3799 + $0x44] sm:$0xf]
        %v3818 = vld [vmem:[%s3799 + $0x48] sm:$0xf]
        %v3819 = vld [vmem:[%s3799 + $0x4c] sm:$0xf]
        %v3820 = vld [vmem:[%s3799 + $0x50] sm:$0xf]
        %v3821 = vld [vmem:[%s3799 + $0x54] sm:$0xf]
        %v3822 = vld [vmem:[%s3799 + $0x58] sm:$0xf]
        %v3823 = vld [vmem:[%s3799 + $0x5c] sm:$0xf]
        %v3824 = vld [vmem:[%s3799 + $0x60] sm:$0xf]
        %v3825 = vld [vmem:[%s3799 + $0x64] sm:$0xf]
        %v3826 = vld [vmem:[%s3799 + $0x68] sm:$0xf]
        %v3827 = vld [vmem:[%s3799 + $0x6c] sm:$0xf]
        %v3828 = vld [vmem:[%s3799 + $0x70] sm:$0xf]
        %v3829 = vld [vmem:[%s3799 + $0x74] sm:$0xf]
        %v3830 = vld [vmem:[%s3799 + $0x78] sm:$0xf]
        %v3831 = vld [vmem:[%s3799 + $0x7c] sm:$0xf]
        %v3832 = vld [vmem:[%s3799 + $0x80] sm:$0xf]
        %v3833 = vld [vmem:[%s3799 + $0x84] sm:$0xf]
        %v3834 = vld [vmem:[%s3799 + $0x88] sm:$0xf]
        %v3835 = vld [vmem:[%s3799 + $0x8c] sm:$0xf]
        %v3836 = vld [vmem:[%s3799 + $0x90] sm:$0xf]
        %v3837 = vld [vmem:[%s3799 + $0x94] sm:$0xf]
        %v3838 = vld [vmem:[%s3799 + $0x98] sm:$0xf]
        %v3839 = vld [vmem:[%s3799 + $0x9c] sm:$0xf]
        %v3840 = vld [vmem:[%s3799 + $0xa0] sm:$0xf]
        %v3841 = vld [vmem:[%s3799 + $0xa4] sm:$0xf]
        %v3842 = vld [vmem:[%s3799 + $0xa8] sm:$0xf]
        %v3843 = vld [vmem:[%s3799 + $0xac] sm:$0xf]
        %v3844 = vld [vmem:[%s3799 + $0xb0] sm:$0xf]
        %v3845 = vld [vmem:[%s3799 + $0xb4] sm:$0xf]
        %v3846 = vld [vmem:[%s3799 + $0xb8] sm:$0xf]
        %v3847 = vld [vmem:[%s3799 + $0xbc] sm:$0xf]
        %v3848 = vld [vmem:[%s3799 + $0xc0] sm:$0xf]
        %v3849 = vld [vmem:[%s3799 + $0xc4] sm:$0xf]
        %v3850 = vld [vmem:[%s3799 + $0xc8] sm:$0xf]
        %v3851 = vld [vmem:[%s3799 + $0xcc] sm:$0xf]
        %v3852 = vld [vmem:[%s3799 + $0xd0] sm:$0xf]
        %v3853 = vld [vmem:[%s3799 + $0xd4] sm:$0xf]
        %v3854 = vld [vmem:[%s3799 + $0xd8] sm:$0xf]
        %v3855 = vld [vmem:[%s3799 + $0xdc] sm:$0xf]
        %v3856 = vld [vmem:[%s3799 + $0xe0] sm:$0xf]
        %v3857 = vld [vmem:[%s3799 + $0xe4] sm:$0xf]
        %v3858 = vld [vmem:[%s3799 + $0xe8] sm:$0xf]
        %v3859 = vld [vmem:[%s3799 + $0xec] sm:$0xf]
        %v3860 = vld [vmem:[%s3799 + $0xf0] sm:$0xf]
        %v3861 = vld [vmem:[%s3799 + $0xf4] sm:$0xf]
        %v3862 = vld [vmem:[%s3799 + $0xf8] sm:$0xf]
        %v3863 = vld [vmem:[%s3799 + $0xfc] sm:$0xf]
        %s3864 = scalar_lea.vmem %s8, 1
        %v3865 = vld [vmem:[%s3864] sm:$0x1]
        %v3867 = vlaneseq
        %v3868 = vshrl.u32 %v3867, 7
        %v3869 = vsub.s32 0, %v3868
        %v3870 = vrot.slane %v3865, %v3869
        %v3936 = vunpack.c.l.b16 %v3800
        %v3937 = vunpack.c.l.b16 %v3801
        %v3938 = vunpack.c.l.b16 %v3802
        %v3939 = vunpack.c.l.b16 %v3803
        %v3940 = vunpack.c.l.b16 %v3804
        %v3941 = vunpack.c.l.b16 %v3805
        %v3942 = vunpack.c.l.b16 %v3806
        %v3943 = vunpack.c.l.b16 %v3807
        %v3944 = vunpack.c.l.b16 %v3808
        %v3945 = vunpack.c.l.b16 %v3809
        %v3946 = vunpack.c.l.b16 %v3810
        %v3947 = vunpack.c.l.b16 %v3811
        %v3948 = vunpack.c.l.b16 %v3812
        %v3949 = vunpack.c.l.b16 %v3813
        %v3950 = vunpack.c.l.b16 %v3814
        %v3951 = vunpack.c.l.b16 %v3815
        %v3952 = vunpack.c.l.b16 %v3816
        %v3953 = vunpack.c.l.b16 %v3817
        %v3954 = vunpack.c.l.b16 %v3818
        %v3955 = vunpack.c.l.b16 %v3819
        %v3956 = vunpack.c.l.b16 %v3820
        %v3957 = vunpack.c.l.b16 %v3821
        %v3958 = vunpack.c.l.b16 %v3822
        %v3959 = vunpack.c.l.b16 %v3823
        %v3960 = vunpack.c.l.b16 %v3824
        %v3961 = vunpack.c.l.b16 %v3825
        %v3962 = vunpack.c.l.b16 %v3826
        %v3963 = vunpack.c.l.b16 %v3827
        %v3964 = vunpack.c.l.b16 %v3828
        %v3965 = vunpack.c.l.b16 %v3829
        %v3966 = vunpack.c.l.b16 %v3830
        %v3967 = vunpack.c.l.b16 %v3831
        %v3968 = vunpack.c.l.b16 %v3832
        %v3969 = vunpack.c.l.b16 %v3833
        %v3970 = vunpack.c.l.b16 %v3834
        %v3971 = vunpack.c.l.b16 %v3835
        %v3972 = vunpack.c.l.b16 %v3836
        %v3973 = vunpack.c.l.b16 %v3837
        %v3974 = vunpack.c.l.b16 %v3838
        %v3975 = vunpack.c.l.b16 %v3839
        %v3976 = vunpack.c.l.b16 %v3840
        %v3977 = vunpack.c.l.b16 %v3841
        %v3978 = vunpack.c.l.b16 %v3842
        %v3979 = vunpack.c.l.b16 %v3843
        %v3980 = vunpack.c.l.b16 %v3844
        %v3981 = vunpack.c.l.b16 %v3845
        %v3982 = vunpack.c.l.b16 %v3846
        %v3983 = vunpack.c.l.b16 %v3847
        %v3984 = vunpack.c.l.b16 %v3848
        %v3985 = vunpack.c.l.b16 %v3849
        %v3986 = vunpack.c.l.b16 %v3850
        %v3987 = vunpack.c.l.b16 %v3851
        %v3988 = vunpack.c.l.b16 %v3852
        %v3989 = vunpack.c.l.b16 %v3853
        %v3990 = vunpack.c.l.b16 %v3854
        %v3991 = vunpack.c.l.b16 %v3855
        %v3992 = vunpack.c.l.b16 %v3856
        %v3993 = vunpack.c.l.b16 %v3857
        %v3994 = vunpack.c.l.b16 %v3858
        %v3995 = vunpack.c.l.b16 %v3859
        %v3996 = vunpack.c.l.b16 %v3860
        %v3997 = vunpack.c.l.b16 %v3861
        %v3998 = vunpack.c.l.b16 %v3862
        %v3999 = vunpack.c.l.b16 %v3863
        %v4000 = vpack.c.b16 %v3937, %v3936
        %v4001 = vpack.c.b16 %v3939, %v3938
        %v4002 = vpack.c.b16 %v3941, %v3940
        %v4003 = vpack.c.b16 %v3943, %v3942
        %v4004 = vpack.c.b16 %v3945, %v3944
        %v4005 = vpack.c.b16 %v3947, %v3946
        %v4006 = vpack.c.b16 %v3949, %v3948
        %v4007 = vpack.c.b16 %v3951, %v3950
        %v4008 = vpack.c.b16 %v3953, %v3952
        %v4009 = vpack.c.b16 %v3955, %v3954
        %v4010 = vpack.c.b16 %v3957, %v3956
        %v4011 = vpack.c.b16 %v3959, %v3958
        %v4012 = vpack.c.b16 %v3961, %v3960
        %v4013 = vpack.c.b16 %v3963, %v3962
        %v4014 = vpack.c.b16 %v3965, %v3964
        %v4015 = vpack.c.b16 %v3967, %v3966
        %v4016 = vpack.c.b16 %v3969, %v3968
        %v4017 = vpack.c.b16 %v3971, %v3970
        %v4018 = vpack.c.b16 %v3973, %v3972
        %v4019 = vpack.c.b16 %v3975, %v3974
        %v4020 = vpack.c.b16 %v3977, %v3976
        %v4021 = vpack.c.b16 %v3979, %v3978
        %v4022 = vpack.c.b16 %v3981, %v3980
        %v4023 = vpack.c.b16 %v3983, %v3982
        %v4024 = vpack.c.b16 %v3985, %v3984
        %v4025 = vpack.c.b16 %v3987, %v3986
        %v4026 = vpack.c.b16 %v3989, %v3988
        %v4027 = vpack.c.b16 %v3991, %v3990
        %v4028 = vpack.c.b16 %v3993, %v3992
        %v4029 = vpack.c.b16 %v3995, %v3994
        %v4030 = vpack.c.b16 %v3997, %v3996
        %v4031 = vpack.c.b16 %v3999, %v3998
        %4064 = vmatprep.subr.bf16.mxu0 0
        %4065 = vmatpush1.bf16.msra.mxu0 %v4000
        %4066 = vmatprep.subr.bf16.mxu0 0
        %4067 = vmatpush1.bf16.msra.mxu0 %v4001
        %4068 = vmatprep.subr.bf16.mxu0 0
        %4069 = vmatpush1.bf16.msra.mxu0 %v4002
        %4070 = vmatprep.subr.bf16.mxu0 0
        %4071 = vmatpush1.bf16.msra.mxu0 %v4003
        %4072 = vmatprep.subr.bf16.mxu0 0
        %4073 = vmatpush1.bf16.msra.mxu0 %v4004
        %4074 = vmatprep.subr.bf16.mxu0 0
        %4075 = vmatpush1.bf16.msra.mxu0 %v4005
        %4076 = vmatprep.subr.bf16.mxu0 0
        %4077 = vmatpush1.bf16.msra.mxu0 %v4006
        %4078 = vmatprep.subr.bf16.mxu0 0
        %4079 = vmatpush1.bf16.msra.mxu0 %v4007
        %4080 = vmatprep.subr.bf16.mxu0 0
        %4081 = vmatpush1.bf16.msra.mxu0 %v4008
        %4082 = vmatprep.subr.bf16.mxu0 0
        %4083 = vmatpush1.bf16.msra.mxu0 %v4009
        %4084 = vmatprep.subr.bf16.mxu0 0
        %4085 = vmatpush1.bf16.msra.mxu0 %v4010
        %4086 = vmatprep.subr.bf16.mxu0 0
        %4087 = vmatpush1.bf16.msra.mxu0 %v4011
        %4088 = vmatprep.subr.bf16.mxu0 0
        %4089 = vmatpush1.bf16.msra.mxu0 %v4012
        %4090 = vmatprep.subr.bf16.mxu0 0
        %4091 = vmatpush1.bf16.msra.mxu0 %v4013
        %4092 = vmatprep.subr.bf16.mxu0 0
        %4093 = vmatpush1.bf16.msra.mxu0 %v4014
        %4094 = vmatprep.subr.bf16.mxu0 0
        %4095 = vmatpush1.bf16.msra.mxu0 %v4015
        %4096 = vmatprep.mubr.bf16.mxu0 %v3796
        %4097 = vmatmul.mubr.bf16.gmra.mrb[0].mxu0 %v3795
        %v4098 = vpop.f32.mrb[0].mxu0
        %v4099 = vadd.f32 %v3870, %v4098
        %v4100 = vpop.f32.mrb[0].mxu0
        %v4101 = vpop.f32.mrb[0].mxu0
        %v4102 = vpop.f32.mrb[0].mxu0
        %4103 = vdwg.mxu0
        %4104 = vmatprep.subr.bf16.mxu0 0
        %4105 = vmatpush1.bf16.msra.mxu0 %v4016
        %4106 = vmatprep.subr.bf16.mxu0 0
        %4107 = vmatpush1.bf16.msra.mxu0 %v4017
        %4108 = vmatprep.subr.bf16.mxu0 0
        %4109 = vmatpush1.bf16.msra.mxu0 %v4018
        %4110 = vmatprep.subr.bf16.mxu0 0
        %4111 = vmatpush1.bf16.msra.mxu0 %v4019
        %4112 = vmatprep.subr.bf16.mxu0 0
        %4113 = vmatpush1.bf16.msra.mxu0 %v4020
        %4114 = vmatprep.subr.bf16.mxu0 0
        %4115 = vmatpush1.bf16.msra.mxu0 %v4021
        %4116 = vmatprep.subr.bf16.mxu0 0
        %4117 = vmatpush1.bf16.msra.mxu0 %v4022
        %4118 = vmatprep.subr.bf16.mxu0 0
        %4119 = vmatpush1.bf16.msra.mxu0 %v4023
        %4120 = vmatprep.subr.bf16.mxu0 0
        %4121 = vmatpush1.bf16.msra.mxu0 %v4024
        %4122 = vmatprep.subr.bf16.mxu0 0
        %4123 = vmatpush1.bf16.msra.mxu0 %v4025
        %4124 = vmatprep.subr.bf16.mxu0 0
        %4125 = vmatpush1.bf16.msra.mxu0 %v4026
        %4126 = vmatprep.subr.bf16.mxu0 0
        %4127 = vmatpush1.bf16.msra.mxu0 %v4027
        %4128 = vmatprep.subr.bf16.mxu0 0
        %4129 = vmatpush1.bf16.msra.mxu0 %v4028
        %4130 = vmatprep.subr.bf16.mxu0 0
        %4131 = vmatpush1.bf16.msra.mxu0 %v4029
        %4132 = vmatprep.subr.bf16.mxu0 0
        %4133 = vmatpush1.bf16.msra.mxu0 %v4030
        %4134 = vmatprep.subr.bf16.mxu0 0
        %4135 = vmatpush1.bf16.msra.mxu0 %v4031
        %4136 = vmatprep.mubr.bf16.mxu0 %v3798
        %4137 = vmatmul.mubr.bf16.gmra.mrb[0].mxu0 %v3797
        %v4138 = vpop.f32.mrb[0].mxu0
        %v4139 = vadd.f32 %v4099, %v4138
        %v4140 = vpop.f32.mrb[0].mxu0
        %v4141 = vpop.f32.mrb[0].mxu0
        %v4142 = vpop.f32.mrb[0].mxu0
        %4143 = vdwg.mxu0
        %v4144 = vadd.f32 %v2755, %v4139
        %s4145 = scalar_lea.vmem %s9, 1
        %v4146 = vld [vmem:[%s4145] sm:$0x1]
        %s4147 = scalar_lea.vmem %s10, 1
        %v4148 = vld [vmem:[%s4147] sm:$0x1]
        %v4149 = vsel %vm1132, %v4144, 0.0
        %4150 = vadd.xlane.f32.xlu0 %v4149
        %v4151 = vpop.xlane.xlu0 %4150
        %v4152 = vmul.f32 %v4151, %v1136
        %v4153 = vsub.f32 %v4144, %v4152
        %v4154 = vmul.f32 %v4153, %v4153
        %v4155 = vsel %vm1132, %v4154, 0.0
        %4156 = vadd.xlane.f32.xlu0 %v4155
        %v4157 = vpop.xlane.xlu0 %4156
        %v4158 = vmul.f32 %v4157, %v1136
        %v4159 = vadd.f32 %v4158, 1e-12
        %v4160 = vrsqrt.pop %v4159
        %v4161 = vmul.f32 %v4153, %v4160
        %v4163 = vlaneseq
        %v4164 = vshrl.u32 %v4163, 7
        %v4165 = vsub.s32 0, %v4164
        %v4166 = vrot.slane %v4146, %v4165
        %v4168 = vmul.f32 %v4161, %v4166
        %v4170 = vlaneseq
        %v4171 = vshrl.u32 %v4170, 7
        %v4172 = vsub.s32 0, %v4171
        %v4173 = vrot.slane %v4148, %v4172
        %v4175 = vadd.f32 %v4168, %v4173
        %v4176 = vpack.c.bf16 %v4175, %v4175
        %s4177 = scalar_lea.vmem %s11, 32
        %v4178 = vld [vmem:[%s4177] sm:$0xf]
        %v4179 = vld [vmem:[%s4177 + $0x4] sm:$0xf]
        %v4180 = vld [vmem:[%s4177 + $0x8] sm:$0xf]
        %v4181 = vld [vmem:[%s4177 + $0xc] sm:$0xf]
        %v4182 = vld [vmem:[%s4177 + $0x10] sm:$0xf]
        %v4183 = vld [vmem:[%s4177 + $0x14] sm:$0xf]
        %v4184 = vld [vmem:[%s4177 + $0x18] sm:$0xf]
        %v4185 = vld [vmem:[%s4177 + $0x1c] sm:$0xf]
        %s4186 = scalar_lea.vmem %s12, 1
        %v4187 = vld [vmem:[%s4186] sm:$0x1]
        %v4189 = vlaneseq
        %v4190 = vshrl.u32 %v4189, 7
        %v4191 = vsub.s32 0, %v4190
        %v4192 = vrot.slane %v4187, %v4191
        %v4202 = vunpack.c.l.b16 %v4178
        %v4203 = vunpack.c.l.b16 %v4179
        %v4204 = vunpack.c.l.b16 %v4180
        %v4205 = vunpack.c.l.b16 %v4181
        %v4206 = vunpack.c.l.b16 %v4182
        %v4207 = vunpack.c.l.b16 %v4183
        %v4208 = vunpack.c.l.b16 %v4184
        %v4209 = vunpack.c.l.b16 %v4185
        %v4210 = vpack.c.b16 %v4203, %v4202
        %v4211 = vpack.c.b16 %v4205, %v4204
        %v4212 = vpack.c.b16 %v4207, %v4206
        %v4213 = vpack.c.b16 %v4209, %v4208
        %v4219 = vsel %vm1514, %v4176, 0
        %4221 = vmatprep.subr.bf16.mxu0 0
        %4222 = vmatpush1.bf16.msra.mxu0 %v4210
        %4223 = vmatprep.subr.bf16.mxu0 0
        %4224 = vmatpush1.bf16.msra.mxu0 %v4211
        %4225 = vmatprep.subr.bf16.mxu0 0
        %4226 = vmatpush1.bf16.msra.mxu0 %v4212
        %4227 = vmatprep.subr.bf16.mxu0 0
        %4228 = vmatpush1.bf16.msra.mxu0 %v4213
        %4229 = vmatprep.subr.bf16.mxu0 0
        %4230 = vmatpush1.bf16.msra.mxu0 0
        %4231 = vmatprep.subr.bf16.mxu0 0
        %4232 = vmatpush1.bf16.msra.mxu0 0
        %4233 = vmatprep.subr.bf16.mxu0 0
        %4234 = vmatpush1.bf16.msra.mxu0 0
        %4235 = vmatprep.subr.bf16.mxu0 0
        %4236 = vmatpush1.bf16.msra.mxu0 0
        %4237 = vmatprep.subr.bf16.mxu0 0
        %4238 = vmatpush1.bf16.msra.mxu0 0
        %4239 = vmatprep.subr.bf16.mxu0 0
        %4240 = vmatpush1.bf16.msra.mxu0 0
        %4241 = vmatprep.subr.bf16.mxu0 0
        %4242 = vmatpush1.bf16.msra.mxu0 0
        %4243 = vmatprep.subr.bf16.mxu0 0
        %4244 = vmatpush1.bf16.msra.mxu0 0
        %4245 = vmatprep.subr.bf16.mxu0 0
        %4246 = vmatpush1.bf16.msra.mxu0 0
        %4247 = vmatprep.subr.bf16.mxu0 0
        %4248 = vmatpush1.bf16.msra.mxu0 0
        %4249 = vmatprep.subr.bf16.mxu0 0
        %4250 = vmatpush1.bf16.msra.mxu0 0
        %4251 = vmatprep.subr.bf16.mxu0 0
        %4252 = vmatpush1.bf16.msra.mxu0 0
        %4253 = vmatprep.mubr.bf16.mxu0 0
        %4254 = vmatmul.mubr.bf16.gmra.mrb[0].mxu0 %v4219
        %v4255 = vpop.f32.mrb[0].mxu0
        %v4256 = vadd.f32 %v4192, %v4255
        %v4257 = vpop.f32.mrb[0].mxu0
        %v4258 = vpop.f32.mrb[0].mxu0
        %v4259 = vpop.f32.mrb[0].mxu0
        %4260 = vdwg.mxu0
        %v4261 = vmul.f32 %v4256, 0.5
        %v4262 = vmul.f32 %v4256, 0.044715
        %v4263 = vmul.f32 %v4262, %v4256
        %v4264 = vmul.f32 %v4263, %v4256
        %v4265 = vadd.f32 %v4256, %v4264
        %v4266 = vmul.f32 %v4265, 0.7978846
        %v4267 = vtanh.pop %v4266
        %v4268 = vadd.f32 %v4267, 1.0
        %v4269 = vmul.f32 %v4261, %v4268
        %v4270 = vpack.c.bf16 %v4269, %v4269
        %s4271 = scalar_lea.vmem %s13, 64
        %v4272 = vld [vmem:[%s4271] sm:$0xf]
        %v4273 = vld [vmem:[%s4271 + $0x4] sm:$0xf]
        %v4274 = vld [vmem:[%s4271 + $0x8] sm:$0xf]
        %v4275 = vld [vmem:[%s4271 + $0xc] sm:$0xf]
        %v4276 = vld [vmem:[%s4271 + $0x10] sm:$0xf]
        %v4277 = vld [vmem:[%s4271 + $0x14] sm:$0xf]
        %v4278 = vld [vmem:[%s4271 + $0x18] sm:$0xf]
        %v4279 = vld [vmem:[%s4271 + $0x1c] sm:$0xf]
        %v4280 = vld [vmem:[%s4271 + $0x20] sm:$0xf]
        %v4281 = vld [vmem:[%s4271 + $0x24] sm:$0xf]
        %v4282 = vld [vmem:[%s4271 + $0x28] sm:$0xf]
        %v4283 = vld [vmem:[%s4271 + $0x2c] sm:$0xf]
        %v4284 = vld [vmem:[%s4271 + $0x30] sm:$0xf]
        %v4285 = vld [vmem:[%s4271 + $0x34] sm:$0xf]
        %v4286 = vld [vmem:[%s4271 + $0x38] sm:$0xf]
        %v4287 = vld [vmem:[%s4271 + $0x3c] sm:$0xf]
        %s4288 = scalar_lea.vmem %s14, 1
        %v4289 = vld [vmem:[%s4288] sm:$0x1]
        %v4291 = vlaneseq
        %v4292 = vshrl.u32 %v4291, 7
        %v4293 = vsub.s32 0, %v4292
        %v4294 = vrot.slane %v4289, %v4293
        %v4312 = vunpack.c.l.b16 %v4272
        %v4313 = vunpack.c.l.b16 %v4273
        %v4314 = vunpack.c.l.b16 %v4274
        %v4315 = vunpack.c.l.b16 %v4275
        %v4316 = vunpack.c.l.b16 %v4276
        %v4317 = vunpack.c.l.b16 %v4277
        %v4318 = vunpack.c.l.b16 %v4278
        %v4319 = vunpack.c.l.b16 %v4279
        %v4320 = vunpack.c.l.b16 %v4280
        %v4321 = vunpack.c.l.b16 %v4281
        %v4322 = vunpack.c.l.b16 %v4282
        %v4323 = vunpack.c.l.b16 %v4283
        %v4324 = vunpack.c.l.b16 %v4284
        %v4325 = vunpack.c.l.b16 %v4285
        %v4326 = vunpack.c.l.b16 %v4286
        %v4327 = vunpack.c.l.b16 %v4287
        %v4328 = vpack.c.b16 %v4313, %v4312
        %v4329 = vpack.c.b16 %v4315, %v4314
        %v4330 = vpack.c.b16 %v4317, %v4316
        %v4331 = vpack.c.b16 %v4319, %v4318
        %v4332 = vpack.c.b16 %v4321, %v4320
        %v4333 = vpack.c.b16 %v4323, %v4322
        %v4334 = vpack.c.b16 %v4325, %v4324
        %v4335 = vpack.c.b16 %v4327, %v4326
        %4344 = vmatprep.subr.bf16.mxu0 0
        %4345 = vmatpush1.bf16.msra.mxu0 %v4328
        %4346 = vmatprep.subr.bf16.mxu0 0
        %4347 = vmatpush1.bf16.msra.mxu0 %v4329
        %4348 = vmatprep.subr.bf16.mxu0 0
        %4349 = vmatpush1.bf16.msra.mxu0 %v4330
        %4350 = vmatprep.subr.bf16.mxu0 0
        %4351 = vmatpush1.bf16.msra.mxu0 %v4331
        %4352 = vmatprep.subr.bf16.mxu0 0
        %4353 = vmatpush1.bf16.msra.mxu0 %v4332
        %4354 = vmatprep.subr.bf16.mxu0 0
        %4355 = vmatpush1.bf16.msra.mxu0 %v4333
        %4356 = vmatprep.subr.bf16.mxu0 0
        %4357 = vmatpush1.bf16.msra.mxu0 %v4334
        %4358 = vmatprep.subr.bf16.mxu0 0
        %4359 = vmatpush1.bf16.msra.mxu0 %v4335
        %4360 = vmatprep.subr.bf16.mxu0 0
        %4361 = vmatpush1.bf16.msra.mxu0 0
        %4362 = vmatprep.subr.bf16.mxu0 0
        %4363 = vmatpush1.bf16.msra.mxu0 0
        %4364 = vmatprep.subr.bf16.mxu0 0
        %4365 = vmatpush1.bf16.msra.mxu0 0
        %4366 = vmatprep.subr.bf16.mxu0 0
        %4367 = vmatpush1.bf16.msra.mxu0 0
        %4368 = vmatprep.subr.bf16.mxu0 0
        %4369 = vmatpush1.bf16.msra.mxu0 0
        %4370 = vmatprep.subr.bf16.mxu0 0
        %4371 = vmatpush1.bf16.msra.mxu0 0
        %4372 = vmatprep.subr.bf16.mxu0 0
        %4373 = vmatpush1.bf16.msra.mxu0 0
        %4374 = vmatprep.subr.bf16.mxu0 0
        %4375 = vmatpush1.bf16.msra.mxu0 0
        %4376 = vmatprep.mubr.bf16.mxu0 0
        %4377 = vmatmul.mubr.bf16.gmra.mrb[0].mxu0 %v4270
        %v4378 = vpop.f32.mrb[0].mxu0
        %v4379 = vadd.f32 %v4294, %v4378
        %v4380 = vpop.f32.mrb[0].mxu0
        %v4381 = vpop.f32.mrb[0].mxu0
        %v4382 = vpop.f32.mrb[0].mxu0
        %4383 = vdwg.mxu0
        %v4384 = vadd.f32 %v4144, %v4379
        %v4385 = vld [vmem:[%s15] sm:$0x1]
        %v4386 = vld [vmem:[%s16] sm:$0x1]
        %vm4387 = vcmask 516096
        %v4388 = vsel %vm4387, %v4384, 0.0
        %4389 = vadd.xlane.f32.xlu0 %v4388
        %v4390 = vpop.xlane.xlu0 %4389
        %v4391 = vmul.f32 %v4390, %v1136
        %v4392 = vsub.f32 %v4384, %v4391
        %v4393 = vmul.f32 %v4392, %v4392
        %v4394 = vsel %vm4387, %v4393, 0.0
        %4395 = vadd.xlane.f32.xlu0 %v4394
        %v4396 = vpop.xlane.xlu0 %4395
        %v4397 = vmul.f32 %v4396, %v1136
        %v4398 = vadd.f32 %v4397, 1e-12
        %v4399 = vrsqrt.pop %v4398
        %v4400 = vmul.f32 %v4392, %v4399
        %v4401 = vmul.f32 %v4400, %v4385
        %v4402 = vadd.f32 %v4401, %v4386
        %v4403 = vpack.c.bf16 %v4402, %v4402
        %v4404 = vld [vmem:[%s17] sm:$0xf]
        %v4405 = vld [vmem:[%s17 + $0x4] sm:$0xf]
        %v4406 = vld [vmem:[%s17 + $0x8] sm:$0xf]
        %v4407 = vld [vmem:[%s17 + $0xc] sm:$0xf]
        %v4408 = vld [vmem:[%s17 + $0x10] sm:$0xf]
        %v4409 = vld [vmem:[%s17 + $0x14] sm:$0xf]
        %v4410 = vld [vmem:[%s17 + $0x18] sm:$0xf]
        %v4411 = vld [vmem:[%s17 + $0x1c] sm:$0xf]
        %v4412 = vld [vmem:[%s18] sm:$0x1]
        %v4421 = vunpack.c.l.b16 %v4404
        %v4422 = vunpack.c.l.b16 %v4405
        %v4423 = vunpack.c.l.b16 %v4406
        %v4424 = vunpack.c.l.b16 %v4407
        %v4425 = vunpack.c.l.b16 %v4408
        %v4426 = vunpack.c.l.b16 %v4409
        %v4427 = vunpack.c.l.b16 %v4410
        %v4428 = vunpack.c.l.b16 %v4411
        %v4429 = vpack.c.b16 %v4422, %v4421
        %v4430 = vpack.c.b16 %v4424, %v4423
        %v4431 = vpack.c.b16 %v4426, %v4425
        %v4432 = vpack.c.b16 %v4428, %v4427
        %v4438 = vsel %vm1514, %v4403, 0
        %4440 = vmatprep.subr.bf16.mxu0 0
        %4441 = vmatpush1.bf16.msra.mxu0 %v4429
        %4442 = vmatprep.subr.bf16.mxu0 0
        %4443 = vmatpush1.bf16.msra.mxu0 %v4430
        %4444 = vmatprep.subr.bf16.mxu0 0
        %4445 = vmatpush1.bf16.msra.mxu0 %v4431
        %4446 = vmatprep.subr.bf16.mxu0 0
        %4447 = vmatpush1.bf16.msra.mxu0 %v4432
        %4448 = vmatprep.subr.bf16.mxu0 0
        %4449 = vmatpush1.bf16.msra.mxu0 0
        %4450 = vmatprep.subr.bf16.mxu0 0
        %4451 = vmatpush1.bf16.msra.mxu0 0
        %4452 = vmatprep.subr.bf16.mxu0 0
        %4453 = vmatpush1.bf16.msra.mxu0 0
        %4454 = vmatprep.subr.bf16.mxu0 0
        %4455 = vmatpush1.bf16.msra.mxu0 0
        %4456 = vmatprep.subr.bf16.mxu0 0
        %4457 = vmatpush1.bf16.msra.mxu0 0
        %4458 = vmatprep.subr.bf16.mxu0 0
        %4459 = vmatpush1.bf16.msra.mxu0 0
        %4460 = vmatprep.subr.bf16.mxu0 0
        %4461 = vmatpush1.bf16.msra.mxu0 0
        %4462 = vmatprep.subr.bf16.mxu0 0
        %4463 = vmatpush1.bf16.msra.mxu0 0
        %4464 = vmatprep.subr.bf16.mxu0 0
        %4465 = vmatpush1.bf16.msra.mxu0 0
        %4466 = vmatprep.subr.bf16.mxu0 0
        %4467 = vmatpush1.bf16.msra.mxu0 0
        %4468 = vmatprep.subr.bf16.mxu0 0
        %4469 = vmatpush1.bf16.msra.mxu0 0
        %4470 = vmatprep.subr.bf16.mxu0 0
        %4471 = vmatpush1.bf16.msra.mxu0 0
        %4472 = vmatprep.mubr.bf16.mxu0 0
        %4473 = vmatmul.mubr.bf16.gmra.mrb[0].mxu0 %v4438
        %v4474 = vpop.f32.mrb[0].mxu0
        %v4475 = vadd.f32 %v4412, %v4474
        %v4476 = vpop.f32.mrb[0].mxu0
        %v4477 = vpop.f32.mrb[0].mxu0
        %v4478 = vpop.f32.mrb[0].mxu0
        %4479 = vdwg.mxu0
        %4480 = vst [vmem:[%s594] sm:$0x1] %v4475
        %s4481 = sand.u32 %s445, 1
        %s4482 = scalar_lea.sflag [#allocation3], %s4481
        %s4483 = sand.u32 %s445, 1
        %s4484 = scalar_lea.vmem [#allocation2], %s4483
        // Predicated region
        $region97: #{vit_forward.1} parent=95 // pred_check
          %p4485 = pneg %p455
        $region98: #{vit_forward.1} parent=95 // pred_check_branch
          %4487 = sbr.rel (%p4485) target = $region100
        $region99: #{vit_forward.1} parent=95 // pred_region
          %s4489 = ssub.s32 16, 16
          %4490 = vsyncadd %s4482, %s4489
          %s4491 = smul.addr %s33, 16
          %s4492 = scalar_lea.hbm %s19, %s4491
          %s4494 = sshll.u32 %s4484, 4
          %s4495 = int_to_ptr.vmem [resolvable:$true] %s4494
          %4497 = dma.vmem_to_hbm [thread:$0]  %s4495, 16, %s4492, %s4482
        $region100: #{vit_forward.1} parent=95 // pred_fallthru
          _
      $region96: #{vit_forward.1} parent=5 // pred_fallthru
        _
      %p4498 = scmp.le.s32.totalorder 2, %s28
      // Predicated region
      $region101: #{vit_forward.1} parent=5 // pred_check
        %p4499 = pneg %p4498
      $region102: #{vit_forward.1} parent=5 // pred_check_branch
        %4501 = sbr.rel (%p4499) target = $region104
      $region103: #{vit_forward.1} parent=5 // pred_region
        %s4502 = ssub.s32 %s28, 2
        // Predicated region
        $region105: #{vit_forward.1} parent=103 // pred_check
          %p4503 = pneg %p461
        $region106: #{vit_forward.1} parent=103 // pred_check_branch
          %4505 = sbr.rel (%p4503) target = $region108
        $region107: #{vit_forward.1} parent=103 // pred_region
          %s4506 = sand.u32 %s446, 1
          %s4507 = scalar_lea.sflag [#allocation3], %s4506
          %s4508 = sand.u32 %s446, 1
          %s4509 = scalar_lea.vmem [#allocation2], %s4508
          %4510 = dma.done %s4507, 16
        $region108: #{vit_forward.1} parent=103 // pred_fallthru
          _
      $region104: #{vit_forward.1} parent=5 // pred_fallthru
        _
    $region6: #{vit_forward.1} parent=1 // loop_footer
      %s32 = sadd.s32 1, %s28
    $region7: #{vit_forward.1} parent=1 // loop_footer_branch
      %27 = sbr.rel target = $region3
    $region8: #{vit_forward.1} parent=1 // loop_exit
      _
    %4511 = vsyncpa [#allocation3], 1
    %s4512 = scalar_lea.sflag [#allocation3], 1
    %4513 = vsyncpa %s4512, 1

</llo_original>
